<compile_context>
chip_gen: v5e
topology: v5e:2x2
jax: 0.10.0
libtpu: 0.0.40
codegen_flags: <defaults>
</compile_context>

<pallas_src>
import jax
import jax.numpy as jnp
from jax.experimental import pallas as pl
from jax.experimental.pallas import tpu as pltpu

_VMEM_LIMIT_BYTES = 48 * 1024 * 1024  # < 64 MiB physical on v7x, headroom on v5e/v6e


# ----------------------------- small helpers ---------------------------------

def _round_up(x, m):
    return ((x + m - 1) // m) * m


def _ternary_act(x):
    # Stand-in for FATNN_Act_Quantizer: fixed-threshold ternary {-1, 0, +1}.
    return jnp.where(x > 0.5, 1.0, jnp.where(x < -0.5, -1.0, 0.0)).astype(x.dtype)


def _ternarize_sign_alpha(w):
    # Stand-in for ESA_Quant: TWN-style per-output-channel ternarization.
    # Returns the exact ternary sign tensor {-1,0,+1} and the per-channel alpha
    # separately (alpha is folded into the BN scale so the MXU sees exact ternary bf16).
    absw = jnp.abs(w)
    delta = 0.7 * jnp.mean(absw, axis=(1, 2, 3), keepdims=True)
    mask = (absw > delta).astype(w.dtype)
    denom = jnp.maximum(jnp.sum(mask, axis=(1, 2, 3), keepdims=True), 1.0)
    alpha = (jnp.sum(absw * mask, axis=(1, 2, 3), keepdims=True) / denom)[:, 0, 0, 0]
    sign = jnp.sign(w) * mask
    return sign, alpha


# --------------------- kernel A: fused 1x1 conv stage -------------------------
# relu( ternary(x) @ W_ternary * scale + bias ), row-tiled, optional K-split with
# a VMEM f32 accumulator (init at k==0, finalize at k==nk-1).

def _make_conv1x1_kernel(nk):
    def kernel(x_ref, w_ref, s_ref, b_ref, o_ref, acc_ref):
        k = pl.program_id(1)

        @pl.when(k == 0)
        def _init():
            acc_ref[...] = jnp.zeros_like(acc_ref)

        xq = _ternary_act(x_ref[...].astype(jnp.float32)).astype(jnp.bfloat16)
        acc_ref[...] += jnp.dot(xq, w_ref[...], preferred_element_type=jnp.float32)

        @pl.when(k == nk - 1)
        def _finalize():
            y = acc_ref[...] * s_ref[...] + b_ref[...]
            o_ref[...] = jnp.maximum(y, 0.0).astype(o_ref.dtype)

    return kernel


def _pick_tm(M, K, Cout, budget=24 << 20):
    tm = 1024
    while tm > 128:
        need = (2 * tm * K * 4          # double-buffered input tile (f32)
                + 2 * tm * Cout * 4     # double-buffered output tile
                + tm * Cout * 4         # f32 accumulator scratch
                + K * Cout * 2)         # bf16 weight block
        if need <= budget:
            break
        tm //= 2
    return tm


def _fused_1x1(x2d, w_bf16, scale, bias, out_dtype=jnp.float32):
    M, K = x2d.shape
    Cout = w_bf16.shape[1]

    # K-reduction grid axis for large K (keeps weight/activation slabs in VMEM budget).
    if K > 512:
        tk = 512
        Kp = _round_up(K, tk)
        x2d = jnp.pad(x2d, ((0, 0), (0, Kp - K)))
        w_bf16 = jnp.pad(w_bf16, ((0, Kp - K), (0, 0)))
    else:
        tk, Kp = K, K
    nk = Kp // tk

    tm = min(_pick_tm(M, Kp, Cout), _round_up(M, 8))
    Mp = pl.cdiv(M, tm) * tm
    if Mp != M:
        x2d = jnp.pad(x2d, ((0, Mp - M), (0, 0)))

    grid = (Mp // tm, nk)
    out = pl.pallas_call(
        _make_conv1x1_kernel(nk),
        out_shape=jax.ShapeDtypeStruct((Mp, Cout), out_dtype),
        grid_spec=pltpu.PrefetchScalarGridSpec(
            num_scalar_prefetch=0,
            grid=grid,
            in_specs=[
                pl.BlockSpec((tm, tk), lambda i, k: (i, k)),
                pl.BlockSpec((tk, Cout), lambda i, k: (k, 0)),
                pl.BlockSpec((1, Cout), lambda i, k: (0, 0)),
                pl.BlockSpec((1, Cout), lambda i, k: (0, 0)),
            ],
            out_specs=pl.BlockSpec((tm, Cout), lambda i, k: (i, 0)),
            scratch_shapes=[pltpu.VMEM((tm, Cout), jnp.float32)]),
        compiler_params=pltpu.CompilerParams(
            dimension_semantics=("parallel", "arbitrary"),
            vmem_limit_bytes=_VMEM_LIMIT_BYTES),
    )(x2d, w_bf16, scale, bias)
    return out[:M] if Mp != M else out


# ----------- kernel B: fused 3x3(stride) conv + 1x1 conv + residual -----------
# Per image: 9-tap accumulation over shifted parity planes of y1 (no strided ops,
# no HBM im2col), then bn2/relu2 -> act3 -> conv3 matmul -> bn3 + shortcut -> relu3.

# tap -> (plane index, row offset, col offset); planes are [EE, EO, OE, OO] parity
# planes of y1 with one zero row/col prepended on the odd-parity planes (= conv pad).
_TAP_PLAN_STRIDE2 = (
    (3, 0, 0), (2, 0, 0), (3, 0, 1),
    (1, 0, 0), (0, 0, 0), (1, 0, 1),
    (3, 1, 0), (2, 1, 0), (3, 1, 1),
)


def _make_conv23_kernel(n_planes, tap_plan, Ho, Wo):
    def kernel(*refs):
        plane_refs = refs[:n_planes]
        (w2_ref, s2_ref, b2_ref, w3_ref, s3_ref, b3_ref, r_ref, o_ref) = refs[n_planes:]
        C = plane_refs[0].shape[-1]
        M = Ho * Wo

        # act2: quantize each shifted-input plane ONCE; {-1,0,+1} is exact in bf16.
        pq = [_ternary_act(p[...].astype(jnp.float32)).astype(jnp.bfloat16)
              for p in plane_refs]

        acc = jnp.zeros((M, w2_ref.shape[1]), jnp.float32)
        for t, (pi, r0, c0) in enumerate(tap_plan):
            xt = pq[pi][r0:r0 + Ho, c0:c0 + Wo, :].reshape(M, C)
            acc = acc + jnp.dot(xt, w2_ref[t * C:(t + 1) * C, :],
                                preferred_element_type=jnp.float32)

        y2 = jnp.maximum(acc * s2_ref[...] + b2_ref[...], 0.0)       # bn2 + relu2
        x3 = _ternary_act(y2).astype(jnp.bfloat16)                   # act3
        y3 = jnp.dot(x3, w3_ref[...], preferred_element_type=jnp.float32)
        y3 = y3 * s3_ref[...] + b3_ref[...] + r_ref[...].astype(jnp.float32)
        o_ref[...] = jnp.maximum(y3, 0.0).astype(o_ref.dtype)        # +shortcut, relu3

    return kernel


def _fused_conv3x3_then_1x1(plane_arrays, tap_plan, prep, res2d, Ho, Wo, out_dtype):
    N = plane_arrays[0].shape[0]
    C = plane_arrays[0].shape[-1]
    Cmid = prep["w2"].shape[1]
    Cout = prep["w3"].shape[1]

    in_specs = []
    for p in plane_arrays:
        R, Cc = p.shape[1], p.shape[2]
        in_specs.append(pl.BlockSpec((None, R, Cc, C), lambda n: (n, 0, 0, 0)))
    in_specs += [
        pl.BlockSpec((9 * C, Cmid), lambda n: (0, 0)),              # w2 (bf16 ternary)
        pl.BlockSpec((1, Cmid), lambda n: (0, 0)),                  # scale2
        pl.BlockSpec((1, Cmid), lambda n: (0, 0)),                  # bias2
        pl.BlockSpec((Cmid, Cout), lambda n: (0, 0)),               # w3 (bf16 ternary)
        pl.BlockSpec((1, Cout), lambda n: (0, 0)),                  # scale3
        pl.BlockSpec((1, Cout), lambda n: (0, 0)),                  # bias3
        pl.BlockSpec((None, Ho * Wo, Cout), lambda n: (n, 0, 0)),   # residual
    ]
    out_spec = pl.BlockSpec((None, Ho * Wo, Cout), lambda n: (n, 0, 0))

    return pl.pallas_call(
        _make_conv23_kernel(len(plane_arrays), tuple(tap_plan), Ho, Wo),
        out_shape=jax.ShapeDtypeStruct((N, Ho * Wo, Cout), out_dtype),
        grid_spec=pltpu.PrefetchScalarGridSpec(
            num_scalar_prefetch=0,
            grid=(N,),
            in_specs=in_specs,
            out_specs=out_spec),
        compiler_params=pltpu.CompilerParams(
            dimension_semantics=("parallel",),
            vmem_limit_bytes=_VMEM_LIMIT_BYTES),
    )(*plane_arrays, prep["w2"], prep["s2"], prep["b2"],
      prep["w3"], prep["s3"], prep["b3"], res2d)


# ---------------------- one-time parameter preparation ------------------------

def _fold_bn(bn, eps=1e-5):
    gamma, beta, mean, var = bn
    s_bn = gamma / jnp.sqrt(var + eps)
    return s_bn, beta - mean * s_bn


def prepare_block_params(params, eps=1e-5):
    """Ternarize weights, fold BN, transpose to matmul layout, pad channels to 128 lanes."""
    planes = int(params["planes"])
    stride = int(params["stride"])
    Cin = params["w1"].shape[1]
    Cp = max(128, _round_up(planes, 128))   # lane-dense channel padding
    padc = Cp - planes

    def fold(w, bn):
        sign, alpha = _ternarize_sign_alpha(w)
        s_bn, b_bn = _fold_bn(bn, eps)
        scale = (alpha * s_bn).reshape(1, -1)
        bias = b_bn.reshape(1, -1)
        return sign, scale, bias

    w1s, s1, b1 = fold(params["w1"], params["bn1"])   # (planes, Cin, 1, 1)
    w2s, s2, b2 = fold(params["w2"], params["bn2"])   # (planes, planes, 3, 3)
    w3s, s3, b3 = fold(params["w3"], params["bn3"])   # (planes, planes, 1, 1)

    w1m = jnp.pad(jnp.transpose(w1s[:, :, 0, 0], (1, 0)),
                  ((0, 0), (0, padc))).astype(jnp.bfloat16)                 # (Cin, Cp)
    w2t = jnp.pad(jnp.transpose(w2s, (2, 3, 1, 0)),
                  ((0, 0), (0, 0), (0, padc), (0, padc)))                   # (3,3,Cp,Cp)
    w2m = w2t.reshape(9 * Cp, Cp).astype(jnp.bfloat16)
    w3m = jnp.pad(jnp.transpose(w3s[:, :, 0, 0], (1, 0)),
                  ((0, padc), (0, padc))).astype(jnp.bfloat16)              # (Cp, Cp)

    def padv(v):
        return jnp.pad(v, ((0, 0), (0, padc))).astype(jnp.float32)

    return {
        "planes": planes, "stride": stride, "Cin": Cin, "Cp": Cp,
        "w1": w1m, "s1": padv(s1), "b1": padv(b1),
        "w2": w2m, "s2": padv(s2), "b2": padv(b2),
        "w3": w3m, "s3": padv(s3), "b3": padv(b3),
    }


# --------------------------- full block forward -------------------------------

def basic_block_bottleneck_forward(x_nchw, prep):
    planes, stride, Cp = prep["planes"], prep["stride"], prep["Cp"]
    N, Cin, H, W = x_nchw.shape
    xh = jnp.transpose(x_nchw, (0, 2, 3, 1)).astype(jnp.float32)    # NCHW -> NHWC

    # --- act1 -> conv1(1x1) -> bn1 -> relu1 (kernel A) ---
    y1 = _fused_1x1(xh.reshape(N * H * W, Cin), prep["w1"], prep["s1"], prep["b1"])
    y1 = y1.reshape(N, H, W, Cp)

    # --- build shifted views of y1 for the 3x3 conv (no 9x HBM im2col) ---
    if stride == 2:
        assert H % 2 == 0 and W % 2 == 0
        Ho, Wo = H // 2, W // 2
        ee = y1[:, 0::2, 0::2, :]
        eo = jnp.pad(y1[:, 0::2, 1::2, :], ((0, 0), (0, 0), (1, 0), (0, 0)))
        oe = jnp.pad(y1[:, 1::2, 0::2, :], ((0, 0), (1, 0), (0, 0), (0, 0)))
        oo = jnp.pad(y1[:, 1::2, 1::2, :], ((0, 0), (1, 0), (1, 0), (0, 0)))
        plane_arrays = [ee, eo, oe, oo]
        tap_plan = _TAP_PLAN_STRIDE2
    elif stride == 1:
        Ho, Wo = H, W
        plane_arrays = [jnp.pad(y1, ((0, 0), (1, 1), (1, 1), (0, 0)))]
        tap_plan = tuple((0, dy, dx) for dy in range(3) for dx in range(3))
    else:
        raise NotImplementedError("only stride 1 or 2 supported")

    # --- shortcut (PyTorch option-A), channel-padded to Cp ---
    # TODO(synk): could be gathered inside kernel B via a strided index_map instead of
    #             materializing it here.
    if stride != 1 or Cin != planes:
        pad_c = planes // 4
        # Same shape constraint as the PyTorch lambda (it would also fail otherwise).
        assert stride == 2 and Cin + 2 * pad_c == planes, (
            "option-A shortcut requires stride==2 and planes == in_planes + 2*(planes//4)")
        sc = jnp.pad(xh[:, ::2, ::2, :],
                     ((0, 0), (0, 0), (0, 0), (pad_c, pad_c + Cp - planes)))
    else:
        sc = jnp.pad(xh, ((0, 0), (0, 0), (0, 0), (0, Cp - Cin)))
    res2d = sc.reshape(N, Ho * Wo, Cp)

    # --- act2 -> conv2 -> bn2 -> relu2 -> act3 -> conv3 -> bn3 -> +sc -> relu3 (kernel B) ---
    out = _fused_conv3x3_then_1x1(plane_arrays, tap_plan, prep, res2d, Ho, Wo,
                                  out_dtype=x_nchw.dtype)
    out = out.reshape(N, Ho, Wo, Cp)[:, :, :, :planes]
    return jnp.transpose(out, (0, 3, 1, 2))                         # NHWC -> NCHW


# --------------------------------- main ---------------------------------------

if __name__ == "__main__":
    key = jax.random.PRNGKey(0)
    ks = jax.random.split(key, 8)

    N, in_planes, H, W = 2, 4, 16, 16
    planes, stride = 8, 2

    x = jax.random.normal(ks[0], (N, in_planes, H, W), jnp.float32)

    def bn_params(k, c):
        k1, k2, k3, k4 = jax.random.split(k, 4)
        gamma = 1.0 + 0.1 * jax.random.normal(k1, (c,), jnp.float32)
        beta = 0.1 * jax.random.normal(k2, (c,), jnp.float32)
        mean = 0.1 * jax.random.normal(k3, (c,), jnp.float32)
        var = jax.random.uniform(k4, (c,), jnp.float32, minval=0.5, maxval=1.5)
        return gamma, beta, mean, var

    params = {
        "planes": planes,
        "stride": stride,
        "w1": 0.2 * jax.random.normal(ks[1], (planes, in_planes, 1, 1), jnp.float32),
        "w2": 0.2 * jax.random.normal(ks[2], (planes, planes, 3, 3), jnp.float32),
        "w3": 0.2 * jax.random.normal(ks[3], (planes, planes, 1, 1), jnp.float32),
        "bn1": bn_params(ks[4], planes),
        "bn2": bn_params(ks[5], planes),
        "bn3": bn_params(ks[6], planes),
    }

    # One-time weight prep (ternarize, fold BN, transpose, pad) hoisted out of the forward.
    prepared = prepare_block_params(params)
    fwd = jax.jit(lambda xx: basic_block_bottleneck_forward(xx, prepared))

    out = fwd(x)
    jax.block_until_ready(out)
    assert out.shape == (N, planes, H // stride, W // stride), out.shape
    assert bool(jnp.all(jnp.isfinite(out)))
    print("KERNEL_OK")
</pallas_src>

<mosaic_0001>
module attributes {stable_mosaic.version = 11 : i64} {
  func.func @kernel(%arg0: i32, %arg1: i32, %arg2: memref<512x4xf32, #tpu.memory_space<vmem>>, %arg3: memref<4x128xbf16, #tpu.memory_space<vmem>>, %arg4: memref<1x128xf32, #tpu.memory_space<vmem>>, %arg5: memref<1x128xf32, #tpu.memory_space<vmem>>, %arg6: memref<512x128xf32, #tpu.memory_space<vmem>>, %arg7: memref<512x128xf32, #tpu.memory_space<vmem>>) attributes {dimension_semantics = [#tpu.dimension_semantics<parallel>, #tpu.dimension_semantics<arbitrary>], iteration_bounds = array<i64: 1, 1>, scalar_prefetch = 0 : i64, scratch_operands = 1 : i64, tpu.core_type = #tpu.core_type<tc>, window_params = [{transform_indices = @transform_0, window_bounds = array<i64: 512, 4>}, {transform_indices = @transform_1, window_bounds = array<i64: 4, 128>}, {pipeline_mode = #tpu.pipeline_mode<synchronous>, transform_indices = @transform_2, window_bounds = array<i64: 1, 128>}, {pipeline_mode = #tpu.pipeline_mode<synchronous>, transform_indices = @transform_3, window_bounds = array<i64: 1, 128>}, {transform_indices = @transform_4, window_bounds = array<i64: 512, 128>}]} {
    %c0_i32 = arith.constant 0 : i32
    %0 = arith.cmpi eq, %arg1, %c0_i32 : i32
    %1 = arith.extui %0 : i1 to i32
    %c0_i32_0 = arith.constant 0 : i32
    %2 = arith.cmpi ne, %1, %c0_i32_0 : i32
    scf.if %2 {
      %cst_15 = arith.constant 0.000000e+00 : f32
      %22 = vector.broadcast %cst_15 : f32 to vector<512x128xf32>
      %c0_16 = arith.constant 0 : index
      %c0_17 = arith.constant 0 : index
      %23 = vector.load %arg7[%c0_16, %c0_17] : memref<512x128xf32, #tpu.memory_space<vmem>>, vector<512x128xf32>
      tpu.vector_store %arg7[%c0_16, %c0_17], %22 {strides = array<i32>} : memref<512x128xf32, #tpu.memory_space<vmem>>, vector<512x128xf32>,
    } else {
    }
    %c0 = arith.constant 0 : index
    %c0_1 = arith.constant 0 : index
    %3 = vector.load %arg2[%c0, %c0_1] : memref<512x4xf32, #tpu.memory_space<vmem>>, vector<512x4xf32>
    %cst = arith.constant 5.000000e-01 : f32
    %4 = vector.broadcast %cst : f32 to vector<512x4xf32>
    %5 = arith.cmpf ogt, %3, %4 : vector<512x4xf32>
    %cst_2 = arith.constant -5.000000e-01 : f32
    %6 = vector.broadcast %cst_2 : f32 to vector<512x4xf32>
    %7 = arith.cmpf olt, %3, %6 : vector<512x4xf32>
    %cst_3 = arith.constant -1.000000e+00 : f32
    %cst_4 = arith.constant 0.000000e+00 : f32
    %8 = vector.broadcast %cst_3 : f32 to vector<512x4xf32>
    %9 = vector.broadcast %cst_4 : f32 to vector<512x4xf32>
    %10 = arith.select %7, %8, %9 : vector<512x4xi1>, vector<512x4xf32>
    %cst_5 = arith.constant 1.000000e+00 : f32
    %11 = vector.broadcast %cst_5 : f32 to vector<512x4xf32>
    %12 = arith.select %5, %11, %10 : vector<512x4xi1>, vector<512x4xf32>
    %13 = arith.truncf %12 : vector<512x4xf32> to vector<512x4xbf16>
    %c0_6 = arith.constant 0 : index
    %c0_7 = arith.constant 0 : index
    %14 = vector.load %arg7[%c0_6, %c0_7] : memref<512x128xf32, #tpu.memory_space<vmem>>, vector<512x128xf32>
    %c0_8 = arith.constant 0 : index
    %c0_9 = arith.constant 0 : index
    %15 = vector.load %arg3[%c0_8, %c0_9] : memref<4x128xbf16, #tpu.memory_space<vmem>>, vector<4x128xbf16>
    %cst_10 = arith.constant dense<0.000000e+00> : vector<512x128xf32>
    %16 = tpu.matmul %13, %15, %cst_10 {dimension_numbers = #tpu.dot_dimension_numbers<[1], [0], [0], [1], [0, 0, 1, 1], [], []>} : vector<512x4xbf16>, vector<4x128xbf16>, vector<512x128xf32> -> vector<512x128xf32>
    %17 = arith.addf %14, %16 : vector<512x128xf32>
    %c0_11 = arith.constant 0 : index
    %c0_12 = arith.constant 0 : index
    %18 = vector.load %arg7[%c0_11, %c0_12] : memref<512x128xf32, #tpu.memory_space<vmem>>, vector<512x128xf32>
    tpu.vector_store %arg7[%c0_11, %c0_12], %17 {strides = array<i32>} : memref<512x128xf32, #tpu.memory_space<vmem>>, vector<512x128xf32>,
    %c0_i32_13 = arith.constant 0 : i32
    %19 = arith.cmpi eq, %arg1, %c0_i32_13 : i32
    %20 = arith.extui %19 : i1 to i32
    %c0_i32_14 = arith.constant 0 : i32
    %21 = arith.cmpi ne, %20, %c0_i32_14 : i32
    scf.if %21 {
      %c0_15 = arith.constant 0 : index
      %c0_16 = arith.constant 0 : index
      %22 = vector.load %arg7[%c0_15, %c0_16] : memref<512x128xf32, #tpu.memory_space<vmem>>, vector<512x128xf32>
      %c0_17 = arith.constant 0 : index
      %c0_18 = arith.constant 0 : index
      %23 = vector.load %arg4[%c0_17, %c0_18] : memref<1x128xf32, #tpu.memory_space<vmem>>, vector<1x128xf32>
      %24 = vector.broadcast %23 : vector<1x128xf32> to vector<512x128xf32>
      %25 = arith.mulf %22, %24 : vector<512x128xf32>
      %c0_19 = arith.constant 0 : index
      %c0_20 = arith.constant 0 : index
      %26 = vector.load %arg5[%c0_19, %c0_20] : memref<1x128xf32, #tpu.memory_space<vmem>>, vector<1x128xf32>
      %27 = vector.broadcast %26 : vector<1x128xf32> to vector<512x128xf32>
      %28 = arith.addf %25, %27 : vector<512x128xf32>
      %cst_21 = arith.constant 0.000000e+00 : f32
      %29 = vector.broadcast %cst_21 : f32 to vector<512x128xf32>
      %30 = arith.maximumf %28, %29 : vector<512x128xf32>
      %c0_22 = arith.constant 0 : index
      %c0_23 = arith.constant 0 : index
      %31 = vector.load %arg6[%c0_22, %c0_23] : memref<512x128xf32, #tpu.memory_space<vmem>>, vector<512x128xf32>
      tpu.vector_store %arg6[%c0_22, %c0_23], %30 {strides = array<i32>} : memref<512x128xf32, #tpu.memory_space<vmem>>, vector<512x128xf32>,
    } else {
    }
    return
  }
  func.func @transform_0(%arg0: i32, %arg1: i32) -> (i32, i32) {
    %c0_i32 = arith.constant 0 : i32
    return %arg0, %arg1 : i32, i32
  }
  func.func @transform_1(%arg0: i32, %arg1: i32) -> (i32, i32) {
    %c0_i32 = arith.constant 0 : i32
    %c0_i32_0 = arith.constant 0 : i32
    return %arg1, %c0_i32 : i32, i32
  }
  func.func @transform_2(%arg0: i32, %arg1: i32) -> (i32, i32) {
    %c0_i32 = arith.constant 0 : i32
    %c0_i32_0 = arith.constant 0 : i32
    %c0_i32_1 = arith.constant 0 : i32
    return %c0_i32, %c0_i32_0 : i32, i32
  }
  func.func @transform_3(%arg0: i32, %arg1: i32) -> (i32, i32) {
    %c0_i32 = arith.constant 0 : i32
    %c0_i32_0 = arith.constant 0 : i32
    %c0_i32_1 = arith.constant 0 : i32
    return %c0_i32, %c0_i32_0 : i32, i32
  }
  func.func @transform_4(%arg0: i32, %arg1: i32) -> (i32, i32) {
    %c0_i32 = arith.constant 0 : i32
    %c0_i32_0 = arith.constant 0 : i32
    return %arg0, %c0_i32 : i32, i32
  }
}

module attributes {stable_mosaic.version = 11 : i64} {
  func.func @kernel(%arg0: i32, %arg1: memref<1x8x8x128xf32, #tpu.memory_space<vmem>>, %arg2: memref<1x8x9x128xf32, #tpu.memory_space<vmem>>, %arg3: memref<1x9x8x128xf32, #tpu.memory_space<vmem>>, %arg4: memref<1x9x9x128xf32, #tpu.memory_space<vmem>>, %arg5: memref<1152x128xbf16, #tpu.memory_space<vmem>>, %arg6: memref<1x128xf32, #tpu.memory_space<vmem>>, %arg7: memref<1x128xf32, #tpu.memory_space<vmem>>, %arg8: memref<128x128xbf16, #tpu.memory_space<vmem>>, %arg9: memref<1x128xf32, #tpu.memory_space<vmem>>, %arg10: memref<1x128xf32, #tpu.memory_space<vmem>>, %arg11: memref<1x64x128xf32, #tpu.memory_space<vmem>>, %arg12: memref<1x64x128xf32, #tpu.memory_space<vmem>>) attributes {dimension_semantics = [#tpu.dimension_semantics<parallel>], iteration_bounds = array<i64: 2>, scalar_prefetch = 0 : i64, scratch_operands = 0 : i64, tpu.core_type = #tpu.core_type<tc>, window_params = [{transform_indices = @transform_0, window_bounds = array<i64: 1, 8, 8, 128>}, {transform_indices = @transform_1, window_bounds = array<i64: 1, 8, 9, 128>}, {transform_indices = @transform_2, window_bounds = array<i64: 1, 9, 8, 128>}, {transform_indices = @transform_3, window_bounds = array<i64: 1, 9, 9, 128>}, {pipeline_mode = #tpu.pipeline_mode<synchronous>, transform_indices = @transform_4, window_bounds = array<i64: 1152, 128>}, {pipeline_mode = #tpu.pipeline_mode<synchronous>, transform_indices = @transform_5, window_bounds = array<i64: 1, 128>}, {pipeline_mode = #tpu.pipeline_mode<synchronous>, transform_indices = @transform_6, window_bounds = array<i64: 1, 128>}, {pipeline_mode = #tpu.pipeline_mode<synchronous>, transform_indices = @transform_7, window_bounds = array<i64: 128, 128>}, {pipeline_mode = #tpu.pipeline_mode<synchronous>, transform_indices = @transform_8, window_bounds = array<i64: 1, 128>}, {pipeline_mode = #tpu.pipeline_mode<synchronous>, transform_indices = @transform_9, window_bounds = array<i64: 1, 128>}, {transform_indices = @transform_10, window_bounds = array<i64: 1, 64, 128>}, {transform_indices = @transform_11, window_bounds = array<i64: 1, 64, 128>}]} {
    %c0 = arith.constant 0 : index
    %c0_0 = arith.constant 0 : index
    %c0_1 = arith.constant 0 : index
    %c0_2 = arith.constant 0 : index
    %0 = vector.load %arg1[%c0, %c0_0, %c0_1, %c0_2] : memref<1x8x8x128xf32, #tpu.memory_space<vmem>>, vector<1x8x8x128xf32>
    %1 = vector.shape_cast %0 : vector<1x8x8x128xf32> to vector<8x8x128xf32>
    %cst = arith.constant 5.000000e-01 : f32
    %2 = vector.broadcast %cst : f32 to vector<8x8x128xf32>
    %3 = arith.cmpf ogt, %1, %2 : vector<8x8x128xf32>
    %cst_3 = arith.constant -5.000000e-01 : f32
    %4 = vector.broadcast %cst_3 : f32 to vector<8x8x128xf32>
    %5 = arith.cmpf olt, %1, %4 : vector<8x8x128xf32>
    %cst_4 = arith.constant -1.000000e+00 : f32
    %cst_5 = arith.constant 0.000000e+00 : f32
    %6 = vector.broadcast %cst_4 : f32 to vector<8x8x128xf32>
    %7 = vector.broadcast %cst_5 : f32 to vector<8x8x128xf32>
    %8 = arith.select %5, %6, %7 : vector<8x8x128xi1>, vector<8x8x128xf32>
    %cst_6 = arith.constant 1.000000e+00 : f32
    %9 = vector.broadcast %cst_6 : f32 to vector<8x8x128xf32>
    %10 = arith.select %3, %9, %8 : vector<8x8x128xi1>, vector<8x8x128xf32>
    %11 = arith.truncf %10 : vector<8x8x128xf32> to vector<8x8x128xbf16>
    %c0_7 = arith.constant 0 : index
    %c0_8 = arith.constant 0 : index
    %c0_9 = arith.constant 0 : index
    %c0_10 = arith.constant 0 : index
    %12 = vector.load %arg2[%c0_7, %c0_8, %c0_9, %c0_10] : memref<1x8x9x128xf32, #tpu.memory_space<vmem>>, vector<1x8x9x128xf32>
    %13 = vector.shape_cast %12 : vector<1x8x9x128xf32> to vector<8x9x128xf32>
    %cst_11 = arith.constant 5.000000e-01 : f32
    %14 = vector.broadcast %cst_11 : f32 to vector<8x9x128xf32>
    %15 = arith.cmpf ogt, %13, %14 : vector<8x9x128xf32>
    %cst_12 = arith.constant -5.000000e-01 : f32
    %16 = vector.broadcast %cst_12 : f32 to vector<8x9x128xf32>
    %17 = arith.cmpf olt, %13, %16 : vector<8x9x128xf32>
    %cst_13 = arith.constant -1.000000e+00 : f32
    %cst_14 = arith.constant 0.000000e+00 : f32
    %18 = vector.broadcast %cst_13 : f32 to vector<8x9x128xf32>
    %19 = vector.broadcast %cst_14 : f32 to vector<8x9x128xf32>
    %20 = arith.select %17, %18, %19 : vector<8x9x128xi1>, vector<8x9x128xf32>
    %cst_15 = arith.constant 1.000000e+00 : f32
    %21 = vector.broadcast %cst_15 : f32 to vector<8x9x128xf32>
    %22 = arith.select %15, %21, %20 : vector<8x9x128xi1>, vector<8x9x128xf32>
    %23 = arith.truncf %22 : vector<8x9x128xf32> to vector<8x9x128xbf16>
    %c0_16 = arith.constant 0 : index
    %c0_17 = arith.constant 0 : index
    %c0_18 = arith.constant 0 : index
    %c0_19 = arith.constant 0 : index
    %24 = vector.load %arg3[%c0_16, %c0_17, %c0_18, %c0_19] : memref<1x9x8x128xf32, #tpu.memory_space<vmem>>, vector<1x9x8x128xf32>
    %25 = vector.shape_cast %24 : vector<1x9x8x128xf32> to vector<9x8x128xf32>
    %cst_20 = arith.constant 5.000000e-01 : f32
    %26 = vector.broadcast %cst_20 : f32 to vector<9x8x128xf32>
    %27 = arith.cmpf ogt, %25, %26 : vector<9x8x128xf32>
    %cst_21 = arith.constant -5.000000e-01 : f32
    %28 = vector.broadcast %cst_21 : f32 to vector<9x8x128xf32>
    %29 = arith.cmpf olt, %25, %28 : vector<9x8x128xf32>
    %cst_22 = arith.constant -1.000000e+00 : f32
    %cst_23 = arith.constant 0.000000e+00 : f32
    %30 = vector.broadcast %cst_22 : f32 to vector<9x8x128xf32>
    %31 = vector.broadcast %cst_23 : f32 to vector<9x8x128xf32>
    %32 = arith.select %29, %30, %31 : vector<9x8x128xi1>, vector<9x8x128xf32>
    %cst_24 = arith.constant 1.000000e+00 : f32
    %33 = vector.broadcast %cst_24 : f32 to vector<9x8x128xf32>
    %34 = arith.select %27, %33, %32 : vector<9x8x128xi1>, vector<9x8x128xf32>
    %35 = arith.truncf %34 : vector<9x8x128xf32> to vector<9x8x128xbf16>
    %c0_25 = arith.constant 0 : index
    %c0_26 = arith.constant 0 : index
    %c0_27 = arith.constant 0 : index
    %c0_28 = arith.constant 0 : index
    %36 = vector.load %arg4[%c0_25, %c0_26, %c0_27, %c0_28] : memref<1x9x9x128xf32, #tpu.memory_space<vmem>>, vector<1x9x9x128xf32>
    %37 = vector.shape_cast %36 : vector<1x9x9x128xf32> to vector<9x9x128xf32>
    %cst_29 = arith.constant 5.000000e-01 : f32
    %38 = vector.broadcast %cst_29 : f32 to vector<9x9x128xf32>
    %39 = arith.cmpf ogt, %37, %38 : vector<9x9x128xf32>
    %cst_30 = arith.constant -5.000000e-01 : f32
    %40 = vector.broadcast %cst_30 : f32 to vector<9x9x128xf32>
    %41 = arith.cmpf olt, %37, %40 : vector<9x9x128xf32>
    %cst_31 = arith.constant -1.000000e+00 : f32
    %cst_32 = arith.constant 0.000000e+00 : f32
    %42 = vector.broadcast %cst_31 : f32 to vector<9x9x128xf32>
    %43 = vector.broadcast %cst_32 : f32 to vector<9x9x128xf32>
    %44 = arith.select %41, %42, %43 : vector<9x9x128xi1>, vector<9x9x128xf32>
    %cst_33 = arith.constant 1.000000e+00 : f32
    %45 = vector.broadcast %cst_33 : f32 to vector<9x9x128xf32>
    %46 = arith.select %39, %45, %44 : vector<9x9x128xi1>, vector<9x9x128xf32>
    %47 = arith.truncf %46 : vector<9x9x128xf32> to vector<9x9x128xbf16>
    %cst_34 = arith.constant 0.000000e+00 : f32
    %48 = vector.broadcast %cst_34 : f32 to vector<64x128xf32>
    %49 = vector.extract_strided_slice %47 {offsets = [0, 0, 0], sizes = [8, 8, 128], strides = [1, 1, 1]} : vector<9x9x128xbf16> to vector<8x8x128xbf16>
    %50 = vector.shape_cast %49 : vector<8x8x128xbf16> to vector<64x128xbf16>
    %c0_35 = arith.constant 0 : index
    %c0_36 = arith.constant 0 : index
    %51 = vector.load %arg5[%c0_35, %c0_36] : memref<1152x128xbf16, #tpu.memory_space<vmem>>, vector<128x128xbf16>
    %cst_37 = arith.constant dense<0.000000e+00> : vector<64x128xf32>
    %52 = tpu.matmul %50, %51, %cst_37 {dimension_numbers = #tpu.dot_dimension_numbers<[1], [0], [0], [1], [0, 0, 1, 1], [], []>} : vector<64x128xbf16>, vector<128x128xbf16>, vector<64x128xf32> -> vector<64x128xf32>
    %53 = arith.addf %48, %52 : vector<64x128xf32>
    %54 = vector.extract_strided_slice %35 {offsets = [0, 0, 0], sizes = [8, 8, 128], strides = [1, 1, 1]} : vector<9x8x128xbf16> to vector<8x8x128xbf16>
    %55 = vector.shape_cast %54 : vector<8x8x128xbf16> to vector<64x128xbf16>
    %c128 = arith.constant 128 : index
    %c0_38 = arith.constant 0 : index
    %56 = vector.load %arg5[%c128, %c0_38] : memref<1152x128xbf16, #tpu.memory_space<vmem>>, vector<128x128xbf16>
    %cst_39 = arith.constant dense<0.000000e+00> : vector<64x128xf32>
    %57 = tpu.matmul %55, %56, %cst_39 {dimension_numbers = #tpu.dot_dimension_numbers<[1], [0], [0], [1], [0, 0, 1, 1], [], []>} : vector<64x128xbf16>, vector<128x128xbf16>, vector<64x128xf32> -> vector<64x128xf32>
    %58 = arith.addf %53, %57 : vector<64x128xf32>
    %59 = vector.extract_strided_slice %47 {offsets = [0, 1, 0], sizes = [8, 8, 128], strides = [1, 1, 1]} : vector<9x9x128xbf16> to vector<8x8x128xbf16>
    %60 = vector.shape_cast %59 : vector<8x8x128xbf16> to vector<64x128xbf16>
    %c256 = arith.constant 256 : index
    %c0_40 = arith.constant 0 : index
    %61 = vector.load %arg5[%c256, %c0_40] : memref<1152x128xbf16, #tpu.memory_space<vmem>>, vector<128x128xbf16>
    %cst_41 = arith.constant dense<0.000000e+00> : vector<64x128xf32>
    %62 = tpu.matmul %60, %61, %cst_41 {dimension_numbers = #tpu.dot_dimension_numbers<[1], [0], [0], [1], [0, 0, 1, 1], [], []>} : vector<64x128xbf16>, vector<128x128xbf16>, vector<64x128xf32> -> vector<64x128xf32>
    %63 = arith.addf %58, %62 : vector<64x128xf32>
    %64 = vector.extract_strided_slice %23 {offsets = [0, 0, 0], sizes = [8, 8, 128], strides = [1, 1, 1]} : vector<8x9x128xbf16> to vector<8x8x128xbf16>
    %65 = vector.shape_cast %64 : vector<8x8x128xbf16> to vector<64x128xbf16>
    %c384 = arith.constant 384 : index
    %c0_42 = arith.constant 0 : index
    %66 = vector.load %arg5[%c384, %c0_42] : memref<1152x128xbf16, #tpu.memory_space<vmem>>, vector<128x128xbf16>
    %cst_43 = arith.constant dense<0.000000e+00> : vector<64x128xf32>
    %67 = tpu.matmul %65, %66, %cst_43 {dimension_numbers = #tpu.dot_dimension_numbers<[1], [0], [0], [1], [0, 0, 1, 1], [], []>} : vector<64x128xbf16>, vector<128x128xbf16>, vector<64x128xf32> -> vector<64x128xf32>
    %68 = arith.addf %63, %67 : vector<64x128xf32>
    %69 = vector.shape_cast %11 : vector<8x8x128xbf16> to vector<64x128xbf16>
    %c512 = arith.constant 512 : index
    %c0_44 = arith.constant 0 : index
    %70 = vector.load %arg5[%c512, %c0_44] : memref<1152x128xbf16, #tpu.memory_space<vmem>>, vector<128x128xbf16>
    %cst_45 = arith.constant dense<0.000000e+00> : vector<64x128xf32>
    %71 = tpu.matmul %69, %70, %cst_45 {dimension_numbers = #tpu.dot_dimension_numbers<[1], [0], [0], [1], [0, 0, 1, 1], [], []>} : vector<64x128xbf16>, vector<128x128xbf16>, vector<64x128xf32> -> vector<64x128xf32>
    %72 = arith.addf %68, %71 : vector<64x128xf32>
    %73 = vector.extract_strided_slice %23 {offsets = [0, 1, 0], sizes = [8, 8, 128], strides = [1, 1, 1]} : vector<8x9x128xbf16> to vector<8x8x128xbf16>
    %74 = vector.shape_cast %73 : vector<8x8x128xbf16> to vector<64x128xbf16>
    %c640 = arith.constant 640 : index
    %c0_46 = arith.constant 0 : index
    %75 = vector.load %arg5[%c640, %c0_46] : memref<1152x128xbf16, #tpu.memory_space<vmem>>, vector<128x128xbf16>
    %cst_47 = arith.constant dense<0.000000e+00> : vector<64x128xf32>
    %76 = tpu.matmul %74, %75, %cst_47 {dimension_numbers = #tpu.dot_dimension_numbers<[1], [0], [0], [1], [0, 0, 1, 1], [], []>} : vector<64x128xbf16>, vector<128x128xbf16>, vector<64x128xf32> -> vector<64x128xf32>
    %77 = arith.addf %72, %76 : vector<64x128xf32>
    %78 = vector.extract_strided_slice %47 {offsets = [1, 0, 0], sizes = [8, 8, 128], strides = [1, 1, 1]} : vector<9x9x128xbf16> to vector<8x8x128xbf16>
    %79 = vector.shape_cast %78 : vector<8x8x128xbf16> to vector<64x128xbf16>
    %c768 = arith.constant 768 : index
    %c0_48 = arith.constant 0 : index
    %80 = vector.load %arg5[%c768, %c0_48] : memref<1152x128xbf16, #tpu.memory_space<vmem>>, vector<128x128xbf16>
    %cst_49 = arith.constant dense<0.000000e+00> : vector<64x128xf32>
    %81 = tpu.matmul %79, %80, %cst_49 {dimension_numbers = #tpu.dot_dimension_numbers<[1], [0], [0], [1], [0, 0, 1, 1], [], []>} : vector<64x128xbf16>, vector<128x128xbf16>, vector<64x128xf32> -> vector<64x128xf32>
    %82 = arith.addf %77, %81 : vector<64x128xf32>
    %83 = vector.extract_strided_slice %35 {offsets = [1, 0, 0], sizes = [8, 8, 128], strides = [1, 1, 1]} : vector<9x8x128xbf16> to vector<8x8x128xbf16>
    %84 = vector.shape_cast %83 : vector<8x8x128xbf16> to vector<64x128xbf16>
    %c896 = arith.constant 896 : index
    %c0_50 = arith.constant 0 : index
    %85 = vector.load %arg5[%c896, %c0_50] : memref<1152x128xbf16, #tpu.memory_space<vmem>>, vector<128x128xbf16>
    %cst_51 = arith.constant dense<0.000000e+00> : vector<64x128xf32>
    %86 = tpu.matmul %84, %85, %cst_51 {dimension_numbers = #tpu.dot_dimension_numbers<[1], [0], [0], [1], [0, 0, 1, 1], [], []>} : vector<64x128xbf16>, vector<128x128xbf16>, vector<64x128xf32> -> vector<64x128xf32>
    %87 = arith.addf %82, %86 : vector<64x128xf32>
    %88 = vector.extract_strided_slice %47 {offsets = [1, 1, 0], sizes = [8, 8, 128], strides = [1, 1, 1]} : vector<9x9x128xbf16> to vector<8x8x128xbf16>
    %89 = vector.shape_cast %88 : vector<8x8x128xbf16> to vector<64x128xbf16>
    %c1024 = arith.constant 1024 : index
    %c0_52 = arith.constant 0 : index
    %90 = vector.load %arg5[%c1024, %c0_52] : memref<1152x128xbf16, #tpu.memory_space<vmem>>, vector<128x128xbf16>
    %cst_53 = arith.constant dense<0.000000e+00> : vector<64x128xf32>
    %91 = tpu.matmul %89, %90, %cst_53 {dimension_numbers = #tpu.dot_dimension_numbers<[1], [0], [0], [1], [0, 0, 1, 1], [], []>} : vector<64x128xbf16>, vector<128x128xbf16>, vector<64x128xf32> -> vector<64x128xf32>
    %92 = arith.addf %87, %91 : vector<64x128xf32>
    %c0_54 = arith.constant 0 : index
    %c0_55 = arith.constant 0 : index
    %93 = vector.load %arg6[%c0_54, %c0_55] : memref<1x128xf32, #tpu.memory_space<vmem>>, vector<1x128xf32>
    %94 = vector.broadcast %93 : vector<1x128xf32> to vector<64x128xf32>
    %95 = arith.mulf %92, %94 : vector<64x128xf32>
    %c0_56 = arith.constant 0 : index
    %c0_57 = arith.constant 0 : index
    %96 = vector.load %arg7[%c0_56, %c0_57] : memref<1x128xf32, #tpu.memory_space<vmem>>, vector<1x128xf32>
    %97 = vector.broadcast %96 : vector<1x128xf32> to vector<64x128xf32>
    %98 = arith.addf %95, %97 : vector<64x128xf32>
    %cst_58 = arith.constant 0.000000e+00 : f32
    %99 = vector.broadcast %cst_58 : f32 to vector<64x128xf32>
    %100 = arith.maximumf %98, %99 : vector<64x128xf32>
    %cst_59 = arith.constant 5.000000e-01 : f32
    %101 = vector.broadcast %cst_59 : f32 to vector<64x128xf32>
    %102 = arith.cmpf ogt, %100, %101 : vector<64x128xf32>
    %cst_60 = arith.constant -5.000000e-01 : f32
    %103 = vector.broadcast %cst_60 : f32 to vector<64x128xf32>
    %104 = arith.cmpf olt, %100, %103 : vector<64x128xf32>
    %cst_61 = arith.constant -1.000000e+00 : f32
    %cst_62 = arith.constant 0.000000e+00 : f32
    %105 = vector.broadcast %cst_61 : f32 to vector<64x128xf32>
    %106 = vector.broadcast %cst_62 : f32 to vector<64x128xf32>
    %107 = arith.select %104, %105, %106 : vector<64x128xi1>, vector<64x128xf32>
    %cst_63 = arith.constant 1.000000e+00 : f32
    %108 = vector.broadcast %cst_63 : f32 to vector<64x128xf32>
    %109 = arith.select %102, %108, %107 : vector<64x128xi1>, vector<64x128xf32>
    %110 = arith.truncf %109 : vector<64x128xf32> to vector<64x128xbf16>
    %c0_64 = arith.constant 0 : index
    %c0_65 = arith.constant 0 : index
    %111 = vector.load %arg8[%c0_64, %c0_65] : memref<128x128xbf16, #tpu.memory_space<vmem>>, vector<128x128xbf16>
    %cst_66 = arith.constant dense<0.000000e+00> : vector<64x128xf32>
    %112 = tpu.matmul %110, %111, %cst_66 {dimension_numbers = #tpu.dot_dimension_numbers<[1], [0], [0], [1], [0, 0, 1, 1], [], []>} : vector<64x128xbf16>, vector<128x128xbf16>, vector<64x128xf32> -> vector<64x128xf32>
    %c0_67 = arith.constant 0 : index
    %c0_68 = arith.constant 0 : index
    %113 = vector.load %arg9[%c0_67, %c0_68] : memref<1x128xf32, #tpu.memory_space<vmem>>, vector<1x128xf32>
    %114 = vector.broadcast %113 : vector<1x128xf32> to vector<64x128xf32>
    %115 = arith.mulf %112, %114 : vector<64x128xf32>
    %c0_69 = arith.constant 0 : index
    %c0_70 = arith.constant 0 : index
    %116 = vector.load %arg10[%c0_69, %c0_70] : memref<1x128xf32, #tpu.memory_space<vmem>>, vector<1x128xf32>
    %117 = vector.broadcast %116 : vector<1x128xf32> to vector<64x128xf32>
    %118 = arith.addf %115, %117 : vector<64x128xf32>
    %c0_71 = arith.constant 0 : index
    %c0_72 = arith.constant 0 : index
    %c0_73 = arith.constant 0 : index
    %119 = vector.load %arg11[%c0_71, %c0_72, %c0_73] : memref<1x64x128xf32, #tpu.memory_space<vmem>>, vector<1x64x128xf32>
    %120 = vector.shape_cast %119 : vector<1x64x128xf32> to vector<64x128xf32>
    %121 = arith.addf %118, %120 : vector<64x128xf32>
    %cst_74 = arith.constant 0.000000e+00 : f32
    %122 = vector.broadcast %cst_74 : f32 to vector<64x128xf32>
    %123 = arith.maximumf %121, %122 : vector<64x128xf32>
    %c0_75 = arith.constant 0 : index
    %c0_76 = arith.constant 0 : index
    %c0_77 = arith.constant 0 : index
    %124 = vector.load %arg12[%c0_75, %c0_76, %c0_77] : memref<1x64x128xf32, #tpu.memory_space<vmem>>, vector<1x64x128xf32>
    %125 = vector.shape_cast %124 : vector<1x64x128xf32> to vector<64x128xf32>
    %126 = vector.shape_cast %123 : vector<64x128xf32> to vector<1x64x128xf32>
    tpu.vector_store %arg12[%c0_75, %c0_76, %c0_77], %126 {strides = array<i32>} : memref<1x64x128xf32, #tpu.memory_space<vmem>>, vector<1x64x128xf32>,
    return
  }
  func.func @transform_0(%arg0: i32) -> (i32, i32, i32, i32) {
    %c0_i32 = arith.constant 0 : i32
    %c0_i32_0 = arith.constant 0 : i32
    %c0_i32_1 = arith.constant 0 : i32
    %c0_i32_2 = arith.constant 0 : i32
    return %arg0, %c0_i32, %c0_i32_0, %c0_i32_1 : i32, i32, i32, i32
  }
  func.func @transform_1(%arg0: i32) -> (i32, i32, i32, i32) {
    %c0_i32 = arith.constant 0 : i32
    %c0_i32_0 = arith.constant 0 : i32
    %c0_i32_1 = arith.constant 0 : i32
    %c0_i32_2 = arith.constant 0 : i32
    return %arg0, %c0_i32, %c0_i32_0, %c0_i32_1 : i32, i32, i32, i32
  }
  func.func @transform_2(%arg0: i32) -> (i32, i32, i32, i32) {
    %c0_i32 = arith.constant 0 : i32
    %c0_i32_0 = arith.constant 0 : i32
    %c0_i32_1 = arith.constant 0 : i32
    %c0_i32_2 = arith.constant 0 : i32
    return %arg0, %c0_i32, %c0_i32_0, %c0_i32_1 : i32, i32, i32, i32
  }
  func.func @transform_3(%arg0: i32) -> (i32, i32, i32, i32) {
    %c0_i32 = arith.constant 0 : i32
    %c0_i32_0 = arith.constant 0 : i32
    %c0_i32_1 = arith.constant 0 : i32
    %c0_i32_2 = arith.constant 0 : i32
    return %arg0, %c0_i32, %c0_i32_0, %c0_i32_1 : i32, i32, i32, i32
  }
  func.func @transform_4(%arg0: i32) -> (i32, i32) {
    %c0_i32 = arith.constant 0 : i32
    %c0_i32_0 = arith.constant 0 : i32
    %c0_i32_1 = arith.constant 0 : i32
    return %c0_i32, %c0_i32_0 : i32, i32
  }
  func.func @transform_5(%arg0: i32) -> (i32, i32) {
    %c0_i32 = arith.constant 0 : i32
    %c0_i32_0 = arith.constant 0 : i32
    %c0_i32_1 = arith.constant 0 : i32
    return %c0_i32, %c0_i32_0 : i32, i32
  }
  func.func @transform_6(%arg0: i32) -> (i32, i32) {
    %c0_i32 = arith.constant 0 : i32
    %c0_i32_0 = arith.constant 0 : i32
    %c0_i32_1 = arith.constant 0 : i32
    return %c0_i32, %c0_i32_0 : i32, i32
  }
  func.func @transform_7(%arg0: i32) -> (i32, i32) {
    %c0_i32 = arith.constant 0 : i32
    %c0_i32_0 = arith.constant 0 : i32
    %c0_i32_1 = arith.constant 0 : i32
    return %c0_i32, %c0_i32_0 : i32, i32
  }
  func.func @transform_8(%arg0: i32) -> (i32, i32) {
    %c0_i32 = arith.constant 0 : i32
    %c0_i32_0 = arith.constant 0 : i32
    %c0_i32_1 = arith.constant 0 : i32
    return %c0_i32, %c0_i32_0 : i32, i32
  }
  func.func @transform_9(%arg0: i32) -> (i32, i32) {
    %c0_i32 = arith.constant 0 : i32
    %c0_i32_0 = arith.constant 0 : i32
    %c0_i32_1 = arith.constant 0 : i32
    return %c0_i32, %c0_i32_0 : i32, i32
  }
  func.func @transform_10(%arg0: i32) -> (i32, i32, i32) {
    %c0_i32 = arith.constant 0 : i32
    %c0_i32_0 = arith.constant 0 : i32
    %c0_i32_1 = arith.constant 0 : i32
    return %arg0, %c0_i32, %c0_i32_0 : i32, i32, i32
  }
  func.func @transform_11(%arg0: i32) -> (i32, i32, i32) {
    %c0_i32 = arith.constant 0 : i32
    %c0_i32_0 = arith.constant 0 : i32
    %c0_i32_1 = arith.constant 0 : i32
    return %arg0, %c0_i32, %c0_i32_0 : i32, i32, i32
  }
}

</mosaic_0001>

<llo_original>
// kernel: _lambda_.2
$region0: #{_lambda_.2}
  #allocation0 [shape = 'u32[]', space=smem, size = 0x4, offset = 0x4, fixed_abs, tag = 'smem constant byte address 0x4 - core index']
  #allocation1 [shape = 'u32[72,128]{1,0:T(1,128)}', space=vmem, size = 0x9000, scoped, tag = 'internal scratch']
  #allocation2 [shape = 'f32[512,128]{1,0:T(8,128)}', space=vmem, size = 0x40000, scoped, tag = 'scratch operand']
  %s0 = inlined_call_operand.vmem [shape: f32[512,4], index: 0, kind: input, shape index: {}]
  %s1 = inlined_call_operand.vmem [shape: bf16[4,128], index: 1, kind: input, shape index: {}]
  %s2 = inlined_call_operand.vmem [shape: f32[1,128], index: 2, kind: input, shape index: {}]
  %s3 = inlined_call_operand.vmem [shape: f32[1,128], index: 3, kind: input, shape index: {}]
  %s4 = inlined_call_operand.vmem [shape: f32[512,128], index: 4, kind: output, shape index: {}]
  %s5 = sld [smem:[#allocation0]]
  $region34: #{_lambda_.2} parent=0
    _
  %s7 = ssub.s32 1, %s5
  %s8 = scalar_select 0, %s7, %s5
  // Predicated region
  $region2: #{_lambda_.2} parent=0 // pred_check
    _
  $region3: #{_lambda_.2} parent=0 // pred_check_branch
    %10 = sbr.rel (0) target = $region5
  $region4: #{_lambda_.2} parent=0 // pred_region
    _
  $region5: #{_lambda_.2} parent=0 // pred_fallthru
    _
  // Predicated region
  $region6: #{_lambda_.2} parent=0 // pred_check
    _
  $region7: #{_lambda_.2} parent=0 // pred_check_branch
    %12 = sbr.rel (0) target = $region9
  $region8: #{_lambda_.2} parent=0 // pred_region
    _
  $region9: #{_lambda_.2} parent=0 // pred_fallthru
    _
  // Predicated region
  $region10: #{_lambda_.2} parent=0 // pred_check
    _
  $region11: #{_lambda_.2} parent=0 // pred_check_branch
    %14 = sbr.rel (0) target = $region13
  $region12: #{_lambda_.2} parent=0 // pred_region
    _
  $region13: #{_lambda_.2} parent=0 // pred_fallthru
    _
  // Predicated region
  $region14: #{_lambda_.2} parent=0 // pred_check
    _
  $region15: #{_lambda_.2} parent=0 // pred_check_branch
    %16 = sbr.rel (0) target = $region17
  $region16: #{_lambda_.2} parent=0 // pred_region
    _
  $region17: #{_lambda_.2} parent=0 // pred_fallthru
    _
  %p18 = scmp.eq.s32.totalorder 0, 0
  // Predicated region
  $region18: #{_lambda_.2} parent=0 // pred_check
    %p19 = pneg %p18
  $region19: #{_lambda_.2} parent=0 // pred_check_branch
    %21 = sbr.rel (%p19) target = $region21
  $region20: #{_lambda_.2} parent=0 // pred_region
    %22 = vst [vmem:[#allocation2] sm:$0xff] 0.0
    %23 = vst [vmem:[#allocation2 + $0x8] sm:$0xff] 0.0
    %24 = vst [vmem:[#allocation2 + $0x10] sm:$0xff] 0.0
    %25 = vst [vmem:[#allocation2 + $0x18] sm:$0xff] 0.0
    %26 = vst [vmem:[#allocation2 + $0x20] sm:$0xff] 0.0
    %27 = vst [vmem:[#allocation2 + $0x28] sm:$0xff] 0.0
    %28 = vst [vmem:[#allocation2 + $0x30] sm:$0xff] 0.0
    %29 = vst [vmem:[#allocation2 + $0x38] sm:$0xff] 0.0
    %30 = vst [vmem:[#allocation2 + $0x40] sm:$0xff] 0.0
    %31 = vst [vmem:[#allocation2 + $0x48] sm:$0xff] 0.0
    %32 = vst [vmem:[#allocation2 + $0x50] sm:$0xff] 0.0
    %33 = vst [vmem:[#allocation2 + $0x58] sm:$0xff] 0.0
    %34 = vst [vmem:[#allocation2 + $0x60] sm:$0xff] 0.0
    %35 = vst [vmem:[#allocation2 + $0x68] sm:$0xff] 0.0
    %36 = vst [vmem:[#allocation2 + $0x70] sm:$0xff] 0.0
    %37 = vst [vmem:[#allocation2 + $0x78] sm:$0xff] 0.0
    %38 = vst [vmem:[#allocation2 + $0x80] sm:$0xff] 0.0
    %39 = vst [vmem:[#allocation2 + $0x88] sm:$0xff] 0.0
    %40 = vst [vmem:[#allocation2 + $0x90] sm:$0xff] 0.0
    %41 = vst [vmem:[#allocation2 + $0x98] sm:$0xff] 0.0
    %42 = vst [vmem:[#allocation2 + $0xa0] sm:$0xff] 0.0
    %43 = vst [vmem:[#allocation2 + $0xa8] sm:$0xff] 0.0
    %44 = vst [vmem:[#allocation2 + $0xb0] sm:$0xff] 0.0
    %45 = vst [vmem:[#allocation2 + $0xb8] sm:$0xff] 0.0
    %46 = vst [vmem:[#allocation2 + $0xc0] sm:$0xff] 0.0
    %47 = vst [vmem:[#allocation2 + $0xc8] sm:$0xff] 0.0
    %48 = vst [vmem:[#allocation2 + $0xd0] sm:$0xff] 0.0
    %49 = vst [vmem:[#allocation2 + $0xd8] sm:$0xff] 0.0
    %50 = vst [vmem:[#allocation2 + $0xe0] sm:$0xff] 0.0
    %51 = vst [vmem:[#allocation2 + $0xe8] sm:$0xff] 0.0
    %52 = vst [vmem:[#allocation2 + $0xf0] sm:$0xff] 0.0
    %53 = vst [vmem:[#allocation2 + $0xf8] sm:$0xff] 0.0
    %54 = vst [vmem:[#allocation2 + $0x100] sm:$0xff] 0.0
    %55 = vst [vmem:[#allocation2 + $0x108] sm:$0xff] 0.0
    %56 = vst [vmem:[#allocation2 + $0x110] sm:$0xff] 0.0
    %57 = vst [vmem:[#allocation2 + $0x118] sm:$0xff] 0.0
    %58 = vst [vmem:[#allocation2 + $0x120] sm:$0xff] 0.0
    %59 = vst [vmem:[#allocation2 + $0x128] sm:$0xff] 0.0
    %60 = vst [vmem:[#allocation2 + $0x130] sm:$0xff] 0.0
    %61 = vst [vmem:[#allocation2 + $0x138] sm:$0xff] 0.0
    %62 = vst [vmem:[#allocation2 + $0x140] sm:$0xff] 0.0
    %63 = vst [vmem:[#allocation2 + $0x148] sm:$0xff] 0.0
    %64 = vst [vmem:[#allocation2 + $0x150] sm:$0xff] 0.0
    %65 = vst [vmem:[#allocation2 + $0x158] sm:$0xff] 0.0
    %66 = vst [vmem:[#allocation2 + $0x160] sm:$0xff] 0.0
    %67 = vst [vmem:[#allocation2 + $0x168] sm:$0xff] 0.0
    %68 = vst [vmem:[#allocation2 + $0x170] sm:$0xff] 0.0
    %69 = vst [vmem:[#allocation2 + $0x178] sm:$0xff] 0.0
    %70 = vst [vmem:[#allocation2 + $0x180] sm:$0xff] 0.0
    %71 = vst [vmem:[#allocation2 + $0x188] sm:$0xff] 0.0
    %72 = vst [vmem:[#allocation2 + $0x190] sm:$0xff] 0.0
    %73 = vst [vmem:[#allocation2 + $0x198] sm:$0xff] 0.0
    %74 = vst [vmem:[#allocation2 + $0x1a0] sm:$0xff] 0.0
    %75 = vst [vmem:[#allocation2 + $0x1a8] sm:$0xff] 0.0
    %76 = vst [vmem:[#allocation2 + $0x1b0] sm:$0xff] 0.0
    %77 = vst [vmem:[#allocation2 + $0x1b8] sm:$0xff] 0.0
    %78 = vst [vmem:[#allocation2 + $0x1c0] sm:$0xff] 0.0
    %79 = vst [vmem:[#allocation2 + $0x1c8] sm:$0xff] 0.0
    %80 = vst [vmem:[#allocation2 + $0x1d0] sm:$0xff] 0.0
    %81 = vst [vmem:[#allocation2 + $0x1d8] sm:$0xff] 0.0
    %82 = vst [vmem:[#allocation2 + $0x1e0] sm:$0xff] 0.0
    %83 = vst [vmem:[#allocation2 + $0x1e8] sm:$0xff] 0.0
    %84 = vst [vmem:[#allocation2 + $0x1f0] sm:$0xff] 0.0
    %85 = vst [vmem:[#allocation2 + $0x1f8] sm:$0xff] 0.0
  $region21: #{_lambda_.2} parent=0 // pred_fallthru
    _
  %v86 = vld [vmem:[%s0] sm:$0xff]
  %v87 = vld [vmem:[%s0 + $0x8] sm:$0xff]
  %v88 = vld [vmem:[%s0 + $0x10] sm:$0xff]
  %v89 = vld [vmem:[%s0 + $0x18] sm:$0xff]
  %v90 = vld [vmem:[%s0 + $0x20] sm:$0xff]
  %v91 = vld [vmem:[%s0 + $0x28] sm:$0xff]
  %v92 = vld [vmem:[%s0 + $0x30] sm:$0xff]
  %v93 = vld [vmem:[%s0 + $0x38] sm:$0xff]
  %v94 = vld [vmem:[%s0 + $0x40] sm:$0xff]
  %v95 = vld [vmem:[%s0 + $0x48] sm:$0xff]
  %v96 = vld [vmem:[%s0 + $0x50] sm:$0xff]
  %v97 = vld [vmem:[%s0 + $0x58] sm:$0xff]
  %v98 = vld [vmem:[%s0 + $0x60] sm:$0xff]
  %v99 = vld [vmem:[%s0 + $0x68] sm:$0xff]
  %v100 = vld [vmem:[%s0 + $0x70] sm:$0xff]
  %v101 = vld [vmem:[%s0 + $0x78] sm:$0xff]
  %v102 = vld [vmem:[%s0 + $0x80] sm:$0xff]
  %v103 = vld [vmem:[%s0 + $0x88] sm:$0xff]
  %v104 = vld [vmem:[%s0 + $0x90] sm:$0xff]
  %v105 = vld [vmem:[%s0 + $0x98] sm:$0xff]
  %v106 = vld [vmem:[%s0 + $0xa0] sm:$0xff]
  %v107 = vld [vmem:[%s0 + $0xa8] sm:$0xff]
  %v108 = vld [vmem:[%s0 + $0xb0] sm:$0xff]
  %v109 = vld [vmem:[%s0 + $0xb8] sm:$0xff]
  %v110 = vld [vmem:[%s0 + $0xc0] sm:$0xff]
  %v111 = vld [vmem:[%s0 + $0xc8] sm:$0xff]
  %v112 = vld [vmem:[%s0 + $0xd0] sm:$0xff]
  %v113 = vld [vmem:[%s0 + $0xd8] sm:$0xff]
  %v114 = vld [vmem:[%s0 + $0xe0] sm:$0xff]
  %v115 = vld [vmem:[%s0 + $0xe8] sm:$0xff]
  %v116 = vld [vmem:[%s0 + $0xf0] sm:$0xff]
  %v117 = vld [vmem:[%s0 + $0xf8] sm:$0xff]
  %v118 = vld [vmem:[%s0 + $0x100] sm:$0xff]
  %v119 = vld [vmem:[%s0 + $0x108] sm:$0xff]
  %v120 = vld [vmem:[%s0 + $0x110] sm:$0xff]
  %v121 = vld [vmem:[%s0 + $0x118] sm:$0xff]
  %v122 = vld [vmem:[%s0 + $0x120] sm:$0xff]
  %v123 = vld [vmem:[%s0 + $0x128] sm:$0xff]
  %v124 = vld [vmem:[%s0 + $0x130] sm:$0xff]
  %v125 = vld [vmem:[%s0 + $0x138] sm:$0xff]
  %v126 = vld [vmem:[%s0 + $0x140] sm:$0xff]
  %v127 = vld [vmem:[%s0 + $0x148] sm:$0xff]
  %v128 = vld [vmem:[%s0 + $0x150] sm:$0xff]
  %v129 = vld [vmem:[%s0 + $0x158] sm:$0xff]
  %v130 = vld [vmem:[%s0 + $0x160] sm:$0xff]
  %v131 = vld [vmem:[%s0 + $0x168] sm:$0xff]
  %v132 = vld [vmem:[%s0 + $0x170] sm:$0xff]
  %v133 = vld [vmem:[%s0 + $0x178] sm:$0xff]
  %v134 = vld [vmem:[%s0 + $0x180] sm:$0xff]
  %v135 = vld [vmem:[%s0 + $0x188] sm:$0xff]
  %v136 = vld [vmem:[%s0 + $0x190] sm:$0xff]
  %v137 = vld [vmem:[%s0 + $0x198] sm:$0xff]
  %v138 = vld [vmem:[%s0 + $0x1a0] sm:$0xff]
  %v139 = vld [vmem:[%s0 + $0x1a8] sm:$0xff]
  %v140 = vld [vmem:[%s0 + $0x1b0] sm:$0xff]
  %v141 = vld [vmem:[%s0 + $0x1b8] sm:$0xff]
  %v142 = vld [vmem:[%s0 + $0x1c0] sm:$0xff]
  %v143 = vld [vmem:[%s0 + $0x1c8] sm:$0xff]
  %v144 = vld [vmem:[%s0 + $0x1d0] sm:$0xff]
  %v145 = vld [vmem:[%s0 + $0x1d8] sm:$0xff]
  %v146 = vld [vmem:[%s0 + $0x1e0] sm:$0xff]
  %v147 = vld [vmem:[%s0 + $0x1e8] sm:$0xff]
  %v148 = vld [vmem:[%s0 + $0x1f0] sm:$0xff]
  %v149 = vld [vmem:[%s0 + $0x1f8] sm:$0xff]
  %vm150 = vcmp.gt.f32.partialorder %v86, 0.5
  %vm151 = vcmp.gt.f32.partialorder %v87, 0.5
  %vm152 = vcmp.gt.f32.partialorder %v88, 0.5
  %vm153 = vcmp.gt.f32.partialorder %v89, 0.5
  %vm154 = vcmp.gt.f32.partialorder %v90, 0.5
  %vm155 = vcmp.gt.f32.partialorder %v91, 0.5
  %vm156 = vcmp.gt.f32.partialorder %v92, 0.5
  %vm157 = vcmp.gt.f32.partialorder %v93, 0.5
  %vm158 = vcmp.gt.f32.partialorder %v94, 0.5
  %vm159 = vcmp.gt.f32.partialorder %v95, 0.5
  %vm160 = vcmp.gt.f32.partialorder %v96, 0.5
  %vm161 = vcmp.gt.f32.partialorder %v97, 0.5
  %vm162 = vcmp.gt.f32.partialorder %v98, 0.5
  %vm163 = vcmp.gt.f32.partialorder %v99, 0.5
  %vm164 = vcmp.gt.f32.partialorder %v100, 0.5
  %vm165 = vcmp.gt.f32.partialorder %v101, 0.5
  %vm166 = vcmp.gt.f32.partialorder %v102, 0.5
  %vm167 = vcmp.gt.f32.partialorder %v103, 0.5
  %vm168 = vcmp.gt.f32.partialorder %v104, 0.5
  %vm169 = vcmp.gt.f32.partialorder %v105, 0.5
  %vm170 = vcmp.gt.f32.partialorder %v106, 0.5
  %vm171 = vcmp.gt.f32.partialorder %v107, 0.5
  %vm172 = vcmp.gt.f32.partialorder %v108, 0.5
  %vm173 = vcmp.gt.f32.partialorder %v109, 0.5
  %vm174 = vcmp.gt.f32.partialorder %v110, 0.5
  %vm175 = vcmp.gt.f32.partialorder %v111, 0.5
  %vm176 = vcmp.gt.f32.partialorder %v112, 0.5
  %vm177 = vcmp.gt.f32.partialorder %v113, 0.5
  %vm178 = vcmp.gt.f32.partialorder %v114, 0.5
  %vm179 = vcmp.gt.f32.partialorder %v115, 0.5
  %vm180 = vcmp.gt.f32.partialorder %v116, 0.5
  %vm181 = vcmp.gt.f32.partialorder %v117, 0.5
  %vm182 = vcmp.gt.f32.partialorder %v118, 0.5
  %vm183 = vcmp.gt.f32.partialorder %v119, 0.5
  %vm184 = vcmp.gt.f32.partialorder %v120, 0.5
  %vm185 = vcmp.gt.f32.partialorder %v121, 0.5
  %vm186 = vcmp.gt.f32.partialorder %v122, 0.5
  %vm187 = vcmp.gt.f32.partialorder %v123, 0.5
  %vm188 = vcmp.gt.f32.partialorder %v124, 0.5
  %vm189 = vcmp.gt.f32.partialorder %v125, 0.5
  %vm190 = vcmp.gt.f32.partialorder %v126, 0.5
  %vm191 = vcmp.gt.f32.partialorder %v127, 0.5
  %vm192 = vcmp.gt.f32.partialorder %v128, 0.5
  %vm193 = vcmp.gt.f32.partialorder %v129, 0.5
  %vm194 = vcmp.gt.f32.partialorder %v130, 0.5
  %vm195 = vcmp.gt.f32.partialorder %v131, 0.5
  %vm196 = vcmp.gt.f32.partialorder %v132, 0.5
  %vm197 = vcmp.gt.f32.partialorder %v133, 0.5
  %vm198 = vcmp.gt.f32.partialorder %v134, 0.5
  %vm199 = vcmp.gt.f32.partialorder %v135, 0.5
  %vm200 = vcmp.gt.f32.partialorder %v136, 0.5
  %vm201 = vcmp.gt.f32.partialorder %v137, 0.5
  %vm202 = vcmp.gt.f32.partialorder %v138, 0.5
  %vm203 = vcmp.gt.f32.partialorder %v139, 0.5
  %vm204 = vcmp.gt.f32.partialorder %v140, 0.5
  %vm205 = vcmp.gt.f32.partialorder %v141, 0.5
  %vm206 = vcmp.gt.f32.partialorder %v142, 0.5
  %vm207 = vcmp.gt.f32.partialorder %v143, 0.5
  %vm208 = vcmp.gt.f32.partialorder %v144, 0.5
  %vm209 = vcmp.gt.f32.partialorder %v145, 0.5
  %vm210 = vcmp.gt.f32.partialorder %v146, 0.5
  %vm211 = vcmp.gt.f32.partialorder %v147, 0.5
  %vm212 = vcmp.gt.f32.partialorder %v148, 0.5
  %vm213 = vcmp.gt.f32.partialorder %v149, 0.5
  %vm214 = vcmp.lt.f32.partialorder %v86, -0.5
  %vm215 = vcmp.lt.f32.partialorder %v87, -0.5
  %vm216 = vcmp.lt.f32.partialorder %v88, -0.5
  %vm217 = vcmp.lt.f32.partialorder %v89, -0.5
  %vm218 = vcmp.lt.f32.partialorder %v90, -0.5
  %vm219 = vcmp.lt.f32.partialorder %v91, -0.5
  %vm220 = vcmp.lt.f32.partialorder %v92, -0.5
  %vm221 = vcmp.lt.f32.partialorder %v93, -0.5
  %vm222 = vcmp.lt.f32.partialorder %v94, -0.5
  %vm223 = vcmp.lt.f32.partialorder %v95, -0.5
  %vm224 = vcmp.lt.f32.partialorder %v96, -0.5
  %vm225 = vcmp.lt.f32.partialorder %v97, -0.5
  %vm226 = vcmp.lt.f32.partialorder %v98, -0.5
  %vm227 = vcmp.lt.f32.partialorder %v99, -0.5
  %vm228 = vcmp.lt.f32.partialorder %v100, -0.5
  %vm229 = vcmp.lt.f32.partialorder %v101, -0.5
  %vm230 = vcmp.lt.f32.partialorder %v102, -0.5
  %vm231 = vcmp.lt.f32.partialorder %v103, -0.5
  %vm232 = vcmp.lt.f32.partialorder %v104, -0.5
  %vm233 = vcmp.lt.f32.partialorder %v105, -0.5
  %vm234 = vcmp.lt.f32.partialorder %v106, -0.5
  %vm235 = vcmp.lt.f32.partialorder %v107, -0.5
  %vm236 = vcmp.lt.f32.partialorder %v108, -0.5
  %vm237 = vcmp.lt.f32.partialorder %v109, -0.5
  %vm238 = vcmp.lt.f32.partialorder %v110, -0.5
  %vm239 = vcmp.lt.f32.partialorder %v111, -0.5
  %vm240 = vcmp.lt.f32.partialorder %v112, -0.5
  %vm241 = vcmp.lt.f32.partialorder %v113, -0.5
  %vm242 = vcmp.lt.f32.partialorder %v114, -0.5
  %vm243 = vcmp.lt.f32.partialorder %v115, -0.5
  %vm244 = vcmp.lt.f32.partialorder %v116, -0.5
  %vm245 = vcmp.lt.f32.partialorder %v117, -0.5
  %vm246 = vcmp.lt.f32.partialorder %v118, -0.5
  %vm247 = vcmp.lt.f32.partialorder %v119, -0.5
  %vm248 = vcmp.lt.f32.partialorder %v120, -0.5
  %vm249 = vcmp.lt.f32.partialorder %v121, -0.5
  %vm250 = vcmp.lt.f32.partialorder %v122, -0.5
  %vm251 = vcmp.lt.f32.partialorder %v123, -0.5
  %vm252 = vcmp.lt.f32.partialorder %v124, -0.5
  %vm253 = vcmp.lt.f32.partialorder %v125, -0.5
  %vm254 = vcmp.lt.f32.partialorder %v126, -0.5
  %vm255 = vcmp.lt.f32.partialorder %v127, -0.5
  %vm256 = vcmp.lt.f32.partialorder %v128, -0.5
  %vm257 = vcmp.lt.f32.partialorder %v129, -0.5
  %vm258 = vcmp.lt.f32.partialorder %v130, -0.5
  %vm259 = vcmp.lt.f32.partialorder %v131, -0.5
  %vm260 = vcmp.lt.f32.partialorder %v132, -0.5
  %vm261 = vcmp.lt.f32.partialorder %v133, -0.5
  %vm262 = vcmp.lt.f32.partialorder %v134, -0.5
  %vm263 = vcmp.lt.f32.partialorder %v135, -0.5
  %vm264 = vcmp.lt.f32.partialorder %v136, -0.5
  %vm265 = vcmp.lt.f32.partialorder %v137, -0.5
  %vm266 = vcmp.lt.f32.partialorder %v138, -0.5
  %vm267 = vcmp.lt.f32.partialorder %v139, -0.5
  %vm268 = vcmp.lt.f32.partialorder %v140, -0.5
  %vm269 = vcmp.lt.f32.partialorder %v141, -0.5
  %vm270 = vcmp.lt.f32.partialorder %v142, -0.5
  %vm271 = vcmp.lt.f32.partialorder %v143, -0.5
  %vm272 = vcmp.lt.f32.partialorder %v144, -0.5
  %vm273 = vcmp.lt.f32.partialorder %v145, -0.5
  %vm274 = vcmp.lt.f32.partialorder %v146, -0.5
  %vm275 = vcmp.lt.f32.partialorder %v147, -0.5
  %vm276 = vcmp.lt.f32.partialorder %v148, -0.5
  %vm277 = vcmp.lt.f32.partialorder %v149, -0.5
  %v278 = vsel %vm214, -1.0, 0.0
  %v279 = vsel %vm215, -1.0, 0.0
  %v280 = vsel %vm216, -1.0, 0.0
  %v281 = vsel %vm217, -1.0, 0.0
  %v282 = vsel %vm218, -1.0, 0.0
  %v283 = vsel %vm219, -1.0, 0.0
  %v284 = vsel %vm220, -1.0, 0.0
  %v285 = vsel %vm221, -1.0, 0.0
  %v286 = vsel %vm222, -1.0, 0.0
  %v287 = vsel %vm223, -1.0, 0.0
  %v288 = vsel %vm224, -1.0, 0.0
  %v289 = vsel %vm225, -1.0, 0.0
  %v290 = vsel %vm226, -1.0, 0.0
  %v291 = vsel %vm227, -1.0, 0.0
  %v292 = vsel %vm228, -1.0, 0.0
  %v293 = vsel %vm229, -1.0, 0.0
  %v294 = vsel %vm230, -1.0, 0.0
  %v295 = vsel %vm231, -1.0, 0.0
  %v296 = vsel %vm232, -1.0, 0.0
  %v297 = vsel %vm233, -1.0, 0.0
  %v298 = vsel %vm234, -1.0, 0.0
  %v299 = vsel %vm235, -1.0, 0.0
  %v300 = vsel %vm236, -1.0, 0.0
  %v301 = vsel %vm237, -1.0, 0.0
  %v302 = vsel %vm238, -1.0, 0.0
  %v303 = vsel %vm239, -1.0, 0.0
  %v304 = vsel %vm240, -1.0, 0.0
  %v305 = vsel %vm241, -1.0, 0.0
  %v306 = vsel %vm242, -1.0, 0.0
  %v307 = vsel %vm243, -1.0, 0.0
  %v308 = vsel %vm244, -1.0, 0.0
  %v309 = vsel %vm245, -1.0, 0.0
  %v310 = vsel %vm246, -1.0, 0.0
  %v311 = vsel %vm247, -1.0, 0.0
  %v312 = vsel %vm248, -1.0, 0.0
  %v313 = vsel %vm249, -1.0, 0.0
  %v314 = vsel %vm250, -1.0, 0.0
  %v315 = vsel %vm251, -1.0, 0.0
  %v316 = vsel %vm252, -1.0, 0.0
  %v317 = vsel %vm253, -1.0, 0.0
  %v318 = vsel %vm254, -1.0, 0.0
  %v319 = vsel %vm255, -1.0, 0.0
  %v320 = vsel %vm256, -1.0, 0.0
  %v321 = vsel %vm257, -1.0, 0.0
  %v322 = vsel %vm258, -1.0, 0.0
  %v323 = vsel %vm259, -1.0, 0.0
  %v324 = vsel %vm260, -1.0, 0.0
  %v325 = vsel %vm261, -1.0, 0.0
  %v326 = vsel %vm262, -1.0, 0.0
  %v327 = vsel %vm263, -1.0, 0.0
  %v328 = vsel %vm264, -1.0, 0.0
  %v329 = vsel %vm265, -1.0, 0.0
  %v330 = vsel %vm266, -1.0, 0.0
  %v331 = vsel %vm267, -1.0, 0.0
  %v332 = vsel %vm268, -1.0, 0.0
  %v333 = vsel %vm269, -1.0, 0.0
  %v334 = vsel %vm270, -1.0, 0.0
  %v335 = vsel %vm271, -1.0, 0.0
  %v336 = vsel %vm272, -1.0, 0.0
  %v337 = vsel %vm273, -1.0, 0.0
  %v338 = vsel %vm274, -1.0, 0.0
  %v339 = vsel %vm275, -1.0, 0.0
  %v340 = vsel %vm276, -1.0, 0.0
  %v341 = vsel %vm277, -1.0, 0.0
  %v342 = vsel %vm150, 1.0, %v278
  %v343 = vsel %vm151, 1.0, %v279
  %v344 = vsel %vm152, 1.0, %v280
  %v345 = vsel %vm153, 1.0, %v281
  %v346 = vsel %vm154, 1.0, %v282
  %v347 = vsel %vm155, 1.0, %v283
  %v348 = vsel %vm156, 1.0, %v284
  %v349 = vsel %vm157, 1.0, %v285
  %v350 = vsel %vm158, 1.0, %v286
  %v351 = vsel %vm159, 1.0, %v287
  %v352 = vsel %vm160, 1.0, %v288
  %v353 = vsel %vm161, 1.0, %v289
  %v354 = vsel %vm162, 1.0, %v290
  %v355 = vsel %vm163, 1.0, %v291
  %v356 = vsel %vm164, 1.0, %v292
  %v357 = vsel %vm165, 1.0, %v293
  %v358 = vsel %vm166, 1.0, %v294
  %v359 = vsel %vm167, 1.0, %v295
  %v360 = vsel %vm168, 1.0, %v296
  %v361 = vsel %vm169, 1.0, %v297
  %v362 = vsel %vm170, 1.0, %v298
  %v363 = vsel %vm171, 1.0, %v299
  %v364 = vsel %vm172, 1.0, %v300
  %v365 = vsel %vm173, 1.0, %v301
  %v366 = vsel %vm174, 1.0, %v302
  %v367 = vsel %vm175, 1.0, %v303
  %v368 = vsel %vm176, 1.0, %v304
  %v369 = vsel %vm177, 1.0, %v305
  %v370 = vsel %vm178, 1.0, %v306
  %v371 = vsel %vm179, 1.0, %v307
  %v372 = vsel %vm180, 1.0, %v308
  %v373 = vsel %vm181, 1.0, %v309
  %v374 = vsel %vm182, 1.0, %v310
  %v375 = vsel %vm183, 1.0, %v311
  %v376 = vsel %vm184, 1.0, %v312
  %v377 = vsel %vm185, 1.0, %v313
  %v378 = vsel %vm186, 1.0, %v314
  %v379 = vsel %vm187, 1.0, %v315
  %v380 = vsel %vm188, 1.0, %v316
  %v381 = vsel %vm189, 1.0, %v317
  %v382 = vsel %vm190, 1.0, %v318
  %v383 = vsel %vm191, 1.0, %v319
  %v384 = vsel %vm192, 1.0, %v320
  %v385 = vsel %vm193, 1.0, %v321
  %v386 = vsel %vm194, 1.0, %v322
  %v387 = vsel %vm195, 1.0, %v323
  %v388 = vsel %vm196, 1.0, %v324
  %v389 = vsel %vm197, 1.0, %v325
  %v390 = vsel %vm198, 1.0, %v326
  %v391 = vsel %vm199, 1.0, %v327
  %v392 = vsel %vm200, 1.0, %v328
  %v393 = vsel %vm201, 1.0, %v329
  %v394 = vsel %vm202, 1.0, %v330
  %v395 = vsel %vm203, 1.0, %v331
  %v396 = vsel %vm204, 1.0, %v332
  %v397 = vsel %vm205, 1.0, %v333
  %v398 = vsel %vm206, 1.0, %v334
  %v399 = vsel %vm207, 1.0, %v335
  %v400 = vsel %vm208, 1.0, %v336
  %v401 = vsel %vm209, 1.0, %v337
  %v402 = vsel %vm210, 1.0, %v338
  %v403 = vsel %vm211, 1.0, %v339
  %v404 = vsel %vm212, 1.0, %v340
  %v405 = vsel %vm213, 1.0, %v341
  %v406 = vpack.c.bf16 %v343, %v342
  %v407 = vpack.c.bf16 %v345, %v344
  %v408 = vpack.c.bf16 %v347, %v346
  %v409 = vpack.c.bf16 %v349, %v348
  %v410 = vpack.c.bf16 %v351, %v350
  %v411 = vpack.c.bf16 %v353, %v352
  %v412 = vpack.c.bf16 %v355, %v354
  %v413 = vpack.c.bf16 %v357, %v356
  %v414 = vpack.c.bf16 %v359, %v358
  %v415 = vpack.c.bf16 %v361, %v360
  %v416 = vpack.c.bf16 %v363, %v362
  %v417 = vpack.c.bf16 %v365, %v364
  %v418 = vpack.c.bf16 %v367, %v366
  %v419 = vpack.c.bf16 %v369, %v368
  %v420 = vpack.c.bf16 %v371, %v370
  %v421 = vpack.c.bf16 %v373, %v372
  %v422 = vpack.c.bf16 %v375, %v374
  %v423 = vpack.c.bf16 %v377, %v376
  %v424 = vpack.c.bf16 %v379, %v378
  %v425 = vpack.c.bf16 %v381, %v380
  %v426 = vpack.c.bf16 %v383, %v382
  %v427 = vpack.c.bf16 %v385, %v384
  %v428 = vpack.c.bf16 %v387, %v386
  %v429 = vpack.c.bf16 %v389, %v388
  %v430 = vpack.c.bf16 %v391, %v390
  %v431 = vpack.c.bf16 %v393, %v392
  %v432 = vpack.c.bf16 %v395, %v394
  %v433 = vpack.c.bf16 %v397, %v396
  %v434 = vpack.c.bf16 %v399, %v398
  %v435 = vpack.c.bf16 %v401, %v400
  %v436 = vpack.c.bf16 %v403, %v402
  %v437 = vpack.c.bf16 %v405, %v404
  %v438 = vld [vmem:[#allocation2] sm:$0xff]
  %v439 = vld [vmem:[#allocation2 + $0x8] sm:$0xff]
  %v440 = vld [vmem:[#allocation2 + $0x10] sm:$0xff]
  %v441 = vld [vmem:[#allocation2 + $0x18] sm:$0xff]
  %v442 = vld [vmem:[#allocation2 + $0x20] sm:$0xff]
  %v443 = vld [vmem:[#allocation2 + $0x28] sm:$0xff]
  %v444 = vld [vmem:[#allocation2 + $0x30] sm:$0xff]
  %v445 = vld [vmem:[#allocation2 + $0x38] sm:$0xff]
  %v446 = vld [vmem:[#allocation2 + $0x40] sm:$0xff]
  %v447 = vld [vmem:[#allocation2 + $0x48] sm:$0xff]
  %v448 = vld [vmem:[#allocation2 + $0x50] sm:$0xff]
  %v449 = vld [vmem:[#allocation2 + $0x58] sm:$0xff]
  %v450 = vld [vmem:[#allocation2 + $0x60] sm:$0xff]
  %v451 = vld [vmem:[#allocation2 + $0x68] sm:$0xff]
  %v452 = vld [vmem:[#allocation2 + $0x70] sm:$0xff]
  %v453 = vld [vmem:[#allocation2 + $0x78] sm:$0xff]
  %v454 = vld [vmem:[#allocation2 + $0x80] sm:$0xff]
  %v455 = vld [vmem:[#allocation2 + $0x88] sm:$0xff]
  %v456 = vld [vmem:[#allocation2 + $0x90] sm:$0xff]
  %v457 = vld [vmem:[#allocation2 + $0x98] sm:$0xff]
  %v458 = vld [vmem:[#allocation2 + $0xa0] sm:$0xff]
  %v459 = vld [vmem:[#allocation2 + $0xa8] sm:$0xff]
  %v460 = vld [vmem:[#allocation2 + $0xb0] sm:$0xff]
  %v461 = vld [vmem:[#allocation2 + $0xb8] sm:$0xff]
  %v462 = vld [vmem:[#allocation2 + $0xc0] sm:$0xff]
  %v463 = vld [vmem:[#allocation2 + $0xc8] sm:$0xff]
  %v464 = vld [vmem:[#allocation2 + $0xd0] sm:$0xff]
  %v465 = vld [vmem:[#allocation2 + $0xd8] sm:$0xff]
  %v466 = vld [vmem:[#allocation2 + $0xe0] sm:$0xff]
  %v467 = vld [vmem:[#allocation2 + $0xe8] sm:$0xff]
  %v468 = vld [vmem:[#allocation2 + $0xf0] sm:$0xff]
  %v469 = vld [vmem:[#allocation2 + $0xf8] sm:$0xff]
  %v470 = vld [vmem:[#allocation2 + $0x100] sm:$0xff]
  %v471 = vld [vmem:[#allocation2 + $0x108] sm:$0xff]
  %v472 = vld [vmem:[#allocation2 + $0x110] sm:$0xff]
  %v473 = vld [vmem:[#allocation2 + $0x118] sm:$0xff]
  %v474 = vld [vmem:[#allocation2 + $0x120] sm:$0xff]
  %v475 = vld [vmem:[#allocation2 + $0x128] sm:$0xff]
  %v476 = vld [vmem:[#allocation2 + $0x130] sm:$0xff]
  %v477 = vld [vmem:[#allocation2 + $0x138] sm:$0xff]
  %v478 = vld [vmem:[#allocation2 + $0x140] sm:$0xff]
  %v479 = vld [vmem:[#allocation2 + $0x148] sm:$0xff]
  %v480 = vld [vmem:[#allocation2 + $0x150] sm:$0xff]
  %v481 = vld [vmem:[#allocation2 + $0x158] sm:$0xff]
  %v482 = vld [vmem:[#allocation2 + $0x160] sm:$0xff]
  %v483 = vld [vmem:[#allocation2 + $0x168] sm:$0xff]
  %v484 = vld [vmem:[#allocation2 + $0x170] sm:$0xff]
  %v485 = vld [vmem:[#allocation2 + $0x178] sm:$0xff]
  %v486 = vld [vmem:[#allocation2 + $0x180] sm:$0xff]
  %v487 = vld [vmem:[#allocation2 + $0x188] sm:$0xff]
  %v488 = vld [vmem:[#allocation2 + $0x190] sm:$0xff]
  %v489 = vld [vmem:[#allocation2 + $0x198] sm:$0xff]
  %v490 = vld [vmem:[#allocation2 + $0x1a0] sm:$0xff]
  %v491 = vld [vmem:[#allocation2 + $0x1a8] sm:$0xff]
  %v492 = vld [vmem:[#allocation2 + $0x1b0] sm:$0xff]
  %v493 = vld [vmem:[#allocation2 + $0x1b8] sm:$0xff]
  %v494 = vld [vmem:[#allocation2 + $0x1c0] sm:$0xff]
  %v495 = vld [vmem:[#allocation2 + $0x1c8] sm:$0xff]
  %v496 = vld [vmem:[#allocation2 + $0x1d0] sm:$0xff]
  %v497 = vld [vmem:[#allocation2 + $0x1d8] sm:$0xff]
  %v498 = vld [vmem:[#allocation2 + $0x1e0] sm:$0xff]
  %v499 = vld [vmem:[#allocation2 + $0x1e8] sm:$0xff]
  %v500 = vld [vmem:[#allocation2 + $0x1f0] sm:$0xff]
  %v501 = vld [vmem:[#allocation2 + $0x1f8] sm:$0xff]
  %v502 = vld [vmem:[%s1] sm:$0x3]
  %vm503 = vcmask 31744
  %v505 = vsel %vm503, %v406, 0
  %v508 = vsel %vm503, %v407, 0
  %v511 = vsel %vm503, %v408, 0
  %v514 = vsel %vm503, %v409, 0
  %v517 = vsel %vm503, %v410, 0
  %v520 = vsel %vm503, %v411, 0
  %v523 = vsel %vm503, %v412, 0
  %v526 = vsel %vm503, %v413, 0
  %v529 = vsel %vm503, %v414, 0
  %v532 = vsel %vm503, %v415, 0
  %v535 = vsel %vm503, %v416, 0
  %v538 = vsel %vm503, %v417, 0
  %v541 = vsel %vm503, %v418, 0
  %v544 = vsel %vm503, %v419, 0
  %v547 = vsel %vm503, %v420, 0
  %v550 = vsel %vm503, %v421, 0
  %v553 = vsel %vm503, %v422, 0
  %v556 = vsel %vm503, %v423, 0
  %v559 = vsel %vm503, %v424, 0
  %v562 = vsel %vm503, %v425, 0
  %v565 = vsel %vm503, %v426, 0
  %v568 = vsel %vm503, %v427, 0
  %v571 = vsel %vm503, %v428, 0
  %v574 = vsel %vm503, %v429, 0
  %v577 = vsel %vm503, %v430, 0
  %v580 = vsel %vm503, %v431, 0
  %v583 = vsel %vm503, %v432, 0
  %v586 = vsel %vm503, %v433, 0
  %v589 = vsel %vm503, %v434, 0
  %v592 = vsel %vm503, %v435, 0
  %v595 = vsel %vm503, %v436, 0
  %v598 = vsel %vm503, %v437, 0
  %vm600 = vcmask 1041408
  %v602 = vsel %vm600, %v502, 0
  %604 = vmatpush.bf16.msra.mxu0 0
  %605 = vmatpush.bf16.msra.mxu0 0
  %606 = vmatpush.bf16.msra.mxu0 0
  %607 = vmatpush.bf16.msra.mxu0 0
  %608 = vmatpush.bf16.msra.mxu0 0
  %609 = vmatpush.bf16.msra.mxu0 0
  %610 = vmatpush.bf16.msra.mxu0 0
  %611 = vmatpush.bf16.msra.mxu0 %v602
  %612 = vmatmul.bf16.gmra.mxu0 %v505
  %v613 = vpop.f32.mrf.mxu0
  %v614 = vadd.f32 0.0, %v613
  %v615 = vpop.f32.mrf.mxu0
  %v616 = vadd.f32 0.0, %v615
  %617 = vmatmul.bf16.gmra.mxu0 %v508
  %v618 = vpop.f32.mrf.mxu0
  %v619 = vadd.f32 0.0, %v618
  %v620 = vpop.f32.mrf.mxu0
  %v621 = vadd.f32 0.0, %v620
  %622 = vmatmul.bf16.gmra.mxu0 %v511
  %v623 = vpop.f32.mrf.mxu0
  %v624 = vadd.f32 0.0, %v623
  %v625 = vpop.f32.mrf.mxu0
  %v626 = vadd.f32 0.0, %v625
  %627 = vmatmul.bf16.gmra.mxu0 %v514
  %v628 = vpop.f32.mrf.mxu0
  %v629 = vadd.f32 0.0, %v628
  %v630 = vpop.f32.mrf.mxu0
  %v631 = vadd.f32 0.0, %v630
  %632 = vmatmul.bf16.gmra.mxu0 %v517
  %v633 = vpop.f32.mrf.mxu0
  %v634 = vadd.f32 0.0, %v633
  %v635 = vpop.f32.mrf.mxu0
  %v636 = vadd.f32 0.0, %v635
  %637 = vmatmul.bf16.gmra.mxu0 %v520
  %v638 = vpop.f32.mrf.mxu0
  %v639 = vadd.f32 0.0, %v638
  %v640 = vpop.f32.mrf.mxu0
  %v641 = vadd.f32 0.0, %v640
  %642 = vmatmul.bf16.gmra.mxu0 %v523
  %v643 = vpop.f32.mrf.mxu0
  %v644 = vadd.f32 0.0, %v643
  %v645 = vpop.f32.mrf.mxu0
  %v646 = vadd.f32 0.0, %v645
  %647 = vmatmul.bf16.gmra.mxu0 %v526
  %v648 = vpop.f32.mrf.mxu0
  %v649 = vadd.f32 0.0, %v648
  %v650 = vpop.f32.mrf.mxu0
  %v651 = vadd.f32 0.0, %v650
  %652 = vmatmul.bf16.gmra.mxu0 %v529
  %v653 = vpop.f32.mrf.mxu0
  %v654 = vadd.f32 0.0, %v653
  %v655 = vpop.f32.mrf.mxu0
  %v656 = vadd.f32 0.0, %v655
  %657 = vmatmul.bf16.gmra.mxu0 %v532
  %v658 = vpop.f32.mrf.mxu0
  %v659 = vadd.f32 0.0, %v658
  %v660 = vpop.f32.mrf.mxu0
  %v661 = vadd.f32 0.0, %v660
  %662 = vmatmul.bf16.gmra.mxu0 %v535
  %v663 = vpop.f32.mrf.mxu0
  %v664 = vadd.f32 0.0, %v663
  %v665 = vpop.f32.mrf.mxu0
  %v666 = vadd.f32 0.0, %v665
  %667 = vmatmul.bf16.gmra.mxu0 %v538
  %v668 = vpop.f32.mrf.mxu0
  %v669 = vadd.f32 0.0, %v668
  %v670 = vpop.f32.mrf.mxu0
  %v671 = vadd.f32 0.0, %v670
  %672 = vmatmul.bf16.gmra.mxu0 %v541
  %v673 = vpop.f32.mrf.mxu0
  %v674 = vadd.f32 0.0, %v673
  %v675 = vpop.f32.mrf.mxu0
  %v676 = vadd.f32 0.0, %v675
  %677 = vmatmul.bf16.gmra.mxu0 %v544
  %v678 = vpop.f32.mrf.mxu0
  %v679 = vadd.f32 0.0, %v678
  %v680 = vpop.f32.mrf.mxu0
  %v681 = vadd.f32 0.0, %v680
  %682 = vmatmul.bf16.gmra.mxu0 %v547
  %v683 = vpop.f32.mrf.mxu0
  %v684 = vadd.f32 0.0, %v683
  %v685 = vpop.f32.mrf.mxu0
  %v686 = vadd.f32 0.0, %v685
  %687 = vmatmul.bf16.gmra.mxu0 %v550
  %v688 = vpop.f32.mrf.mxu0
  %v689 = vadd.f32 0.0, %v688
  %v690 = vpop.f32.mrf.mxu0
  %v691 = vadd.f32 0.0, %v690
  %692 = vmatmul.bf16.gmra.mxu0 %v553
  %v693 = vpop.f32.mrf.mxu0
  %v694 = vadd.f32 0.0, %v693
  %v695 = vpop.f32.mrf.mxu0
  %v696 = vadd.f32 0.0, %v695
  %697 = vmatmul.bf16.gmra.mxu0 %v556
  %v698 = vpop.f32.mrf.mxu0
  %v699 = vadd.f32 0.0, %v698
  %v700 = vpop.f32.mrf.mxu0
  %v701 = vadd.f32 0.0, %v700
  %702 = vmatmul.bf16.gmra.mxu0 %v559
  %v703 = vpop.f32.mrf.mxu0
  %v704 = vadd.f32 0.0, %v703
  %v705 = vpop.f32.mrf.mxu0
  %v706 = vadd.f32 0.0, %v705
  %707 = vmatmul.bf16.gmra.mxu0 %v562
  %v708 = vpop.f32.mrf.mxu0
  %v709 = vadd.f32 0.0, %v708
  %v710 = vpop.f32.mrf.mxu0
  %v711 = vadd.f32 0.0, %v710
  %712 = vmatmul.bf16.gmra.mxu0 %v565
  %v713 = vpop.f32.mrf.mxu0
  %v714 = vadd.f32 0.0, %v713
  %v715 = vpop.f32.mrf.mxu0
  %v716 = vadd.f32 0.0, %v715
  %717 = vmatmul.bf16.gmra.mxu0 %v568
  %v718 = vpop.f32.mrf.mxu0
  %v719 = vadd.f32 0.0, %v718
  %v720 = vpop.f32.mrf.mxu0
  %v721 = vadd.f32 0.0, %v720
  %722 = vmatmul.bf16.gmra.mxu0 %v571
  %v723 = vpop.f32.mrf.mxu0
  %v724 = vadd.f32 0.0, %v723
  %v725 = vpop.f32.mrf.mxu0
  %v726 = vadd.f32 0.0, %v725
  %727 = vmatmul.bf16.gmra.mxu0 %v574
  %v728 = vpop.f32.mrf.mxu0
  %v729 = vadd.f32 0.0, %v728
  %v730 = vpop.f32.mrf.mxu0
  %v731 = vadd.f32 0.0, %v730
  %732 = vmatmul.bf16.gmra.mxu0 %v577
  %v733 = vpop.f32.mrf.mxu0
  %v734 = vadd.f32 0.0, %v733
  %v735 = vpop.f32.mrf.mxu0
  %v736 = vadd.f32 0.0, %v735
  %737 = vmatmul.bf16.gmra.mxu0 %v580
  %v738 = vpop.f32.mrf.mxu0
  %v739 = vadd.f32 0.0, %v738
  %v740 = vpop.f32.mrf.mxu0
  %v741 = vadd.f32 0.0, %v740
  %742 = vmatmul.bf16.gmra.mxu0 %v583
  %v743 = vpop.f32.mrf.mxu0
  %v744 = vadd.f32 0.0, %v743
  %v745 = vpop.f32.mrf.mxu0
  %v746 = vadd.f32 0.0, %v745
  %747 = vmatmul.bf16.gmra.mxu0 %v586
  %v748 = vpop.f32.mrf.mxu0
  %v749 = vadd.f32 0.0, %v748
  %v750 = vpop.f32.mrf.mxu0
  %v751 = vadd.f32 0.0, %v750
  %752 = vmatmul.bf16.gmra.mxu0 %v589
  %v753 = vpop.f32.mrf.mxu0
  %v754 = vadd.f32 0.0, %v753
  %v755 = vpop.f32.mrf.mxu0
  %v756 = vadd.f32 0.0, %v755
  %757 = vmatmul.bf16.gmra.mxu0 %v592
  %v758 = vpop.f32.mrf.mxu0
  %v759 = vadd.f32 0.0, %v758
  %v760 = vpop.f32.mrf.mxu0
  %v761 = vadd.f32 0.0, %v760
  %762 = vmatmul.bf16.gmra.mxu0 %v595
  %v763 = vpop.f32.mrf.mxu0
  %v764 = vadd.f32 0.0, %v763
  %v765 = vpop.f32.mrf.mxu0
  %v766 = vadd.f32 0.0, %v765
  %767 = vmatmul.bf16.gmra.mxu0 %v598
  %v768 = vpop.f32.mrf.mxu0
  %v769 = vadd.f32 0.0, %v768
  %v770 = vpop.f32.mrf.mxu0
  %v771 = vadd.f32 0.0, %v770
  %772 = vdwg.mxu0
  %v773 = vadd.f32 %v438, %v614
  %v774 = vadd.f32 %v439, %v616
  %v775 = vadd.f32 %v440, %v619
  %v776 = vadd.f32 %v441, %v621
  %v777 = vadd.f32 %v442, %v624
  %v778 = vadd.f32 %v443, %v626
  %v779 = vadd.f32 %v444, %v629
  %v780 = vadd.f32 %v445, %v631
  %v781 = vadd.f32 %v446, %v634
  %v782 = vadd.f32 %v447, %v636
  %v783 = vadd.f32 %v448, %v639
  %v784 = vadd.f32 %v449, %v641
  %v785 = vadd.f32 %v450, %v644
  %v786 = vadd.f32 %v451, %v646
  %v787 = vadd.f32 %v452, %v649
  %v788 = vadd.f32 %v453, %v651
  %v789 = vadd.f32 %v454, %v654
  %v790 = vadd.f32 %v455, %v656
  %v791 = vadd.f32 %v456, %v659
  %v792 = vadd.f32 %v457, %v661
  %v793 = vadd.f32 %v458, %v664
  %v794 = vadd.f32 %v459, %v666
  %v795 = vadd.f32 %v460, %v669
  %v796 = vadd.f32 %v461, %v671
  %v797 = vadd.f32 %v462, %v674
  %v798 = vadd.f32 %v463, %v676
  %v799 = vadd.f32 %v464, %v679
  %v800 = vadd.f32 %v465, %v681
  %v801 = vadd.f32 %v466, %v684
  %v802 = vadd.f32 %v467, %v686
  %v803 = vadd.f32 %v468, %v689
  %v804 = vadd.f32 %v469, %v691
  %v805 = vadd.f32 %v470, %v694
  %v806 = vadd.f32 %v471, %v696
  %v807 = vadd.f32 %v472, %v699
  %v808 = vadd.f32 %v473, %v701
  %v809 = vadd.f32 %v474, %v704
  %v810 = vadd.f32 %v475, %v706
  %v811 = vadd.f32 %v476, %v709
  %v812 = vadd.f32 %v477, %v711
  %v813 = vadd.f32 %v478, %v714
  %v814 = vadd.f32 %v479, %v716
  %v815 = vadd.f32 %v480, %v719
  %v816 = vadd.f32 %v481, %v721
  %v817 = vadd.f32 %v482, %v724
  %v818 = vadd.f32 %v483, %v726
  %v819 = vadd.f32 %v484, %v729
  %v820 = vadd.f32 %v485, %v731
  %v821 = vadd.f32 %v486, %v734
  %v822 = vadd.f32 %v487, %v736
  %v823 = vadd.f32 %v488, %v739
  %v824 = vadd.f32 %v489, %v741
  %v825 = vadd.f32 %v490, %v744
  %v826 = vadd.f32 %v491, %v746
  %v827 = vadd.f32 %v492, %v749
  %v828 = vadd.f32 %v493, %v751
  %v829 = vadd.f32 %v494, %v754
  %v830 = vadd.f32 %v495, %v756
  %v831 = vadd.f32 %v496, %v759
  %v832 = vadd.f32 %v497, %v761
  %v833 = vadd.f32 %v498, %v764
  %v834 = vadd.f32 %v499, %v766
  %v835 = vadd.f32 %v500, %v769
  %v836 = vadd.f32 %v501, %v771
  %837 = vst [vmem:[#allocation2] sm:$0xff] %v773
  %838 = vst [vmem:[#allocation2 + $0x8] sm:$0xff] %v774
  %839 = vst [vmem:[#allocation2 + $0x10] sm:$0xff] %v775
  %840 = vst [vmem:[#allocation2 + $0x18] sm:$0xff] %v776
  %841 = vst [vmem:[#allocation2 + $0x20] sm:$0xff] %v777
  %842 = vst [vmem:[#allocation2 + $0x28] sm:$0xff] %v778
  %843 = vst [vmem:[#allocation2 + $0x30] sm:$0xff] %v779
  %844 = vst [vmem:[#allocation2 + $0x38] sm:$0xff] %v780
  %845 = vst [vmem:[#allocation2 + $0x40] sm:$0xff] %v781
  %846 = vst [vmem:[#allocation2 + $0x48] sm:$0xff] %v782
  %847 = vst [vmem:[#allocation2 + $0x50] sm:$0xff] %v783
  %848 = vst [vmem:[#allocation2 + $0x58] sm:$0xff] %v784
  %849 = vst [vmem:[#allocation2 + $0x60] sm:$0xff] %v785
  %850 = vst [vmem:[#allocation2 + $0x68] sm:$0xff] %v786
  %851 = vst [vmem:[#allocation2 + $0x70] sm:$0xff] %v787
  %852 = vst [vmem:[#allocation2 + $0x78] sm:$0xff] %v788
  %853 = vst [vmem:[#allocation2 + $0x80] sm:$0xff] %v789
  %854 = vst [vmem:[#allocation2 + $0x88] sm:$0xff] %v790
  %855 = vst [vmem:[#allocation2 + $0x90] sm:$0xff] %v791
  %856 = vst [vmem:[#allocation2 + $0x98] sm:$0xff] %v792
  %857 = vst [vmem:[#allocation2 + $0xa0] sm:$0xff] %v793
  %858 = vst [vmem:[#allocation2 + $0xa8] sm:$0xff] %v794
  %859 = vst [vmem:[#allocation2 + $0xb0] sm:$0xff] %v795
  %860 = vst [vmem:[#allocation2 + $0xb8] sm:$0xff] %v796
  %861 = vst [vmem:[#allocation2 + $0xc0] sm:$0xff] %v797
  %862 = vst [vmem:[#allocation2 + $0xc8] sm:$0xff] %v798
  %863 = vst [vmem:[#allocation2 + $0xd0] sm:$0xff] %v799
  %864 = vst [vmem:[#allocation2 + $0xd8] sm:$0xff] %v800
  %865 = vst [vmem:[#allocation2 + $0xe0] sm:$0xff] %v801
  %866 = vst [vmem:[#allocation2 + $0xe8] sm:$0xff] %v802
  %867 = vst [vmem:[#allocation2 + $0xf0] sm:$0xff] %v803
  %868 = vst [vmem:[#allocation2 + $0xf8] sm:$0xff] %v804
  %869 = vst [vmem:[#allocation2 + $0x100] sm:$0xff] %v805
  %870 = vst [vmem:[#allocation2 + $0x108] sm:$0xff] %v806
  %871 = vst [vmem:[#allocation2 + $0x110] sm:$0xff] %v807
  %872 = vst [vmem:[#allocation2 + $0x118] sm:$0xff] %v808
  %873 = vst [vmem:[#allocation2 + $0x120] sm:$0xff] %v809
  %874 = vst [vmem:[#allocation2 + $0x128] sm:$0xff] %v810
  %875 = vst [vmem:[#allocation2 + $0x130] sm:$0xff] %v811
  %876 = vst [vmem:[#allocation2 + $0x138] sm:$0xff] %v812
  %877 = vst [vmem:[#allocation2 + $0x140] sm:$0xff] %v813
  %878 = vst [vmem:[#allocation2 + $0x148] sm:$0xff] %v814
  %879 = vst [vmem:[#allocation2 + $0x150] sm:$0xff] %v815
  %880 = vst [vmem:[#allocation2 + $0x158] sm:$0xff] %v816
  %881 = vst [vmem:[#allocation2 + $0x160] sm:$0xff] %v817
  %882 = vst [vmem:[#allocation2 + $0x168] sm:$0xff] %v818
  %883 = vst [vmem:[#allocation2 + $0x170] sm:$0xff] %v819
  %884 = vst [vmem:[#allocation2 + $0x178] sm:$0xff] %v820
  %885 = vst [vmem:[#allocation2 + $0x180] sm:$0xff] %v821
  %886 = vst [vmem:[#allocation2 + $0x188] sm:$0xff] %v822
  %887 = vst [vmem:[#allocation2 + $0x190] sm:$0xff] %v823
  %888 = vst [vmem:[#allocation2 + $0x198] sm:$0xff] %v824
  %889 = vst [vmem:[#allocation2 + $0x1a0] sm:$0xff] %v825
  %890 = vst [vmem:[#allocation2 + $0x1a8] sm:$0xff] %v826
  %891 = vst [vmem:[#allocation2 + $0x1b0] sm:$0xff] %v827
  %892 = vst [vmem:[#allocation2 + $0x1b8] sm:$0xff] %v828
  %893 = vst [vmem:[#allocation2 + $0x1c0] sm:$0xff] %v829
  %894 = vst [vmem:[#allocation2 + $0x1c8] sm:$0xff] %v830
  %895 = vst [vmem:[#allocation2 + $0x1d0] sm:$0xff] %v831
  %896 = vst [vmem:[#allocation2 + $0x1d8] sm:$0xff] %v832
  %897 = vst [vmem:[#allocation2 + $0x1e0] sm:$0xff] %v833
  %898 = vst [vmem:[#allocation2 + $0x1e8] sm:$0xff] %v834
  %899 = vst [vmem:[#allocation2 + $0x1f0] sm:$0xff] %v835
  %900 = vst [vmem:[#allocation2 + $0x1f8] sm:$0xff] %v836
  // Predicated region
  $region22: #{_lambda_.2} parent=0 // pred_check
    %p901 = pneg %p18
  $region23: #{_lambda_.2} parent=0 // pred_check_branch
    %903 = sbr.rel (%p901) target = $region25
  $region24: #{_lambda_.2} parent=0 // pred_region
    %v904 = vld [vmem:[#allocation2] sm:$0xff]
    %v905 = vld [vmem:[#allocation2 + $0x8] sm:$0xff]
    %v906 = vld [vmem:[#allocation2 + $0x10] sm:$0xff]
    %v907 = vld [vmem:[#allocation2 + $0x18] sm:$0xff]
    %v908 = vld [vmem:[#allocation2 + $0x20] sm:$0xff]
    %v909 = vld [vmem:[#allocation2 + $0x28] sm:$0xff]
    %v910 = vld [vmem:[#allocation2 + $0x30] sm:$0xff]
    %v911 = vld [vmem:[#allocation2 + $0x38] sm:$0xff]
    %v912 = vld [vmem:[#allocation2 + $0x40] sm:$0xff]
    %v913 = vld [vmem:[#allocation2 + $0x48] sm:$0xff]
    %v914 = vld [vmem:[#allocation2 + $0x50] sm:$0xff]
    %v915 = vld [vmem:[#allocation2 + $0x58] sm:$0xff]
    %v916 = vld [vmem:[#allocation2 + $0x60] sm:$0xff]
    %v917 = vld [vmem:[#allocation2 + $0x68] sm:$0xff]
    %v918 = vld [vmem:[#allocation2 + $0x70] sm:$0xff]
    %v919 = vld [vmem:[#allocation2 + $0x78] sm:$0xff]
    %v920 = vld [vmem:[#allocation2 + $0x80] sm:$0xff]
    %v921 = vld [vmem:[#allocation2 + $0x88] sm:$0xff]
    %v922 = vld [vmem:[#allocation2 + $0x90] sm:$0xff]
    %v923 = vld [vmem:[#allocation2 + $0x98] sm:$0xff]
    %v924 = vld [vmem:[#allocation2 + $0xa0] sm:$0xff]
    %v925 = vld [vmem:[#allocation2 + $0xa8] sm:$0xff]
    %v926 = vld [vmem:[#allocation2 + $0xb0] sm:$0xff]
    %v927 = vld [vmem:[#allocation2 + $0xb8] sm:$0xff]
    %v928 = vld [vmem:[#allocation2 + $0xc0] sm:$0xff]
    %v929 = vld [vmem:[#allocation2 + $0xc8] sm:$0xff]
    %v930 = vld [vmem:[#allocation2 + $0xd0] sm:$0xff]
    %v931 = vld [vmem:[#allocation2 + $0xd8] sm:$0xff]
    %v932 = vld [vmem:[#allocation2 + $0xe0] sm:$0xff]
    %v933 = vld [vmem:[#allocation2 + $0xe8] sm:$0xff]
    %v934 = vld [vmem:[#allocation2 + $0xf0] sm:$0xff]
    %v935 = vld [vmem:[#allocation2 + $0xf8] sm:$0xff]
    %v936 = vld [vmem:[#allocation2 + $0x100] sm:$0xff]
    %v937 = vld [vmem:[#allocation2 + $0x108] sm:$0xff]
    %v938 = vld [vmem:[#allocation2 + $0x110] sm:$0xff]
    %v939 = vld [vmem:[#allocation2 + $0x118] sm:$0xff]
    %v940 = vld [vmem:[#allocation2 + $0x120] sm:$0xff]
    %v941 = vld [vmem:[#allocation2 + $0x128] sm:$0xff]
    %v942 = vld [vmem:[#allocation2 + $0x130] sm:$0xff]
    %v943 = vld [vmem:[#allocation2 + $0x138] sm:$0xff]
    %v944 = vld [vmem:[#allocation2 + $0x140] sm:$0xff]
    %v945 = vld [vmem:[#allocation2 + $0x148] sm:$0xff]
    %v946 = vld [vmem:[#allocation2 + $0x150] sm:$0xff]
    %v947 = vld [vmem:[#allocation2 + $0x158] sm:$0xff]
    %v948 = vld [vmem:[#allocation2 + $0x160] sm:$0xff]
    %v949 = vld [vmem:[#allocation2 + $0x168] sm:$0xff]
    %v950 = vld [vmem:[#allocation2 + $0x170] sm:$0xff]
    %v951 = vld [vmem:[#allocation2 + $0x178] sm:$0xff]
    %v952 = vld [vmem:[#allocation2 + $0x180] sm:$0xff]
    %v953 = vld [vmem:[#allocation2 + $0x188] sm:$0xff]
    %v954 = vld [vmem:[#allocation2 + $0x190] sm:$0xff]
    %v955 = vld [vmem:[#allocation2 + $0x198] sm:$0xff]
    %v956 = vld [vmem:[#allocation2 + $0x1a0] sm:$0xff]
    %v957 = vld [vmem:[#allocation2 + $0x1a8] sm:$0xff]
    %v958 = vld [vmem:[#allocation2 + $0x1b0] sm:$0xff]
    %v959 = vld [vmem:[#allocation2 + $0x1b8] sm:$0xff]
    %v960 = vld [vmem:[#allocation2 + $0x1c0] sm:$0xff]
    %v961 = vld [vmem:[#allocation2 + $0x1c8] sm:$0xff]
    %v962 = vld [vmem:[#allocation2 + $0x1d0] sm:$0xff]
    %v963 = vld [vmem:[#allocation2 + $0x1d8] sm:$0xff]
    %v964 = vld [vmem:[#allocation2 + $0x1e0] sm:$0xff]
    %v965 = vld [vmem:[#allocation2 + $0x1e8] sm:$0xff]
    %v966 = vld [vmem:[#allocation2 + $0x1f0] sm:$0xff]
    %v967 = vld [vmem:[#allocation2 + $0x1f8] sm:$0xff]
    %v968 = vld [vmem:[%s2] sm:$0x1]
    %v970 = vperm.slane %v968, 0
    %v972 = vmul.f32 %v904, %v970
    %v973 = vmul.f32 %v905, %v970
    %v974 = vmul.f32 %v906, %v970
    %v975 = vmul.f32 %v907, %v970
    %v976 = vmul.f32 %v908, %v970
    %v977 = vmul.f32 %v909, %v970
    %v978 = vmul.f32 %v910, %v970
    %v979 = vmul.f32 %v911, %v970
    %v980 = vmul.f32 %v912, %v970
    %v981 = vmul.f32 %v913, %v970
    %v982 = vmul.f32 %v914, %v970
    %v983 = vmul.f32 %v915, %v970
    %v984 = vmul.f32 %v916, %v970
    %v985 = vmul.f32 %v917, %v970
    %v986 = vmul.f32 %v918, %v970
    %v987 = vmul.f32 %v919, %v970
    %v988 = vmul.f32 %v920, %v970
    %v989 = vmul.f32 %v921, %v970
    %v990 = vmul.f32 %v922, %v970
    %v991 = vmul.f32 %v923, %v970
    %v992 = vmul.f32 %v924, %v970
    %v993 = vmul.f32 %v925, %v970
    %v994 = vmul.f32 %v926, %v970
    %v995 = vmul.f32 %v927, %v970
    %v996 = vmul.f32 %v928, %v970
    %v997 = vmul.f32 %v929, %v970
    %v998 = vmul.f32 %v930, %v970
    %v999 = vmul.f32 %v931, %v970
    %v1000 = vmul.f32 %v932, %v970
    %v1001 = vmul.f32 %v933, %v970
    %v1002 = vmul.f32 %v934, %v970
    %v1003 = vmul.f32 %v935, %v970
    %v1004 = vmul.f32 %v936, %v970
    %v1005 = vmul.f32 %v937, %v970
    %v1006 = vmul.f32 %v938, %v970
    %v1007 = vmul.f32 %v939, %v970
    %v1008 = vmul.f32 %v940, %v970
    %v1009 = vmul.f32 %v941, %v970
    %v1010 = vmul.f32 %v942, %v970
    %v1011 = vmul.f32 %v943, %v970
    %v1012 = vmul.f32 %v944, %v970
    %v1013 = vmul.f32 %v945, %v970
    %v1014 = vmul.f32 %v946, %v970
    %v1015 = vmul.f32 %v947, %v970
    %v1016 = vmul.f32 %v948, %v970
    %v1017 = vmul.f32 %v949, %v970
    %v1018 = vmul.f32 %v950, %v970
    %v1019 = vmul.f32 %v951, %v970
    %v1020 = vmul.f32 %v952, %v970
    %v1021 = vmul.f32 %v953, %v970
    %v1022 = vmul.f32 %v954, %v970
    %v1023 = vmul.f32 %v955, %v970
    %v1024 = vmul.f32 %v956, %v970
    %v1025 = vmul.f32 %v957, %v970
    %v1026 = vmul.f32 %v958, %v970
    %v1027 = vmul.f32 %v959, %v970
    %v1028 = vmul.f32 %v960, %v970
    %v1029 = vmul.f32 %v961, %v970
    %v1030 = vmul.f32 %v962, %v970
    %v1031 = vmul.f32 %v963, %v970
    %v1032 = vmul.f32 %v964, %v970
    %v1033 = vmul.f32 %v965, %v970
    %v1034 = vmul.f32 %v966, %v970
    %v1035 = vmul.f32 %v967, %v970
    %v1036 = vld [vmem:[%s3] sm:$0x1]
    %v1038 = vperm.slane %v1036, 0
    %v1040 = vadd.f32 %v972, %v1038
    %v1041 = vadd.f32 %v973, %v1038
    %v1042 = vadd.f32 %v974, %v1038
    %v1043 = vadd.f32 %v975, %v1038
    %v1044 = vadd.f32 %v976, %v1038
    %v1045 = vadd.f32 %v977, %v1038
    %v1046 = vadd.f32 %v978, %v1038
    %v1047 = vadd.f32 %v979, %v1038
    %v1048 = vadd.f32 %v980, %v1038
    %v1049 = vadd.f32 %v981, %v1038
    %v1050 = vadd.f32 %v982, %v1038
    %v1051 = vadd.f32 %v983, %v1038
    %v1052 = vadd.f32 %v984, %v1038
    %v1053 = vadd.f32 %v985, %v1038
    %v1054 = vadd.f32 %v986, %v1038
    %v1055 = vadd.f32 %v987, %v1038
    %v1056 = vadd.f32 %v988, %v1038
    %v1057 = vadd.f32 %v989, %v1038
    %v1058 = vadd.f32 %v990, %v1038
    %v1059 = vadd.f32 %v991, %v1038
    %v1060 = vadd.f32 %v992, %v1038
    %v1061 = vadd.f32 %v993, %v1038
    %v1062 = vadd.f32 %v994, %v1038
    %v1063 = vadd.f32 %v995, %v1038
    %v1064 = vadd.f32 %v996, %v1038
    %v1065 = vadd.f32 %v997, %v1038
    %v1066 = vadd.f32 %v998, %v1038
    %v1067 = vadd.f32 %v999, %v1038
    %v1068 = vadd.f32 %v1000, %v1038
    %v1069 = vadd.f32 %v1001, %v1038
    %v1070 = vadd.f32 %v1002, %v1038
    %v1071 = vadd.f32 %v1003, %v1038
    %v1072 = vadd.f32 %v1004, %v1038
    %v1073 = vadd.f32 %v1005, %v1038
    %v1074 = vadd.f32 %v1006, %v1038
    %v1075 = vadd.f32 %v1007, %v1038
    %v1076 = vadd.f32 %v1008, %v1038
    %v1077 = vadd.f32 %v1009, %v1038
    %v1078 = vadd.f32 %v1010, %v1038
    %v1079 = vadd.f32 %v1011, %v1038
    %v1080 = vadd.f32 %v1012, %v1038
    %v1081 = vadd.f32 %v1013, %v1038
    %v1082 = vadd.f32 %v1014, %v1038
    %v1083 = vadd.f32 %v1015, %v1038
    %v1084 = vadd.f32 %v1016, %v1038
    %v1085 = vadd.f32 %v1017, %v1038
    %v1086 = vadd.f32 %v1018, %v1038
    %v1087 = vadd.f32 %v1019, %v1038
    %v1088 = vadd.f32 %v1020, %v1038
    %v1089 = vadd.f32 %v1021, %v1038
    %v1090 = vadd.f32 %v1022, %v1038
    %v1091 = vadd.f32 %v1023, %v1038
    %v1092 = vadd.f32 %v1024, %v1038
    %v1093 = vadd.f32 %v1025, %v1038
    %v1094 = vadd.f32 %v1026, %v1038
    %v1095 = vadd.f32 %v1027, %v1038
    %v1096 = vadd.f32 %v1028, %v1038
    %v1097 = vadd.f32 %v1029, %v1038
    %v1098 = vadd.f32 %v1030, %v1038
    %v1099 = vadd.f32 %v1031, %v1038
    %v1100 = vadd.f32 %v1032, %v1038
    %v1101 = vadd.f32 %v1033, %v1038
    %v1102 = vadd.f32 %v1034, %v1038
    %v1103 = vadd.f32 %v1035, %v1038
    %v1104 = vmax.f32 %v1040, 0.0
    %v1105 = vmax.f32 %v1041, 0.0
    %v1106 = vmax.f32 %v1042, 0.0
    %v1107 = vmax.f32 %v1043, 0.0
    %v1108 = vmax.f32 %v1044, 0.0
    %v1109 = vmax.f32 %v1045, 0.0
    %v1110 = vmax.f32 %v1046, 0.0
    %v1111 = vmax.f32 %v1047, 0.0
    %v1112 = vmax.f32 %v1048, 0.0
    %v1113 = vmax.f32 %v1049, 0.0
    %v1114 = vmax.f32 %v1050, 0.0
    %v1115 = vmax.f32 %v1051, 0.0
    %v1116 = vmax.f32 %v1052, 0.0
    %v1117 = vmax.f32 %v1053, 0.0
    %v1118 = vmax.f32 %v1054, 0.0
    %v1119 = vmax.f32 %v1055, 0.0
    %v1120 = vmax.f32 %v1056, 0.0
    %v1121 = vmax.f32 %v1057, 0.0
    %v1122 = vmax.f32 %v1058, 0.0
    %v1123 = vmax.f32 %v1059, 0.0
    %v1124 = vmax.f32 %v1060, 0.0
    %v1125 = vmax.f32 %v1061, 0.0
    %v1126 = vmax.f32 %v1062, 0.0
    %v1127 = vmax.f32 %v1063, 0.0
    %v1128 = vmax.f32 %v1064, 0.0
    %v1129 = vmax.f32 %v1065, 0.0
    %v1130 = vmax.f32 %v1066, 0.0
    %v1131 = vmax.f32 %v1067, 0.0
    %v1132 = vmax.f32 %v1068, 0.0
    %v1133 = vmax.f32 %v1069, 0.0
    %v1134 = vmax.f32 %v1070, 0.0
    %v1135 = vmax.f32 %v1071, 0.0
    %v1136 = vmax.f32 %v1072, 0.0
    %v1137 = vmax.f32 %v1073, 0.0
    %v1138 = vmax.f32 %v1074, 0.0
    %v1139 = vmax.f32 %v1075, 0.0
    %v1140 = vmax.f32 %v1076, 0.0
    %v1141 = vmax.f32 %v1077, 0.0
    %v1142 = vmax.f32 %v1078, 0.0
    %v1143 = vmax.f32 %v1079, 0.0
    %v1144 = vmax.f32 %v1080, 0.0
    %v1145 = vmax.f32 %v1081, 0.0
    %v1146 = vmax.f32 %v1082, 0.0
    %v1147 = vmax.f32 %v1083, 0.0
    %v1148 = vmax.f32 %v1084, 0.0
    %v1149 = vmax.f32 %v1085, 0.0
    %v1150 = vmax.f32 %v1086, 0.0
    %v1151 = vmax.f32 %v1087, 0.0
    %v1152 = vmax.f32 %v1088, 0.0
    %v1153 = vmax.f32 %v1089, 0.0
    %v1154 = vmax.f32 %v1090, 0.0
    %v1155 = vmax.f32 %v1091, 0.0
    %v1156 = vmax.f32 %v1092, 0.0
    %v1157 = vmax.f32 %v1093, 0.0
    %v1158 = vmax.f32 %v1094, 0.0
    %v1159 = vmax.f32 %v1095, 0.0
    %v1160 = vmax.f32 %v1096, 0.0
    %v1161 = vmax.f32 %v1097, 0.0
    %v1162 = vmax.f32 %v1098, 0.0
    %v1163 = vmax.f32 %v1099, 0.0
    %v1164 = vmax.f32 %v1100, 0.0
    %v1165 = vmax.f32 %v1101, 0.0
    %v1166 = vmax.f32 %v1102, 0.0
    %v1167 = vmax.f32 %v1103, 0.0
    %1168 = vst [vmem:[%s4] sm:$0xff] %v1104
    %1169 = vst [vmem:[%s4 + $0x8] sm:$0xff] %v1105
    %1170 = vst [vmem:[%s4 + $0x10] sm:$0xff] %v1106
    %1171 = vst [vmem:[%s4 + $0x18] sm:$0xff] %v1107
    %1172 = vst [vmem:[%s4 + $0x20] sm:$0xff] %v1108
    %1173 = vst [vmem:[%s4 + $0x28] sm:$0xff] %v1109
    %1174 = vst [vmem:[%s4 + $0x30] sm:$0xff] %v1110
    %1175 = vst [vmem:[%s4 + $0x38] sm:$0xff] %v1111
    %1176 = vst [vmem:[%s4 + $0x40] sm:$0xff] %v1112
    %1177 = vst [vmem:[%s4 + $0x48] sm:$0xff] %v1113
    %1178 = vst [vmem:[%s4 + $0x50] sm:$0xff] %v1114
    %1179 = vst [vmem:[%s4 + $0x58] sm:$0xff] %v1115
    %1180 = vst [vmem:[%s4 + $0x60] sm:$0xff] %v1116
    %1181 = vst [vmem:[%s4 + $0x68] sm:$0xff] %v1117
    %1182 = vst [vmem:[%s4 + $0x70] sm:$0xff] %v1118
    %1183 = vst [vmem:[%s4 + $0x78] sm:$0xff] %v1119
    %1184 = vst [vmem:[%s4 + $0x80] sm:$0xff] %v1120
    %1185 = vst [vmem:[%s4 + $0x88] sm:$0xff] %v1121
    %1186 = vst [vmem:[%s4 + $0x90] sm:$0xff] %v1122
    %1187 = vst [vmem:[%s4 + $0x98] sm:$0xff] %v1123
    %1188 = vst [vmem:[%s4 + $0xa0] sm:$0xff] %v1124
    %1189 = vst [vmem:[%s4 + $0xa8] sm:$0xff] %v1125
    %1190 = vst [vmem:[%s4 + $0xb0] sm:$0xff] %v1126
    %1191 = vst [vmem:[%s4 + $0xb8] sm:$0xff] %v1127
    %1192 = vst [vmem:[%s4 + $0xc0] sm:$0xff] %v1128
    %1193 = vst [vmem:[%s4 + $0xc8] sm:$0xff] %v1129
    %1194 = vst [vmem:[%s4 + $0xd0] sm:$0xff] %v1130
    %1195 = vst [vmem:[%s4 + $0xd8] sm:$0xff] %v1131
    %1196 = vst [vmem:[%s4 + $0xe0] sm:$0xff] %v1132
    %1197 = vst [vmem:[%s4 + $0xe8] sm:$0xff] %v1133
    %1198 = vst [vmem:[%s4 + $0xf0] sm:$0xff] %v1134
    %1199 = vst [vmem:[%s4 + $0xf8] sm:$0xff] %v1135
    %1200 = vst [vmem:[%s4 + $0x100] sm:$0xff] %v1136
    %1201 = vst [vmem:[%s4 + $0x108] sm:$0xff] %v1137
    %1202 = vst [vmem:[%s4 + $0x110] sm:$0xff] %v1138
    %1203 = vst [vmem:[%s4 + $0x118] sm:$0xff] %v1139
    %1204 = vst [vmem:[%s4 + $0x120] sm:$0xff] %v1140
    %1205 = vst [vmem:[%s4 + $0x128] sm:$0xff] %v1141
    %1206 = vst [vmem:[%s4 + $0x130] sm:$0xff] %v1142
    %1207 = vst [vmem:[%s4 + $0x138] sm:$0xff] %v1143
    %1208 = vst [vmem:[%s4 + $0x140] sm:$0xff] %v1144
    %1209 = vst [vmem:[%s4 + $0x148] sm:$0xff] %v1145
    %1210 = vst [vmem:[%s4 + $0x150] sm:$0xff] %v1146
    %1211 = vst [vmem:[%s4 + $0x158] sm:$0xff] %v1147
    %1212 = vst [vmem:[%s4 + $0x160] sm:$0xff] %v1148
    %1213 = vst [vmem:[%s4 + $0x168] sm:$0xff] %v1149
    %1214 = vst [vmem:[%s4 + $0x170] sm:$0xff] %v1150
    %1215 = vst [vmem:[%s4 + $0x178] sm:$0xff] %v1151
    %1216 = vst [vmem:[%s4 + $0x180] sm:$0xff] %v1152
    %1217 = vst [vmem:[%s4 + $0x188] sm:$0xff] %v1153
    %1218 = vst [vmem:[%s4 + $0x190] sm:$0xff] %v1154
    %1219 = vst [vmem:[%s4 + $0x198] sm:$0xff] %v1155
    %1220 = vst [vmem:[%s4 + $0x1a0] sm:$0xff] %v1156
    %1221 = vst [vmem:[%s4 + $0x1a8] sm:$0xff] %v1157
    %1222 = vst [vmem:[%s4 + $0x1b0] sm:$0xff] %v1158
    %1223 = vst [vmem:[%s4 + $0x1b8] sm:$0xff] %v1159
    %1224 = vst [vmem:[%s4 + $0x1c0] sm:$0xff] %v1160
    %1225 = vst [vmem:[%s4 + $0x1c8] sm:$0xff] %v1161
    %1226 = vst [vmem:[%s4 + $0x1d0] sm:$0xff] %v1162
    %1227 = vst [vmem:[%s4 + $0x1d8] sm:$0xff] %v1163
    %1228 = vst [vmem:[%s4 + $0x1e0] sm:$0xff] %v1164
    %1229 = vst [vmem:[%s4 + $0x1e8] sm:$0xff] %v1165
    %1230 = vst [vmem:[%s4 + $0x1f0] sm:$0xff] %v1166
    %1231 = vst [vmem:[%s4 + $0x1f8] sm:$0xff] %v1167
  $region25: #{_lambda_.2} parent=0 // pred_fallthru
    _
  // Predicated region
  $region26: #{_lambda_.2} parent=0 // pred_check
    _
  $region27: #{_lambda_.2} parent=0 // pred_check_branch
    %1233 = sbr.rel (0) target = $region29
  $region28: #{_lambda_.2} parent=0 // pred_region
    _
  $region29: #{_lambda_.2} parent=0 // pred_fallthru
    _
  // Predicated region
  $region30: #{_lambda_.2} parent=0 // pred_check
    _
  $region31: #{_lambda_.2} parent=0 // pred_check_branch
    %1235 = sbr.rel (0) target = $region33
  $region32: #{_lambda_.2} parent=0 // pred_region
    _
  $region33: #{_lambda_.2} parent=0 // pred_fallthru
    _

// kernel: _lambda_.3
$region0: #{_lambda_.3}
  #allocation0 [shape = 'u32[]', space=smem, size = 0x4, offset = 0x4, fixed_abs, tag = 'smem constant byte address 0x4 - core index']
  #allocation1 [shape = 'u32[72,128]{1,0:T(1,128)}', space=vmem, size = 0x9000, scoped, tag = 'internal scratch']
  %s0 = inlined_call_operand.vmem [shape: f32[2,8,8,128], index: 0, kind: input, shape index: {}]
  %s1 = inlined_call_operand.vmem [shape: f32[2,8,9,128], index: 1, kind: input, shape index: {}]
  %s2 = inlined_call_operand.vmem [shape: f32[2,9,8,128], index: 2, kind: input, shape index: {}]
  %s3 = inlined_call_operand.vmem [shape: f32[2,9,9,128], index: 3, kind: input, shape index: {}]
  %s4 = inlined_call_operand.vmem [shape: bf16[1152,128], index: 4, kind: input, shape index: {}]
  %s5 = inlined_call_operand.vmem [shape: f32[1,128], index: 5, kind: input, shape index: {}]
  %s6 = inlined_call_operand.vmem [shape: f32[1,128], index: 6, kind: input, shape index: {}]
  %s7 = inlined_call_operand.vmem [shape: bf16[128,128], index: 7, kind: input, shape index: {}]
  %s8 = inlined_call_operand.vmem [shape: f32[1,128], index: 8, kind: input, shape index: {}]
  %s9 = inlined_call_operand.vmem [shape: f32[1,128], index: 9, kind: input, shape index: {}]
  %s10 = inlined_call_operand.vmem [shape: f32[2,64,128], index: 10, kind: input, shape index: {}]
  %s11 = inlined_call_operand.vmem [shape: f32[2,64,128], index: 11, kind: output, shape index: {}]
  %s12 = sld [smem:[#allocation0]]
  $region77: #{_lambda_.3} parent=0
    _
  %s14 = ssub.s32 1, %s12
  %s15 = scalar_select 0, %s14, %s12
  loop: start=0, step=1, limit=4
  $region2: #{_lambda_.3} parent=0 // loop_pre_header
    _
  $region3: #{_lambda_.3} parent=0 // loop_header
    %s17 = sphi 0, %s21
    %p18 = scmp.ge.s32.totalorder %s17, 4
    %s27 = sphi 0, %s29
    %s30 = sphi 0, %s27
    %s31 = sphi 0, %s30
    %s47 = sphi 0, %s31
    %s53 = sphi 0, %s55
    %s56 = sphi 0, %s53
    %s57 = sphi 0, %s56
    %s73 = sphi 0, %s57
    %s79 = sphi 0, %s81
    %s82 = sphi 0, %s79
    %s83 = sphi 0, %s82
    %s99 = sphi 0, %s83
    %s105 = sphi 0, %s107
    %s108 = sphi 0, %s105
    %s109 = sphi 0, %s108
    %s125 = sphi 0, %s109
    %s129 = sphi 0, %s129
    %s131 = sphi 0, %s129
    %s132 = sphi 0, %s131
    %s146 = sphi 0, %s132
    %s150 = sphi 0, %s150
    %s152 = sphi 0, %s150
    %s153 = sphi 0, %s152
    %s167 = sphi 0, %s153
    %s171 = sphi 0, %s171
    %s173 = sphi 0, %s171
    %s174 = sphi 0, %s173
    %s188 = sphi 0, %s174
    %s192 = sphi 0, %s192
    %s194 = sphi 0, %s192
    %s195 = sphi 0, %s194
    %s209 = sphi 0, %s195
    %s213 = sphi 0, %s213
    %s215 = sphi 0, %s213
    %s216 = sphi 0, %s215
    %s230 = sphi 0, %s216
    %s234 = sphi 0, %s234
    %s236 = sphi 0, %s234
    %s237 = sphi 0, %s236
    %s251 = sphi 0, %s237
    %s257 = sphi 0, %s259
    %s260 = sphi 0, %s257
    %s261 = sphi 0, %s260
    %s277 = sphi 0, %s261
    %s283 = sphi 0, %s285
    %s286 = sphi 0, %s283
    %s287 = sphi 0, %s286
    %s303 = sphi 0, %s287
  $region4: #{_lambda_.3} parent=0 // loop_header_branch
    %20 = sbr.rel (%p18) target = $region8
  $region5: #{_lambda_.3} parent=0 // loop_body
    %s22 = ssub.s32 %s17, 1
    %s23 = ssub.s32 %s17, 2
    %s24 = sadd.s32 %s17, 1
    %s25 = ssub.s32 %s17, %s24
    %p26 = scmp.eq.s32.totalorder %s25, 0
    %s28 = sadd.s32 %s27, 1
    %s29 = scalar_select %p26, %s27, %s28
    %p32 = pneg %p26
    %p33 = scmp.eq.s32.totalorder %s17, 1
    %p34 = por %p32, %p33
    %p35 = scmp.ne.s32.totalorder %s27, %s30
    %p36 = scmp.eq.s32.totalorder %s17, 0
    %p37 = por %p35, %p36
    %p38 = scmp.ne.s32.totalorder %s27, %s30
    %p39 = scmp.eq.s32.totalorder %s22, 1
    %p40 = por %p38, %p39
    %p41 = scmp.ne.s32.totalorder %s30, %s31
    %p42 = scmp.eq.s32.totalorder %s22, 0
    %p43 = por %p41, %p42
    %p44 = scmp.ne.s32.totalorder %s30, %s31
    %p45 = scmp.eq.s32.totalorder %s23, 1
    %p46 = por %p44, %p45
    %p48 = scmp.ne.s32.totalorder %s31, %s47
    %p49 = scmp.eq.s32.totalorder %s23, 0
    %p50 = por %p48, %p49
    %s51 = ssub.s32 %s17, %s24
    %p52 = scmp.eq.s32.totalorder %s51, 0
    %s54 = sadd.s32 %s53, 1
    %s55 = scalar_select %p52, %s53, %s54
    %p58 = pneg %p52
    %p59 = scmp.eq.s32.totalorder %s17, 1
    %p60 = por %p58, %p59
    %p61 = scmp.ne.s32.totalorder %s53, %s56
    %p62 = scmp.eq.s32.totalorder %s17, 0
    %p63 = por %p61, %p62
    %p64 = scmp.ne.s32.totalorder %s53, %s56
    %p65 = scmp.eq.s32.totalorder %s22, 1
    %p66 = por %p64, %p65
    %p67 = scmp.ne.s32.totalorder %s56, %s57
    %p68 = scmp.eq.s32.totalorder %s22, 0
    %p69 = por %p67, %p68
    %p70 = scmp.ne.s32.totalorder %s56, %s57
    %p71 = scmp.eq.s32.totalorder %s23, 1
    %p72 = por %p70, %p71
    %p74 = scmp.ne.s32.totalorder %s57, %s73
    %p75 = scmp.eq.s32.totalorder %s23, 0
    %p76 = por %p74, %p75
    %s77 = ssub.s32 %s17, %s24
    %p78 = scmp.eq.s32.totalorder %s77, 0
    %s80 = sadd.s32 %s79, 1
    %s81 = scalar_select %p78, %s79, %s80
    %p84 = pneg %p78
    %p85 = scmp.eq.s32.totalorder %s17, 1
    %p86 = por %p84, %p85
    %p87 = scmp.ne.s32.totalorder %s79, %s82
    %p88 = scmp.eq.s32.totalorder %s17, 0
    %p89 = por %p87, %p88
    %p90 = scmp.ne.s32.totalorder %s79, %s82
    %p91 = scmp.eq.s32.totalorder %s22, 1
    %p92 = por %p90, %p91
    %p93 = scmp.ne.s32.totalorder %s82, %s83
    %p94 = scmp.eq.s32.totalorder %s22, 0
    %p95 = por %p93, %p94
    %p96 = scmp.ne.s32.totalorder %s82, %s83
    %p97 = scmp.eq.s32.totalorder %s23, 1
    %p98 = por %p96, %p97
    %p100 = scmp.ne.s32.totalorder %s83, %s99
    %p101 = scmp.eq.s32.totalorder %s23, 0
    %p102 = por %p100, %p101
    %s103 = ssub.s32 %s17, %s24
    %p104 = scmp.eq.s32.totalorder %s103, 0
    %s106 = sadd.s32 %s105, 1
    %s107 = scalar_select %p104, %s105, %s106
    %p110 = pneg %p104
    %p111 = scmp.eq.s32.totalorder %s17, 1
    %p112 = por %p110, %p111
    %p113 = scmp.ne.s32.totalorder %s105, %s108
    %p114 = scmp.eq.s32.totalorder %s17, 0
    %p115 = por %p113, %p114
    %p116 = scmp.ne.s32.totalorder %s105, %s108
    %p117 = scmp.eq.s32.totalorder %s22, 1
    %p118 = por %p116, %p117
    %p119 = scmp.ne.s32.totalorder %s108, %s109
    %p120 = scmp.eq.s32.totalorder %s22, 0
    %p121 = por %p119, %p120
    %p122 = scmp.ne.s32.totalorder %s108, %s109
    %p123 = scmp.eq.s32.totalorder %s23, 1
    %p124 = por %p122, %p123
    %p126 = scmp.ne.s32.totalorder %s109, %s125
    %p127 = scmp.eq.s32.totalorder %s23, 0
    %p128 = por %p126, %p127
    %s130 = sadd.s32 %s129, 1
    %p133 = scmp.eq.s32.totalorder %s17, 1
    %p134 = scmp.ne.s32.totalorder %s129, %s131
    %p135 = scmp.eq.s32.totalorder %s17, 0
    %p136 = por %p134, %p135
    %p137 = scmp.ne.s32.totalorder %s129, %s131
    %p138 = scmp.eq.s32.totalorder %s22, 1
    %p139 = por %p137, %p138
    %p140 = scmp.ne.s32.totalorder %s131, %s132
    %p141 = scmp.eq.s32.totalorder %s22, 0
    %p142 = por %p140, %p141
    %p143 = scmp.ne.s32.totalorder %s131, %s132
    %p144 = scmp.eq.s32.totalorder %s23, 1
    %p145 = por %p143, %p144
    %p147 = scmp.ne.s32.totalorder %s132, %s146
    %p148 = scmp.eq.s32.totalorder %s23, 0
    %p149 = por %p147, %p148
    %s151 = sadd.s32 %s150, 1
    %p154 = scmp.eq.s32.totalorder %s17, 1
    %p155 = scmp.ne.s32.totalorder %s150, %s152
    %p156 = scmp.eq.s32.totalorder %s17, 0
    %p157 = por %p155, %p156
    %p158 = scmp.ne.s32.totalorder %s150, %s152
    %p159 = scmp.eq.s32.totalorder %s22, 1
    %p160 = por %p158, %p159
    %p161 = scmp.ne.s32.totalorder %s152, %s153
    %p162 = scmp.eq.s32.totalorder %s22, 0
    %p163 = por %p161, %p162
    %p164 = scmp.ne.s32.totalorder %s152, %s153
    %p165 = scmp.eq.s32.totalorder %s23, 1
    %p166 = por %p164, %p165
    %p168 = scmp.ne.s32.totalorder %s153, %s167
    %p169 = scmp.eq.s32.totalorder %s23, 0
    %p170 = por %p168, %p169
    %s172 = sadd.s32 %s171, 1
    %p175 = scmp.eq.s32.totalorder %s17, 1
    %p176 = scmp.ne.s32.totalorder %s171, %s173
    %p177 = scmp.eq.s32.totalorder %s17, 0
    %p178 = por %p176, %p177
    %p179 = scmp.ne.s32.totalorder %s171, %s173
    %p180 = scmp.eq.s32.totalorder %s22, 1
    %p181 = por %p179, %p180
    %p182 = scmp.ne.s32.totalorder %s173, %s174
    %p183 = scmp.eq.s32.totalorder %s22, 0
    %p184 = por %p182, %p183
    %p185 = scmp.ne.s32.totalorder %s173, %s174
    %p186 = scmp.eq.s32.totalorder %s23, 1
    %p187 = por %p185, %p186
    %p189 = scmp.ne.s32.totalorder %s174, %s188
    %p190 = scmp.eq.s32.totalorder %s23, 0
    %p191 = por %p189, %p190
    %s193 = sadd.s32 %s192, 1
    %p196 = scmp.eq.s32.totalorder %s17, 1
    %p197 = scmp.ne.s32.totalorder %s192, %s194
    %p198 = scmp.eq.s32.totalorder %s17, 0
    %p199 = por %p197, %p198
    %p200 = scmp.ne.s32.totalorder %s192, %s194
    %p201 = scmp.eq.s32.totalorder %s22, 1
    %p202 = por %p200, %p201
    %p203 = scmp.ne.s32.totalorder %s194, %s195
    %p204 = scmp.eq.s32.totalorder %s22, 0
    %p205 = por %p203, %p204
    %p206 = scmp.ne.s32.totalorder %s194, %s195
    %p207 = scmp.eq.s32.totalorder %s23, 1
    %p208 = por %p206, %p207
    %p210 = scmp.ne.s32.totalorder %s195, %s209
    %p211 = scmp.eq.s32.totalorder %s23, 0
    %p212 = por %p210, %p211
    %s214 = sadd.s32 %s213, 1
    %p217 = scmp.eq.s32.totalorder %s17, 1
    %p218 = scmp.ne.s32.totalorder %s213, %s215
    %p219 = scmp.eq.s32.totalorder %s17, 0
    %p220 = por %p218, %p219
    %p221 = scmp.ne.s32.totalorder %s213, %s215
    %p222 = scmp.eq.s32.totalorder %s22, 1
    %p223 = por %p221, %p222
    %p224 = scmp.ne.s32.totalorder %s215, %s216
    %p225 = scmp.eq.s32.totalorder %s22, 0
    %p226 = por %p224, %p225
    %p227 = scmp.ne.s32.totalorder %s215, %s216
    %p228 = scmp.eq.s32.totalorder %s23, 1
    %p229 = por %p227, %p228
    %p231 = scmp.ne.s32.totalorder %s216, %s230
    %p232 = scmp.eq.s32.totalorder %s23, 0
    %p233 = por %p231, %p232
    %s235 = sadd.s32 %s234, 1
    %p238 = scmp.eq.s32.totalorder %s17, 1
    %p239 = scmp.ne.s32.totalorder %s234, %s236
    %p240 = scmp.eq.s32.totalorder %s17, 0
    %p241 = por %p239, %p240
    %p242 = scmp.ne.s32.totalorder %s234, %s236
    %p243 = scmp.eq.s32.totalorder %s22, 1
    %p244 = por %p242, %p243
    %p245 = scmp.ne.s32.totalorder %s236, %s237
    %p246 = scmp.eq.s32.totalorder %s22, 0
    %p247 = por %p245, %p246
    %p248 = scmp.ne.s32.totalorder %s236, %s237
    %p249 = scmp.eq.s32.totalorder %s23, 1
    %p250 = por %p248, %p249
    %p252 = scmp.ne.s32.totalorder %s237, %s251
    %p253 = scmp.eq.s32.totalorder %s23, 0
    %p254 = por %p252, %p253
    %s255 = ssub.s32 %s17, %s24
    %p256 = scmp.eq.s32.totalorder %s255, 0
    %s258 = sadd.s32 %s257, 1
    %s259 = scalar_select %p256, %s257, %s258
    %p262 = pneg %p256
    %p263 = scmp.eq.s32.totalorder %s17, 1
    %p264 = por %p262, %p263
    %p265 = scmp.ne.s32.totalorder %s257, %s260
    %p266 = scmp.eq.s32.totalorder %s17, 0
    %p267 = por %p265, %p266
    %p268 = scmp.ne.s32.totalorder %s257, %s260
    %p269 = scmp.eq.s32.totalorder %s22, 1
    %p270 = por %p268, %p269
    %p271 = scmp.ne.s32.totalorder %s260, %s261
    %p272 = scmp.eq.s32.totalorder %s22, 0
    %p273 = por %p271, %p272
    %p274 = scmp.ne.s32.totalorder %s260, %s261
    %p275 = scmp.eq.s32.totalorder %s23, 1
    %p276 = por %p274, %p275
    %p278 = scmp.ne.s32.totalorder %s261, %s277
    %p279 = scmp.eq.s32.totalorder %s23, 0
    %p280 = por %p278, %p279
    %s281 = ssub.s32 %s17, %s24
    %p282 = scmp.eq.s32.totalorder %s281, 0
    %s284 = sadd.s32 %s283, 1
    %s285 = scalar_select %p282, %s283, %s284
    %p288 = pneg %p282
    %p289 = scmp.eq.s32.totalorder %s17, 1
    %p290 = por %p288, %p289
    %p291 = scmp.ne.s32.totalorder %s283, %s286
    %p292 = scmp.eq.s32.totalorder %s17, 0
    %p293 = por %p291, %p292
    %p294 = scmp.ne.s32.totalorder %s283, %s286
    %p295 = scmp.eq.s32.totalorder %s22, 1
    %p296 = por %p294, %p295
    %p297 = scmp.ne.s32.totalorder %s286, %s287
    %p298 = scmp.eq.s32.totalorder %s22, 0
    %p299 = por %p297, %p298
    %p300 = scmp.ne.s32.totalorder %s286, %s287
    %p301 = scmp.eq.s32.totalorder %s23, 1
    %p302 = por %p300, %p301
    %p304 = scmp.ne.s32.totalorder %s287, %s303
    %p305 = scmp.eq.s32.totalorder %s23, 0
    %p306 = por %p304, %p305
    %p307 = scmp.le.s32.totalorder 1, %s17
    %p308 = scmp.lt.s32.totalorder %s17, 3
    %p309 = pnand %p307, %p308
    %p310 = pneg %p309
    // Predicated region
    $region9: #{_lambda_.3} parent=5 // pred_check
      _
    $region10: #{_lambda_.3} parent=5 // pred_check_branch
      %312 = sbr.rel (%p309) target = $region12
    $region11: #{_lambda_.3} parent=5 // pred_region
      %s313 = ssub.s32 %s17, 1
      // Predicated region
      $region13: #{_lambda_.3} parent=11 // pred_check
        %p314 = pneg %p142
      $region14: #{_lambda_.3} parent=11 // pred_check_branch
        %316 = sbr.rel (%p314) target = $region16
      $region15: #{_lambda_.3} parent=11 // pred_region
        _
      $region16: #{_lambda_.3} parent=11 // pred_fallthru
        _
      // Predicated region
      $region17: #{_lambda_.3} parent=11 // pred_check
        %p317 = pneg %p163
      $region18: #{_lambda_.3} parent=11 // pred_check_branch
        %319 = sbr.rel (%p317) target = $region20
      $region19: #{_lambda_.3} parent=11 // pred_region
        _
      $region20: #{_lambda_.3} parent=11 // pred_fallthru
        _
      // Predicated region
      $region21: #{_lambda_.3} parent=11 // pred_check
        %p320 = pneg %p184
      $region22: #{_lambda_.3} parent=11 // pred_check_branch
        %322 = sbr.rel (%p320) target = $region24
      $region23: #{_lambda_.3} parent=11 // pred_region
        _
      $region24: #{_lambda_.3} parent=11 // pred_fallthru
        _
      // Predicated region
      $region25: #{_lambda_.3} parent=11 // pred_check
        %p323 = pneg %p205
      $region26: #{_lambda_.3} parent=11 // pred_check_branch
        %325 = sbr.rel (%p323) target = $region28
      $region27: #{_lambda_.3} parent=11 // pred_region
        _
      $region28: #{_lambda_.3} parent=11 // pred_fallthru
        _
      // Predicated region
      $region29: #{_lambda_.3} parent=11 // pred_check
        %p326 = pneg %p226
      $region30: #{_lambda_.3} parent=11 // pred_check_branch
        %328 = sbr.rel (%p326) target = $region32
      $region31: #{_lambda_.3} parent=11 // pred_region
        _
      $region32: #{_lambda_.3} parent=11 // pred_fallthru
        _
      // Predicated region
      $region33: #{_lambda_.3} parent=11 // pred_check
        %p329 = pneg %p247
      $region34: #{_lambda_.3} parent=11 // pred_check_branch
        %331 = sbr.rel (%p329) target = $region36
      $region35: #{_lambda_.3} parent=11 // pred_region
        _
      $region36: #{_lambda_.3} parent=11 // pred_fallthru
        _
    $region12: #{_lambda_.3} parent=5 // pred_fallthru
      _
    %p332 = scmp.lt.s32.totalorder %s17, 2
    // Predicated region
    $region37: #{_lambda_.3} parent=5 // pred_check
      %p333 = pneg %p332
    $region38: #{_lambda_.3} parent=5 // pred_check_branch
      %335 = sbr.rel (%p333) target = $region40
    $region39: #{_lambda_.3} parent=5 // pred_region
      // Predicated region
      $region41: #{_lambda_.3} parent=39 // pred_check
        %p336 = pneg %p37
      $region42: #{_lambda_.3} parent=39 // pred_check_branch
        %338 = sbr.rel (%p336) target = $region44
      $region43: #{_lambda_.3} parent=39 // pred_region
        %p339 = scmp.lt.s32.totalorder %s17, 1
        %s340 = scalar_select %p339, %s17, 1
        %s341 = smul.addr %s340, 8
        %s342 = smul.addr %s341, 8
        %s343 = scalar_lea.vmem %s0, %s342
      $region44: #{_lambda_.3} parent=39 // pred_fallthru
        _
      // Predicated region
      $region45: #{_lambda_.3} parent=39 // pred_check
        %p344 = pneg %p63
      $region46: #{_lambda_.3} parent=39 // pred_check_branch
        %346 = sbr.rel (%p344) target = $region48
      $region47: #{_lambda_.3} parent=39 // pred_region
        %p347 = scmp.lt.s32.totalorder %s17, 1
        %s348 = scalar_select %p347, %s17, 1
        %s349 = smul.addr %s348, 16
        %s350 = smul.addr %s349, 8
        %s351 = scalar_lea.vmem %s1, %s350
      $region48: #{_lambda_.3} parent=39 // pred_fallthru
        _
      // Predicated region
      $region49: #{_lambda_.3} parent=39 // pred_check
        %p352 = pneg %p89
      $region50: #{_lambda_.3} parent=39 // pred_check_branch
        %354 = sbr.rel (%p352) target = $region52
      $region51: #{_lambda_.3} parent=39 // pred_region
        %p355 = scmp.lt.s32.totalorder %s17, 1
        %s356 = scalar_select %p355, %s17, 1
        %s357 = smul.addr %s356, 9
        %s358 = smul.addr %s357, 8
        %s359 = scalar_lea.vmem %s2, %s358
      $region52: #{_lambda_.3} parent=39 // pred_fallthru
        _
      // Predicated region
      $region53: #{_lambda_.3} parent=39 // pred_check
        %p360 = pneg %p115
      $region54: #{_lambda_.3} parent=39 // pred_check_branch
        %362 = sbr.rel (%p360) target = $region56
      $region55: #{_lambda_.3} parent=39 // pred_region
        %p363 = scmp.lt.s32.totalorder %s17, 1
        %s364 = scalar_select %p363, %s17, 1
        %s365 = smul.addr %s364, 18
        %s366 = smul.addr %s365, 8
        %s367 = scalar_lea.vmem %s3, %s366
      $region56: #{_lambda_.3} parent=39 // pred_fallthru
        _
      // Predicated region
      $region57: #{_lambda_.3} parent=39 // pred_check
        %p368 = pneg %p267
      $region58: #{_lambda_.3} parent=39 // pred_check_branch
        %370 = sbr.rel (%p368) target = $region60
      $region59: #{_lambda_.3} parent=39 // pred_region
        %p371 = scmp.lt.s32.totalorder %s17, 1
        %s372 = scalar_select %p371, %s17, 1
        %s373 = smul.addr %s372, 8
        %s374 = smul.addr %s373, 8
        %s375 = scalar_lea.vmem %s10, %s374
      $region60: #{_lambda_.3} parent=39 // pred_fallthru
        _
    $region40: #{_lambda_.3} parent=5 // pred_fallthru
      _
    %p376 = scmp.le.s32.totalorder 1, %s17
    %p377 = scmp.lt.s32.totalorder %s17, 3
    %p378 = pnand %p376, %p377
    %p379 = pneg %p378
    // Predicated region
    $region61: #{_lambda_.3} parent=5 // pred_check
      _
    $region62: #{_lambda_.3} parent=5 // pred_check_branch
      %381 = sbr.rel (%p378) target = $region64
    $region63: #{_lambda_.3} parent=5 // pred_region
      %s382 = ssub.s32 %s17, 1
      %p383 = scmp.lt.s32.totalorder %s22, 1
      %s384 = scalar_select %p383, %s22, 1
      %s385 = smul.addr %s384, 8
      %s386 = smul.addr %s385, 8
      %s387 = scalar_lea.vmem %s0, %s386
      %p388 = pneg %p43
      %p389 = pneg %p40
      %p390 = scmp.lt.s32.totalorder %s22, 1
      %s391 = scalar_select %p390, %s22, 1
      %s392 = smul.addr %s391, 16
      %s393 = smul.addr %s392, 8
      %s394 = scalar_lea.vmem %s1, %s393
      %p395 = pneg %p69
      %p396 = pneg %p66
      %p397 = scmp.lt.s32.totalorder %s22, 1
      %s398 = scalar_select %p397, %s22, 1
      %s399 = smul.addr %s398, 9
      %s400 = smul.addr %s399, 8
      %s401 = scalar_lea.vmem %s2, %s400
      %p402 = pneg %p95
      %p403 = pneg %p92
      %p404 = scmp.lt.s32.totalorder %s22, 1
      %s405 = scalar_select %p404, %s22, 1
      %s406 = smul.addr %s405, 18
      %s407 = smul.addr %s406, 8
      %s408 = scalar_lea.vmem %s3, %s407
      %p409 = pneg %p121
      %p410 = pneg %p118
      %p411 = pneg %p142
      %p412 = pneg %p139
      %p413 = pneg %p163
      %p414 = pneg %p160
      %p415 = pneg %p184
      %p416 = pneg %p181
      %p417 = pneg %p205
      %p418 = pneg %p202
      %p419 = pneg %p226
      %p420 = pneg %p223
      %p421 = pneg %p247
      %p422 = pneg %p244
      %p423 = scmp.lt.s32.totalorder %s22, 1
      %s424 = scalar_select %p423, %s22, 1
      %s425 = smul.addr %s424, 8
      %s426 = smul.addr %s425, 8
      %s427 = scalar_lea.vmem %s10, %s426
      %p428 = pneg %p273
      %p429 = pneg %p270
      %p430 = pneg %p299
      %p431 = pneg %p296
      %p432 = scmp.lt.s32.totalorder %s22, 1
      %s433 = scalar_select %p432, %s22, 1
      %s434 = smul.addr %s433, 8
      %s435 = smul.addr %s434, 8
      %s436 = scalar_lea.vmem %s11, %s435
      %p437 = scmp.lt.s32.totalorder %s22, 1
      %s438 = scalar_select %p437, %s22, 1
      %s439 = smul.addr %s438, 8
      %s440 = smul.addr %s439, 8
      %s441 = scalar_lea.vmem %s0, %s440
      %p442 = scmp.lt.s32.totalorder %s22, 1
      %s443 = scalar_select %p442, %s22, 1
      %s444 = smul.addr %s443, 16
      %s445 = smul.addr %s444, 8
      %s446 = scalar_lea.vmem %s1, %s445
      %p447 = scmp.lt.s32.totalorder %s22, 1
      %s448 = scalar_select %p447, %s22, 1
      %s449 = smul.addr %s448, 9
      %s450 = smul.addr %s449, 8
      %s451 = scalar_lea.vmem %s2, %s450
      %p452 = scmp.lt.s32.totalorder %s22, 1
      %s453 = scalar_select %p452, %s22, 1
      %s454 = smul.addr %s453, 18
      %s455 = smul.addr %s454, 8
      %s456 = scalar_lea.vmem %s3, %s455
      %p457 = scmp.lt.s32.totalorder %s22, 1
      %s458 = scalar_select %p457, %s22, 1
      %s459 = smul.addr %s458, 8
      %s460 = smul.addr %s459, 8
      %s461 = scalar_lea.vmem %s10, %s460
      %p462 = scmp.lt.s32.totalorder %s22, 1
      %s463 = scalar_select %p462, %s22, 1
      %s464 = smul.addr %s463, 8
      %s465 = smul.addr %s464, 8
      %s466 = scalar_lea.vmem %s11, %s465
      %v467 = vld [vmem:[%s441] sm:$0xff]
      %v468 = vld [vmem:[%s441 + $0x8] sm:$0xff]
      %v469 = vld [vmem:[%s441 + $0x10] sm:$0xff]
      %v470 = vld [vmem:[%s441 + $0x18] sm:$0xff]
      %v471 = vld [vmem:[%s441 + $0x20] sm:$0xff]
      %v472 = vld [vmem:[%s441 + $0x28] sm:$0xff]
      %v473 = vld [vmem:[%s441 + $0x30] sm:$0xff]
      %v474 = vld [vmem:[%s441 + $0x38] sm:$0xff]
      %vm475 = vcmp.gt.f32.partialorder %v467, 0.5
      %vm476 = vcmp.gt.f32.partialorder %v468, 0.5
      %vm477 = vcmp.gt.f32.partialorder %v469, 0.5
      %vm478 = vcmp.gt.f32.partialorder %v470, 0.5
      %vm479 = vcmp.gt.f32.partialorder %v471, 0.5
      %vm480 = vcmp.gt.f32.partialorder %v472, 0.5
      %vm481 = vcmp.gt.f32.partialorder %v473, 0.5
      %vm482 = vcmp.gt.f32.partialorder %v474, 0.5
      %vm483 = vcmp.lt.f32.partialorder %v467, -0.5
      %vm484 = vcmp.lt.f32.partialorder %v468, -0.5
      %vm485 = vcmp.lt.f32.partialorder %v469, -0.5
      %vm486 = vcmp.lt.f32.partialorder %v470, -0.5
      %vm487 = vcmp.lt.f32.partialorder %v471, -0.5
      %vm488 = vcmp.lt.f32.partialorder %v472, -0.5
      %vm489 = vcmp.lt.f32.partialorder %v473, -0.5
      %vm490 = vcmp.lt.f32.partialorder %v474, -0.5
      %v491 = vsel %vm483, -1.0, 0.0
      %v492 = vsel %vm484, -1.0, 0.0
      %v493 = vsel %vm485, -1.0, 0.0
      %v494 = vsel %vm486, -1.0, 0.0
      %v495 = vsel %vm487, -1.0, 0.0
      %v496 = vsel %vm488, -1.0, 0.0
      %v497 = vsel %vm489, -1.0, 0.0
      %v498 = vsel %vm490, -1.0, 0.0
      %v499 = vsel %vm475, 1.0, %v491
      %v500 = vsel %vm476, 1.0, %v492
      %v501 = vsel %vm477, 1.0, %v493
      %v502 = vsel %vm478, 1.0, %v494
      %v503 = vsel %vm479, 1.0, %v495
      %v504 = vsel %vm480, 1.0, %v496
      %v505 = vsel %vm481, 1.0, %v497
      %v506 = vsel %vm482, 1.0, %v498
      %v507 = vpack.c.bf16 %v499, %v499
      %v508 = vpack.c.bf16 %v500, %v500
      %v509 = vpack.c.bf16 %v501, %v501
      %v510 = vpack.c.bf16 %v502, %v502
      %v511 = vpack.c.bf16 %v503, %v503
      %v512 = vpack.c.bf16 %v504, %v504
      %v513 = vpack.c.bf16 %v505, %v505
      %v514 = vpack.c.bf16 %v506, %v506
      %v515 = vld [vmem:[%s446] sm:$0xff]
      %v516 = vld [vmem:[%s446 + $0x8] sm:$0x1]
      %v517 = vld [vmem:[%s446 + $0x10] sm:$0xff]
      %v518 = vld [vmem:[%s446 + $0x18] sm:$0x1]
      %v519 = vld [vmem:[%s446 + $0x20] sm:$0xff]
      %v520 = vld [vmem:[%s446 + $0x28] sm:$0x1]
      %v521 = vld [vmem:[%s446 + $0x30] sm:$0xff]
      %v522 = vld [vmem:[%s446 + $0x38] sm:$0x1]
      %v523 = vld [vmem:[%s446 + $0x40] sm:$0xff]
      %v524 = vld [vmem:[%s446 + $0x48] sm:$0x1]
      %v525 = vld [vmem:[%s446 + $0x50] sm:$0xff]
      %v526 = vld [vmem:[%s446 + $0x58] sm:$0x1]
      %v527 = vld [vmem:[%s446 + $0x60] sm:$0xff]
      %v528 = vld [vmem:[%s446 + $0x68] sm:$0x1]
      %v529 = vld [vmem:[%s446 + $0x70] sm:$0xff]
      %v530 = vld [vmem:[%s446 + $0x78] sm:$0x1]
      %vm531 = vcmp.gt.f32.partialorder %v515, 0.5
      %vm532 = vcmp.gt.f32.partialorder %v516, 0.5
      %vm533 = vcmp.gt.f32.partialorder %v517, 0.5
      %vm534 = vcmp.gt.f32.partialorder %v518, 0.5
      %vm535 = vcmp.gt.f32.partialorder %v519, 0.5
      %vm536 = vcmp.gt.f32.partialorder %v520, 0.5
      %vm537 = vcmp.gt.f32.partialorder %v521, 0.5
      %vm538 = vcmp.gt.f32.partialorder %v522, 0.5
      %vm539 = vcmp.gt.f32.partialorder %v523, 0.5
      %vm540 = vcmp.gt.f32.partialorder %v524, 0.5
      %vm541 = vcmp.gt.f32.partialorder %v525, 0.5
      %vm542 = vcmp.gt.f32.partialorder %v526, 0.5
      %vm543 = vcmp.gt.f32.partialorder %v527, 0.5
      %vm544 = vcmp.gt.f32.partialorder %v528, 0.5
      %vm545 = vcmp.gt.f32.partialorder %v529, 0.5
      %vm546 = vcmp.gt.f32.partialorder %v530, 0.5
      %vm547 = vcmp.lt.f32.partialorder %v515, -0.5
      %vm548 = vcmp.lt.f32.partialorder %v516, -0.5
      %vm549 = vcmp.lt.f32.partialorder %v517, -0.5
      %vm550 = vcmp.lt.f32.partialorder %v518, -0.5
      %vm551 = vcmp.lt.f32.partialorder %v519, -0.5
      %vm552 = vcmp.lt.f32.partialorder %v520, -0.5
      %vm553 = vcmp.lt.f32.partialorder %v521, -0.5
      %vm554 = vcmp.lt.f32.partialorder %v522, -0.5
      %vm555 = vcmp.lt.f32.partialorder %v523, -0.5
      %vm556 = vcmp.lt.f32.partialorder %v524, -0.5
      %vm557 = vcmp.lt.f32.partialorder %v525, -0.5
      %vm558 = vcmp.lt.f32.partialorder %v526, -0.5
      %vm559 = vcmp.lt.f32.partialorder %v527, -0.5
      %vm560 = vcmp.lt.f32.partialorder %v528, -0.5
      %vm561 = vcmp.lt.f32.partialorder %v529, -0.5
      %vm562 = vcmp.lt.f32.partialorder %v530, -0.5
      %v563 = vsel %vm547, -1.0, 0.0
      %v564 = vsel %vm548, -1.0, 0.0
      %v565 = vsel %vm549, -1.0, 0.0
      %v566 = vsel %vm550, -1.0, 0.0
      %v567 = vsel %vm551, -1.0, 0.0
      %v568 = vsel %vm552, -1.0, 0.0
      %v569 = vsel %vm553, -1.0, 0.0
      %v570 = vsel %vm554, -1.0, 0.0
      %v571 = vsel %vm555, -1.0, 0.0
      %v572 = vsel %vm556, -1.0, 0.0
      %v573 = vsel %vm557, -1.0, 0.0
      %v574 = vsel %vm558, -1.0, 0.0
      %v575 = vsel %vm559, -1.0, 0.0
      %v576 = vsel %vm560, -1.0, 0.0
      %v577 = vsel %vm561, -1.0, 0.0
      %v578 = vsel %vm562, -1.0, 0.0
      %v579 = vsel %vm531, 1.0, %v563
      %v580 = vsel %vm532, 1.0, %v564
      %v581 = vsel %vm533, 1.0, %v565
      %v582 = vsel %vm534, 1.0, %v566
      %v583 = vsel %vm535, 1.0, %v567
      %v584 = vsel %vm536, 1.0, %v568
      %v585 = vsel %vm537, 1.0, %v569
      %v586 = vsel %vm538, 1.0, %v570
      %v587 = vsel %vm539, 1.0, %v571
      %v588 = vsel %vm540, 1.0, %v572
      %v589 = vsel %vm541, 1.0, %v573
      %v590 = vsel %vm542, 1.0, %v574
      %v591 = vsel %vm543, 1.0, %v575
      %v592 = vsel %vm544, 1.0, %v576
      %v593 = vsel %vm545, 1.0, %v577
      %v594 = vsel %vm546, 1.0, %v578
      %v595 = vpack.c.bf16 %v579, %v579
      %v596 = vpack.c.bf16 %v580, %v580
      %v597 = vpack.c.bf16 %v581, %v581
      %v598 = vpack.c.bf16 %v582, %v582
      %v599 = vpack.c.bf16 %v583, %v583
      %v600 = vpack.c.bf16 %v584, %v584
      %v601 = vpack.c.bf16 %v585, %v585
      %v602 = vpack.c.bf16 %v586, %v586
      %v603 = vpack.c.bf16 %v587, %v587
      %v604 = vpack.c.bf16 %v588, %v588
      %v605 = vpack.c.bf16 %v589, %v589
      %v606 = vpack.c.bf16 %v590, %v590
      %v607 = vpack.c.bf16 %v591, %v591
      %v608 = vpack.c.bf16 %v592, %v592
      %v609 = vpack.c.bf16 %v593, %v593
      %v610 = vpack.c.bf16 %v594, %v594
      %v611 = vld [vmem:[%s451] sm:$0xff]
      %v612 = vld [vmem:[%s451 + $0x8] sm:$0xff]
      %v613 = vld [vmem:[%s451 + $0x10] sm:$0xff]
      %v614 = vld [vmem:[%s451 + $0x18] sm:$0xff]
      %v615 = vld [vmem:[%s451 + $0x20] sm:$0xff]
      %v616 = vld [vmem:[%s451 + $0x28] sm:$0xff]
      %v617 = vld [vmem:[%s451 + $0x30] sm:$0xff]
      %v618 = vld [vmem:[%s451 + $0x38] sm:$0xff]
      %v619 = vld [vmem:[%s451 + $0x40] sm:$0xff]
      %vm620 = vcmp.gt.f32.partialorder %v611, 0.5
      %vm621 = vcmp.gt.f32.partialorder %v612, 0.5
      %vm622 = vcmp.gt.f32.partialorder %v613, 0.5
      %vm623 = vcmp.gt.f32.partialorder %v614, 0.5
      %vm624 = vcmp.gt.f32.partialorder %v615, 0.5
      %vm625 = vcmp.gt.f32.partialorder %v616, 0.5
      %vm626 = vcmp.gt.f32.partialorder %v617, 0.5
      %vm627 = vcmp.gt.f32.partialorder %v618, 0.5
      %vm628 = vcmp.gt.f32.partialorder %v619, 0.5
      %vm629 = vcmp.lt.f32.partialorder %v611, -0.5
      %vm630 = vcmp.lt.f32.partialorder %v612, -0.5
      %vm631 = vcmp.lt.f32.partialorder %v613, -0.5
      %vm632 = vcmp.lt.f32.partialorder %v614, -0.5
      %vm633 = vcmp.lt.f32.partialorder %v615, -0.5
      %vm634 = vcmp.lt.f32.partialorder %v616, -0.5
      %vm635 = vcmp.lt.f32.partialorder %v617, -0.5
      %vm636 = vcmp.lt.f32.partialorder %v618, -0.5
      %vm637 = vcmp.lt.f32.partialorder %v619, -0.5
      %v638 = vsel %vm629, -1.0, 0.0
      %v639 = vsel %vm630, -1.0, 0.0
      %v640 = vsel %vm631, -1.0, 0.0
      %v641 = vsel %vm632, -1.0, 0.0
      %v642 = vsel %vm633, -1.0, 0.0
      %v643 = vsel %vm634, -1.0, 0.0
      %v644 = vsel %vm635, -1.0, 0.0
      %v645 = vsel %vm636, -1.0, 0.0
      %v646 = vsel %vm637, -1.0, 0.0
      %v647 = vsel %vm620, 1.0, %v638
      %v648 = vsel %vm621, 1.0, %v639
      %v649 = vsel %vm622, 1.0, %v640
      %v650 = vsel %vm623, 1.0, %v641
      %v651 = vsel %vm624, 1.0, %v642
      %v652 = vsel %vm625, 1.0, %v643
      %v653 = vsel %vm626, 1.0, %v644
      %v654 = vsel %vm627, 1.0, %v645
      %v655 = vsel %vm628, 1.0, %v646
      %v656 = vpack.c.bf16 %v647, %v647
      %v657 = vpack.c.bf16 %v648, %v648
      %v658 = vpack.c.bf16 %v649, %v649
      %v659 = vpack.c.bf16 %v650, %v650
      %v660 = vpack.c.bf16 %v651, %v651
      %v661 = vpack.c.bf16 %v652, %v652
      %v662 = vpack.c.bf16 %v653, %v653
      %v663 = vpack.c.bf16 %v654, %v654
      %v664 = vpack.c.bf16 %v655, %v655
      %v665 = vld [vmem:[%s456] sm:$0xff]
      %v666 = vld [vmem:[%s456 + $0x8] sm:$0x1]
      %v667 = vld [vmem:[%s456 + $0x10] sm:$0xff]
      %v668 = vld [vmem:[%s456 + $0x18] sm:$0x1]
      %v669 = vld [vmem:[%s456 + $0x20] sm:$0xff]
      %v670 = vld [vmem:[%s456 + $0x28] sm:$0x1]
      %v671 = vld [vmem:[%s456 + $0x30] sm:$0xff]
      %v672 = vld [vmem:[%s456 + $0x38] sm:$0x1]
      %v673 = vld [vmem:[%s456 + $0x40] sm:$0xff]
      %v674 = vld [vmem:[%s456 + $0x48] sm:$0x1]
      %v675 = vld [vmem:[%s456 + $0x50] sm:$0xff]
      %v676 = vld [vmem:[%s456 + $0x58] sm:$0x1]
      %v677 = vld [vmem:[%s456 + $0x60] sm:$0xff]
      %v678 = vld [vmem:[%s456 + $0x68] sm:$0x1]
      %v679 = vld [vmem:[%s456 + $0x70] sm:$0xff]
      %v680 = vld [vmem:[%s456 + $0x78] sm:$0x1]
      %v681 = vld [vmem:[%s456 + $0x80] sm:$0xff]
      %v682 = vld [vmem:[%s456 + $0x88] sm:$0x1]
      %vm683 = vcmp.gt.f32.partialorder %v665, 0.5
      %vm684 = vcmp.gt.f32.partialorder %v666, 0.5
      %vm685 = vcmp.gt.f32.partialorder %v667, 0.5
      %vm686 = vcmp.gt.f32.partialorder %v668, 0.5
      %vm687 = vcmp.gt.f32.partialorder %v669, 0.5
      %vm688 = vcmp.gt.f32.partialorder %v670, 0.5
      %vm689 = vcmp.gt.f32.partialorder %v671, 0.5
      %vm690 = vcmp.gt.f32.partialorder %v672, 0.5
      %vm691 = vcmp.gt.f32.partialorder %v673, 0.5
      %vm692 = vcmp.gt.f32.partialorder %v674, 0.5
      %vm693 = vcmp.gt.f32.partialorder %v675, 0.5
      %vm694 = vcmp.gt.f32.partialorder %v676, 0.5
      %vm695 = vcmp.gt.f32.partialorder %v677, 0.5
      %vm696 = vcmp.gt.f32.partialorder %v678, 0.5
      %vm697 = vcmp.gt.f32.partialorder %v679, 0.5
      %vm698 = vcmp.gt.f32.partialorder %v680, 0.5
      %vm699 = vcmp.gt.f32.partialorder %v681, 0.5
      %vm700 = vcmp.gt.f32.partialorder %v682, 0.5
      %vm701 = vcmp.lt.f32.partialorder %v665, -0.5
      %vm702 = vcmp.lt.f32.partialorder %v666, -0.5
      %vm703 = vcmp.lt.f32.partialorder %v667, -0.5
      %vm704 = vcmp.lt.f32.partialorder %v668, -0.5
      %vm705 = vcmp.lt.f32.partialorder %v669, -0.5
      %vm706 = vcmp.lt.f32.partialorder %v670, -0.5
      %vm707 = vcmp.lt.f32.partialorder %v671, -0.5
      %vm708 = vcmp.lt.f32.partialorder %v672, -0.5
      %vm709 = vcmp.lt.f32.partialorder %v673, -0.5
      %vm710 = vcmp.lt.f32.partialorder %v674, -0.5
      %vm711 = vcmp.lt.f32.partialorder %v675, -0.5
      %vm712 = vcmp.lt.f32.partialorder %v676, -0.5
      %vm713 = vcmp.lt.f32.partialorder %v677, -0.5
      %vm714 = vcmp.lt.f32.partialorder %v678, -0.5
      %vm715 = vcmp.lt.f32.partialorder %v679, -0.5
      %vm716 = vcmp.lt.f32.partialorder %v680, -0.5
      %vm717 = vcmp.lt.f32.partialorder %v681, -0.5
      %vm718 = vcmp.lt.f32.partialorder %v682, -0.5
      %v719 = vsel %vm701, -1.0, 0.0
      %v720 = vsel %vm702, -1.0, 0.0
      %v721 = vsel %vm703, -1.0, 0.0
      %v722 = vsel %vm704, -1.0, 0.0
      %v723 = vsel %vm705, -1.0, 0.0
      %v724 = vsel %vm706, -1.0, 0.0
      %v725 = vsel %vm707, -1.0, 0.0
      %v726 = vsel %vm708, -1.0, 0.0
      %v727 = vsel %vm709, -1.0, 0.0
      %v728 = vsel %vm710, -1.0, 0.0
      %v729 = vsel %vm711, -1.0, 0.0
      %v730 = vsel %vm712, -1.0, 0.0
      %v731 = vsel %vm713, -1.0, 0.0
      %v732 = vsel %vm714, -1.0, 0.0
      %v733 = vsel %vm715, -1.0, 0.0
      %v734 = vsel %vm716, -1.0, 0.0
      %v735 = vsel %vm717, -1.0, 0.0
      %v736 = vsel %vm718, -1.0, 0.0
      %v737 = vsel %vm683, 1.0, %v719
      %v738 = vsel %vm684, 1.0, %v720
      %v739 = vsel %vm685, 1.0, %v721
      %v740 = vsel %vm686, 1.0, %v722
      %v741 = vsel %vm687, 1.0, %v723
      %v742 = vsel %vm688, 1.0, %v724
      %v743 = vsel %vm689, 1.0, %v725
      %v744 = vsel %vm690, 1.0, %v726
      %v745 = vsel %vm691, 1.0, %v727
      %v746 = vsel %vm692, 1.0, %v728
      %v747 = vsel %vm693, 1.0, %v729
      %v748 = vsel %vm694, 1.0, %v730
      %v749 = vsel %vm695, 1.0, %v731
      %v750 = vsel %vm696, 1.0, %v732
      %v751 = vsel %vm697, 1.0, %v733
      %v752 = vsel %vm698, 1.0, %v734
      %v753 = vsel %vm699, 1.0, %v735
      %v754 = vsel %vm700, 1.0, %v736
      %v755 = vpack.c.bf16 %v737, %v737
      %v756 = vpack.c.bf16 %v738, %v738
      %v757 = vpack.c.bf16 %v739, %v739
      %v758 = vpack.c.bf16 %v740, %v740
      %v759 = vpack.c.bf16 %v741, %v741
      %v760 = vpack.c.bf16 %v742, %v742
      %v761 = vpack.c.bf16 %v743, %v743
      %v762 = vpack.c.bf16 %v744, %v744
      %v763 = vpack.c.bf16 %v745, %v745
      %v764 = vpack.c.bf16 %v746, %v746
      %v765 = vpack.c.bf16 %v747, %v747
      %v766 = vpack.c.bf16 %v748, %v748
      %v767 = vpack.c.bf16 %v749, %v749
      %v768 = vpack.c.bf16 %v750, %v750
      %v769 = vpack.c.bf16 %v751, %v751
      %v770 = vpack.c.bf16 %v752, %v752
      %v771 = vpack.c.bf16 %v753, %v753
      %v772 = vpack.c.bf16 %v754, %v754
      %v773 = vld [vmem:[%s4] sm:$0xf]
      %v774 = vld [vmem:[%s4 + $0x4] sm:$0xf]
      %v775 = vld [vmem:[%s4 + $0x8] sm:$0xf]
      %v776 = vld [vmem:[%s4 + $0xc] sm:$0xf]
      %v777 = vld [vmem:[%s4 + $0x10] sm:$0xf]
      %v778 = vld [vmem:[%s4 + $0x14] sm:$0xf]
      %v779 = vld [vmem:[%s4 + $0x18] sm:$0xf]
      %v780 = vld [vmem:[%s4 + $0x1c] sm:$0xf]
      %v781 = vld [vmem:[%s4 + $0x20] sm:$0xf]
      %v782 = vld [vmem:[%s4 + $0x24] sm:$0xf]
      %v783 = vld [vmem:[%s4 + $0x28] sm:$0xf]
      %v784 = vld [vmem:[%s4 + $0x2c] sm:$0xf]
      %v785 = vld [vmem:[%s4 + $0x30] sm:$0xf]
      %v786 = vld [vmem:[%s4 + $0x34] sm:$0xf]
      %v787 = vld [vmem:[%s4 + $0x38] sm:$0xf]
      %v788 = vld [vmem:[%s4 + $0x3c] sm:$0xf]
      %v789 = vld [vmem:[%s4 + $0x40] sm:$0xf]
      %v790 = vld [vmem:[%s4 + $0x44] sm:$0xf]
      %v791 = vld [vmem:[%s4 + $0x48] sm:$0xf]
      %v792 = vld [vmem:[%s4 + $0x4c] sm:$0xf]
      %v793 = vld [vmem:[%s4 + $0x50] sm:$0xf]
      %v794 = vld [vmem:[%s4 + $0x54] sm:$0xf]
      %v795 = vld [vmem:[%s4 + $0x58] sm:$0xf]
      %v796 = vld [vmem:[%s4 + $0x5c] sm:$0xf]
      %v797 = vld [vmem:[%s4 + $0x60] sm:$0xf]
      %v798 = vld [vmem:[%s4 + $0x64] sm:$0xf]
      %v799 = vld [vmem:[%s4 + $0x68] sm:$0xf]
      %v800 = vld [vmem:[%s4 + $0x6c] sm:$0xf]
      %v801 = vld [vmem:[%s4 + $0x70] sm:$0xf]
      %v802 = vld [vmem:[%s4 + $0x74] sm:$0xf]
      %v803 = vld [vmem:[%s4 + $0x78] sm:$0xf]
      %v804 = vld [vmem:[%s4 + $0x7c] sm:$0xf]
      %v813 = vunpack.c.l.b16 %v656
      %v814 = vunpack.c.l.b16 %v657
      %v815 = vunpack.c.l.b16 %v658
      %v816 = vunpack.c.l.b16 %v659
      %v817 = vunpack.c.l.b16 %v660
      %v818 = vunpack.c.l.b16 %v661
      %v819 = vunpack.c.l.b16 %v662
      %v820 = vunpack.c.l.b16 %v663
      %v821 = vpack.c.b16 %v814, %v813
      %v822 = vpack.c.b16 %v816, %v815
      %v823 = vpack.c.b16 %v818, %v817
      %v824 = vpack.c.b16 %v820, %v819
      %v845 = vunpack.c.l.b16 %v789
      %v846 = vunpack.c.l.b16 %v790
      %v847 = vunpack.c.l.b16 %v791
      %v848 = vunpack.c.l.b16 %v792
      %v849 = vunpack.c.l.b16 %v793
      %v850 = vunpack.c.l.b16 %v794
      %v851 = vunpack.c.l.b16 %v795
      %v852 = vunpack.c.l.b16 %v796
      %v853 = vunpack.c.l.b16 %v797
      %v854 = vunpack.c.l.b16 %v798
      %v855 = vunpack.c.l.b16 %v799
      %v856 = vunpack.c.l.b16 %v800
      %v857 = vunpack.c.l.b16 %v801
      %v858 = vunpack.c.l.b16 %v802
      %v859 = vunpack.c.l.b16 %v803
      %v860 = vunpack.c.l.b16 %v804
      %v861 = vpack.c.b16 %v846, %v845
      %v862 = vpack.c.b16 %v848, %v847
      %v863 = vpack.c.b16 %v850, %v849
      %v864 = vpack.c.b16 %v852, %v851
      %v865 = vpack.c.b16 %v854, %v853
      %v866 = vpack.c.b16 %v856, %v855
      %v867 = vpack.c.b16 %v858, %v857
      %v868 = vpack.c.b16 %v860, %v859
      %877 = vmatpush.bf16.msra.mxu0 %v868
      %878 = vmatpush.bf16.msra.mxu0 %v867
      %879 = vmatpush.bf16.msra.mxu0 %v866
      %880 = vmatpush.bf16.msra.mxu0 %v865
      %881 = vmatpush.bf16.msra.mxu0 %v864
      %882 = vmatpush.bf16.msra.mxu0 %v863
      %883 = vmatpush.bf16.msra.mxu0 %v862
      %884 = vmatpush.bf16.msra.mxu0 %v861
      %885 = vmatmul.bf16.gmra.mxu0 %v821
      %v886 = vpop.f32.mrf.mxu0
      %v887 = vadd.f32 0.0, %v886
      %v888 = vpop.f32.mrf.mxu0
      %v889 = vadd.f32 0.0, %v888
      %890 = vmatmul.bf16.gmra.mxu0 %v822
      %v891 = vpop.f32.mrf.mxu0
      %v892 = vadd.f32 0.0, %v891
      %v893 = vpop.f32.mrf.mxu0
      %v894 = vadd.f32 0.0, %v893
      %895 = vmatmul.bf16.gmra.mxu0 %v823
      %v896 = vpop.f32.mrf.mxu0
      %v897 = vadd.f32 0.0, %v896
      %v898 = vpop.f32.mrf.mxu0
      %v899 = vadd.f32 0.0, %v898
      %900 = vmatmul.bf16.gmra.mxu0 %v824
      %v901 = vpop.f32.mrf.mxu0
      %v902 = vadd.f32 0.0, %v901
      %v903 = vpop.f32.mrf.mxu0
      %v904 = vadd.f32 0.0, %v903
      %905 = vdwg.mxu0
      %v914 = vunpack.c.l.b16 %v755
      %v915 = vunpack.c.l.b16 %v757
      %v916 = vunpack.c.l.b16 %v759
      %v917 = vunpack.c.l.b16 %v761
      %v918 = vunpack.c.l.b16 %v763
      %v919 = vunpack.c.l.b16 %v765
      %v920 = vunpack.c.l.b16 %v767
      %v921 = vunpack.c.l.b16 %v769
      %v922 = vpack.c.b16 %v915, %v914
      %v923 = vpack.c.b16 %v917, %v916
      %v924 = vpack.c.b16 %v919, %v918
      %v925 = vpack.c.b16 %v921, %v920
      %v946 = vunpack.c.l.b16 %v773
      %v947 = vunpack.c.l.b16 %v774
      %v948 = vunpack.c.l.b16 %v775
      %v949 = vunpack.c.l.b16 %v776
      %v950 = vunpack.c.l.b16 %v777
      %v951 = vunpack.c.l.b16 %v778
      %v952 = vunpack.c.l.b16 %v779
      %v953 = vunpack.c.l.b16 %v780
      %v954 = vunpack.c.l.b16 %v781
      %v955 = vunpack.c.l.b16 %v782
      %v956 = vunpack.c.l.b16 %v783
      %v957 = vunpack.c.l.b16 %v784
      %v958 = vunpack.c.l.b16 %v785
      %v959 = vunpack.c.l.b16 %v786
      %v960 = vunpack.c.l.b16 %v787
      %v961 = vunpack.c.l.b16 %v788
      %v962 = vpack.c.b16 %v947, %v946
      %v963 = vpack.c.b16 %v949, %v948
      %v964 = vpack.c.b16 %v951, %v950
      %v965 = vpack.c.b16 %v953, %v952
      %v966 = vpack.c.b16 %v955, %v954
      %v967 = vpack.c.b16 %v957, %v956
      %v968 = vpack.c.b16 %v959, %v958
      %v969 = vpack.c.b16 %v961, %v960
      %978 = vmatpush.bf16.msra.mxu0 %v969
      %979 = vmatpush.bf16.msra.mxu0 %v968
      %980 = vmatpush.bf16.msra.mxu0 %v967
      %981 = vmatpush.bf16.msra.mxu0 %v966
      %982 = vmatpush.bf16.msra.mxu0 %v965
      %983 = vmatpush.bf16.msra.mxu0 %v964
      %984 = vmatpush.bf16.msra.mxu0 %v963
      %985 = vmatpush.bf16.msra.mxu0 %v962
      %986 = vmatmul.bf16.gmra.mxu0 %v922
      %v987 = vpop.f32.mrf.mxu0
      %v988 = vadd.f32 %v887, %v987
      %v989 = vpop.f32.mrf.mxu0
      %v990 = vadd.f32 %v889, %v989
      %991 = vmatmul.bf16.gmra.mxu0 %v923
      %v992 = vpop.f32.mrf.mxu0
      %v993 = vadd.f32 %v892, %v992
      %v994 = vpop.f32.mrf.mxu0
      %v995 = vadd.f32 %v894, %v994
      %996 = vmatmul.bf16.gmra.mxu0 %v924
      %v997 = vpop.f32.mrf.mxu0
      %v998 = vadd.f32 %v897, %v997
      %v999 = vpop.f32.mrf.mxu0
      %v1000 = vadd.f32 %v899, %v999
      %1001 = vmatmul.bf16.gmra.mxu0 %v925
      %v1002 = vpop.f32.mrf.mxu0
      %v1003 = vadd.f32 %v902, %v1002
      %v1004 = vpop.f32.mrf.mxu0
      %v1005 = vadd.f32 %v904, %v1004
      %1006 = vdwg.mxu0
      %vm1007 = vsmask.f32 3328
      %vm1008 = vsmask.f32 7440
      %vm1009 = vmor %vm1007, %vm1008
      %v1011 = vshrl.u32 %v755, 16
      %v1013 = vrot.slane %v1011, 4
      %v1014 = vshll.u32 %v755, 16
      %v1016 = vrot.slane %v1014, 5
      %v1017 = vor.u32 %v1013, %v1016
      %v1018 = vrot.slane %v1017, 4
      %v1020 = vshll.u32 %v756, 16
      %v1022 = vrot.slane %v1020, 5
      %v1023 = vsel %vm1009, %v1018, %v1022
      %v1025 = vshrl.u32 %v757, 16
      %v1027 = vrot.slane %v1025, 4
      %v1028 = vshll.u32 %v757, 16
      %v1030 = vrot.slane %v1028, 5
      %v1031 = vor.u32 %v1027, %v1030
      %v1032 = vrot.slane %v1031, 4
      %v1034 = vshll.u32 %v758, 16
      %v1036 = vrot.slane %v1034, 5
      %v1037 = vsel %vm1009, %v1032, %v1036
      %v1039 = vshrl.u32 %v759, 16
      %v1041 = vrot.slane %v1039, 4
      %v1042 = vshll.u32 %v759, 16
      %v1044 = vrot.slane %v1042, 5
      %v1045 = vor.u32 %v1041, %v1044
      %v1046 = vrot.slane %v1045, 4
      %v1048 = vshll.u32 %v760, 16
      %v1050 = vrot.slane %v1048, 5
      %v1051 = vsel %vm1009, %v1046, %v1050
      %v1053 = vshrl.u32 %v761, 16
      %v1055 = vrot.slane %v1053, 4
      %v1056 = vshll.u32 %v761, 16
      %v1058 = vrot.slane %v1056, 5
      %v1059 = vor.u32 %v1055, %v1058
      %v1060 = vrot.slane %v1059, 4
      %v1062 = vshll.u32 %v762, 16
      %v1064 = vrot.slane %v1062, 5
      %v1065 = vsel %vm1009, %v1060, %v1064
      %v1067 = vshrl.u32 %v763, 16
      %v1069 = vrot.slane %v1067, 4
      %v1070 = vshll.u32 %v763, 16
      %v1072 = vrot.slane %v1070, 5
      %v1073 = vor.u32 %v1069, %v1072
      %v1074 = vrot.slane %v1073, 4
      %v1076 = vshll.u32 %v764, 16
      %v1078 = vrot.slane %v1076, 5
      %v1079 = vsel %vm1009, %v1074, %v1078
      %v1081 = vshrl.u32 %v765, 16
      %v1083 = vrot.slane %v1081, 4
      %v1084 = vshll.u32 %v765, 16
      %v1086 = vrot.slane %v1084, 5
      %v1087 = vor.u32 %v1083, %v1086
      %v1088 = vrot.slane %v1087, 4
      %v1090 = vshll.u32 %v766, 16
      %v1092 = vrot.slane %v1090, 5
      %v1093 = vsel %vm1009, %v1088, %v1092
      %v1095 = vshrl.u32 %v767, 16
      %v1097 = vrot.slane %v1095, 4
      %v1098 = vshll.u32 %v767, 16
      %v1100 = vrot.slane %v1098, 5
      %v1101 = vor.u32 %v1097, %v1100
      %v1102 = vrot.slane %v1101, 4
      %v1104 = vshll.u32 %v768, 16
      %v1106 = vrot.slane %v1104, 5
      %v1107 = vsel %vm1009, %v1102, %v1106
      %v1109 = vshrl.u32 %v769, 16
      %v1111 = vrot.slane %v1109, 4
      %v1112 = vshll.u32 %v769, 16
      %v1114 = vrot.slane %v1112, 5
      %v1115 = vor.u32 %v1111, %v1114
      %v1116 = vrot.slane %v1115, 4
      %v1118 = vshll.u32 %v770, 16
      %v1120 = vrot.slane %v1118, 5
      %v1121 = vsel %vm1009, %v1116, %v1120
      %v1122 = vld [vmem:[%s4 + $0x80] sm:$0xf]
      %v1123 = vld [vmem:[%s4 + $0x84] sm:$0xf]
      %v1124 = vld [vmem:[%s4 + $0x88] sm:$0xf]
      %v1125 = vld [vmem:[%s4 + $0x8c] sm:$0xf]
      %v1126 = vld [vmem:[%s4 + $0x90] sm:$0xf]
      %v1127 = vld [vmem:[%s4 + $0x94] sm:$0xf]
      %v1128 = vld [vmem:[%s4 + $0x98] sm:$0xf]
      %v1129 = vld [vmem:[%s4 + $0x9c] sm:$0xf]
      %v1130 = vld [vmem:[%s4 + $0xa0] sm:$0xf]
      %v1131 = vld [vmem:[%s4 + $0xa4] sm:$0xf]
      %v1132 = vld [vmem:[%s4 + $0xa8] sm:$0xf]
      %v1133 = vld [vmem:[%s4 + $0xac] sm:$0xf]
      %v1134 = vld [vmem:[%s4 + $0xb0] sm:$0xf]
      %v1135 = vld [vmem:[%s4 + $0xb4] sm:$0xf]
      %v1136 = vld [vmem:[%s4 + $0xb8] sm:$0xf]
      %v1137 = vld [vmem:[%s4 + $0xbc] sm:$0xf]
      %v1138 = vunpack.c.l.b16 %v1023
      %v1139 = vunpack.c.l.b16 %v1037
      %v1140 = vunpack.c.l.b16 %v1051
      %v1141 = vunpack.c.l.b16 %v1065
      %v1142 = vunpack.c.l.b16 %v1079
      %v1143 = vunpack.c.l.b16 %v1093
      %v1144 = vunpack.c.l.b16 %v1107
      %v1145 = vunpack.c.l.b16 %v1121
      %v1146 = vpack.c.b16 %v1139, %v1138
      %v1147 = vpack.c.b16 %v1141, %v1140
      %v1148 = vpack.c.b16 %v1143, %v1142
      %v1149 = vpack.c.b16 %v1145, %v1144
      %v1170 = vunpack.c.l.b16 %v1122
      %v1171 = vunpack.c.l.b16 %v1123
      %v1172 = vunpack.c.l.b16 %v1124
      %v1173 = vunpack.c.l.b16 %v1125
      %v1174 = vunpack.c.l.b16 %v1126
      %v1175 = vunpack.c.l.b16 %v1127
      %v1176 = vunpack.c.l.b16 %v1128
      %v1177 = vunpack.c.l.b16 %v1129
      %v1178 = vunpack.c.l.b16 %v1130
      %v1179 = vunpack.c.l.b16 %v1131
      %v1180 = vunpack.c.l.b16 %v1132
      %v1181 = vunpack.c.l.b16 %v1133
      %v1182 = vunpack.c.l.b16 %v1134
      %v1183 = vunpack.c.l.b16 %v1135
      %v1184 = vunpack.c.l.b16 %v1136
      %v1185 = vunpack.c.l.b16 %v1137
      %v1186 = vpack.c.b16 %v1171, %v1170
      %v1187 = vpack.c.b16 %v1173, %v1172
      %v1188 = vpack.c.b16 %v1175, %v1174
      %v1189 = vpack.c.b16 %v1177, %v1176
      %v1190 = vpack.c.b16 %v1179, %v1178
      %v1191 = vpack.c.b16 %v1181, %v1180
      %v1192 = vpack.c.b16 %v1183, %v1182
      %v1193 = vpack.c.b16 %v1185, %v1184
      %1202 = vmatpush.bf16.msra.mxu0 %v1193
      %1203 = vmatpush.bf16.msra.mxu0 %v1192
      %1204 = vmatpush.bf16.msra.mxu0 %v1191
      %1205 = vmatpush.bf16.msra.mxu0 %v1190
      %1206 = vmatpush.bf16.msra.mxu0 %v1189
      %1207 = vmatpush.bf16.msra.mxu0 %v1188
      %1208 = vmatpush.bf16.msra.mxu0 %v1187
      %1209 = vmatpush.bf16.msra.mxu0 %v1186
      %1210 = vmatmul.bf16.gmra.mxu0 %v1146
      %v1211 = vpop.f32.mrf.mxu0
      %v1212 = vadd.f32 0.0, %v1211
      %v1213 = vpop.f32.mrf.mxu0
      %v1214 = vadd.f32 0.0, %v1213
      %1215 = vmatmul.bf16.gmra.mxu0 %v1147
      %v1216 = vpop.f32.mrf.mxu0
      %v1217 = vadd.f32 0.0, %v1216
      %v1218 = vpop.f32.mrf.mxu0
      %v1219 = vadd.f32 0.0, %v1218
      %1220 = vmatmul.bf16.gmra.mxu0 %v1148
      %v1221 = vpop.f32.mrf.mxu0
      %v1222 = vadd.f32 0.0, %v1221
      %v1223 = vpop.f32.mrf.mxu0
      %v1224 = vadd.f32 0.0, %v1223
      %1225 = vmatmul.bf16.gmra.mxu0 %v1149
      %v1226 = vpop.f32.mrf.mxu0
      %v1227 = vadd.f32 0.0, %v1226
      %v1228 = vpop.f32.mrf.mxu0
      %v1229 = vadd.f32 0.0, %v1228
      %1230 = vdwg.mxu0
      %v1231 = vadd.f32 %v988, %v1212
      %v1232 = vadd.f32 %v990, %v1214
      %v1233 = vadd.f32 %v993, %v1217
      %v1234 = vadd.f32 %v995, %v1219
      %v1235 = vadd.f32 %v998, %v1222
      %v1236 = vadd.f32 %v1000, %v1224
      %v1237 = vadd.f32 %v1003, %v1227
      %v1238 = vadd.f32 %v1005, %v1229
      %v1239 = vld [vmem:[%s4 + $0xc0] sm:$0xf]
      %v1240 = vld [vmem:[%s4 + $0xc4] sm:$0xf]
      %v1241 = vld [vmem:[%s4 + $0xc8] sm:$0xf]
      %v1242 = vld [vmem:[%s4 + $0xcc] sm:$0xf]
      %v1243 = vld [vmem:[%s4 + $0xd0] sm:$0xf]
      %v1244 = vld [vmem:[%s4 + $0xd4] sm:$0xf]
      %v1245 = vld [vmem:[%s4 + $0xd8] sm:$0xf]
      %v1246 = vld [vmem:[%s4 + $0xdc] sm:$0xf]
      %v1247 = vld [vmem:[%s4 + $0xe0] sm:$0xf]
      %v1248 = vld [vmem:[%s4 + $0xe4] sm:$0xf]
      %v1249 = vld [vmem:[%s4 + $0xe8] sm:$0xf]
      %v1250 = vld [vmem:[%s4 + $0xec] sm:$0xf]
      %v1251 = vld [vmem:[%s4 + $0xf0] sm:$0xf]
      %v1252 = vld [vmem:[%s4 + $0xf4] sm:$0xf]
      %v1253 = vld [vmem:[%s4 + $0xf8] sm:$0xf]
      %v1254 = vld [vmem:[%s4 + $0xfc] sm:$0xf]
      %v1263 = vunpack.c.l.b16 %v595
      %v1264 = vunpack.c.l.b16 %v597
      %v1265 = vunpack.c.l.b16 %v599
      %v1266 = vunpack.c.l.b16 %v601
      %v1267 = vunpack.c.l.b16 %v603
      %v1268 = vunpack.c.l.b16 %v605
      %v1269 = vunpack.c.l.b16 %v607
      %v1270 = vunpack.c.l.b16 %v609
      %v1271 = vpack.c.b16 %v1264, %v1263
      %v1272 = vpack.c.b16 %v1266, %v1265
      %v1273 = vpack.c.b16 %v1268, %v1267
      %v1274 = vpack.c.b16 %v1270, %v1269
      %v1295 = vunpack.c.l.b16 %v1239
      %v1296 = vunpack.c.l.b16 %v1240
      %v1297 = vunpack.c.l.b16 %v1241
      %v1298 = vunpack.c.l.b16 %v1242
      %v1299 = vunpack.c.l.b16 %v1243
      %v1300 = vunpack.c.l.b16 %v1244
      %v1301 = vunpack.c.l.b16 %v1245
      %v1302 = vunpack.c.l.b16 %v1246
      %v1303 = vunpack.c.l.b16 %v1247
      %v1304 = vunpack.c.l.b16 %v1248
      %v1305 = vunpack.c.l.b16 %v1249
      %v1306 = vunpack.c.l.b16 %v1250
      %v1307 = vunpack.c.l.b16 %v1251
      %v1308 = vunpack.c.l.b16 %v1252
      %v1309 = vunpack.c.l.b16 %v1253
      %v1310 = vunpack.c.l.b16 %v1254
      %v1311 = vpack.c.b16 %v1296, %v1295
      %v1312 = vpack.c.b16 %v1298, %v1297
      %v1313 = vpack.c.b16 %v1300, %v1299
      %v1314 = vpack.c.b16 %v1302, %v1301
      %v1315 = vpack.c.b16 %v1304, %v1303
      %v1316 = vpack.c.b16 %v1306, %v1305
      %v1317 = vpack.c.b16 %v1308, %v1307
      %v1318 = vpack.c.b16 %v1310, %v1309
      %1327 = vmatpush.bf16.msra.mxu0 %v1318
      %1328 = vmatpush.bf16.msra.mxu0 %v1317
      %1329 = vmatpush.bf16.msra.mxu0 %v1316
      %1330 = vmatpush.bf16.msra.mxu0 %v1315
      %1331 = vmatpush.bf16.msra.mxu0 %v1314
      %1332 = vmatpush.bf16.msra.mxu0 %v1313
      %1333 = vmatpush.bf16.msra.mxu0 %v1312
      %1334 = vmatpush.bf16.msra.mxu0 %v1311
      %1335 = vmatmul.bf16.gmra.mxu0 %v1271
      %v1336 = vpop.f32.mrf.mxu0
      %v1337 = vadd.f32 0.0, %v1336
      %v1338 = vpop.f32.mrf.mxu0
      %v1339 = vadd.f32 0.0, %v1338
      %1340 = vmatmul.bf16.gmra.mxu0 %v1272
      %v1341 = vpop.f32.mrf.mxu0
      %v1342 = vadd.f32 0.0, %v1341
      %v1343 = vpop.f32.mrf.mxu0
      %v1344 = vadd.f32 0.0, %v1343
      %1345 = vmatmul.bf16.gmra.mxu0 %v1273
      %v1346 = vpop.f32.mrf.mxu0
      %v1347 = vadd.f32 0.0, %v1346
      %v1348 = vpop.f32.mrf.mxu0
      %v1349 = vadd.f32 0.0, %v1348
      %1350 = vmatmul.bf16.gmra.mxu0 %v1274
      %v1351 = vpop.f32.mrf.mxu0
      %v1352 = vadd.f32 0.0, %v1351
      %v1353 = vpop.f32.mrf.mxu0
      %v1354 = vadd.f32 0.0, %v1353
      %1355 = vdwg.mxu0
      %v1356 = vadd.f32 %v1231, %v1337
      %v1357 = vadd.f32 %v1232, %v1339
      %v1358 = vadd.f32 %v1233, %v1342
      %v1359 = vadd.f32 %v1234, %v1344
      %v1360 = vadd.f32 %v1235, %v1347
      %v1361 = vadd.f32 %v1236, %v1349
      %v1362 = vadd.f32 %v1237, %v1352
      %v1363 = vadd.f32 %v1238, %v1354
      %v1364 = vld [vmem:[%s4 + $0x100] sm:$0xf]
      %v1365 = vld [vmem:[%s4 + $0x104] sm:$0xf]
      %v1366 = vld [vmem:[%s4 + $0x108] sm:$0xf]
      %v1367 = vld [vmem:[%s4 + $0x10c] sm:$0xf]
      %v1368 = vld [vmem:[%s4 + $0x110] sm:$0xf]
      %v1369 = vld [vmem:[%s4 + $0x114] sm:$0xf]
      %v1370 = vld [vmem:[%s4 + $0x118] sm:$0xf]
      %v1371 = vld [vmem:[%s4 + $0x11c] sm:$0xf]
      %v1372 = vld [vmem:[%s4 + $0x120] sm:$0xf]
      %v1373 = vld [vmem:[%s4 + $0x124] sm:$0xf]
      %v1374 = vld [vmem:[%s4 + $0x128] sm:$0xf]
      %v1375 = vld [vmem:[%s4 + $0x12c] sm:$0xf]
      %v1376 = vld [vmem:[%s4 + $0x130] sm:$0xf]
      %v1377 = vld [vmem:[%s4 + $0x134] sm:$0xf]
      %v1378 = vld [vmem:[%s4 + $0x138] sm:$0xf]
      %v1379 = vld [vmem:[%s4 + $0x13c] sm:$0xf]
      %v1388 = vunpack.c.l.b16 %v507
      %v1389 = vunpack.c.l.b16 %v508
      %v1390 = vunpack.c.l.b16 %v509
      %v1391 = vunpack.c.l.b16 %v510
      %v1392 = vunpack.c.l.b16 %v511
      %v1393 = vunpack.c.l.b16 %v512
      %v1394 = vunpack.c.l.b16 %v513
      %v1395 = vunpack.c.l.b16 %v514
      %v1396 = vpack.c.b16 %v1389, %v1388
      %v1397 = vpack.c.b16 %v1391, %v1390
      %v1398 = vpack.c.b16 %v1393, %v1392
      %v1399 = vpack.c.b16 %v1395, %v1394
      %v1420 = vunpack.c.l.b16 %v1364
      %v1421 = vunpack.c.l.b16 %v1365
      %v1422 = vunpack.c.l.b16 %v1366
      %v1423 = vunpack.c.l.b16 %v1367
      %v1424 = vunpack.c.l.b16 %v1368
      %v1425 = vunpack.c.l.b16 %v1369
      %v1426 = vunpack.c.l.b16 %v1370
      %v1427 = vunpack.c.l.b16 %v1371
      %v1428 = vunpack.c.l.b16 %v1372
      %v1429 = vunpack.c.l.b16 %v1373
      %v1430 = vunpack.c.l.b16 %v1374
      %v1431 = vunpack.c.l.b16 %v1375
      %v1432 = vunpack.c.l.b16 %v1376
      %v1433 = vunpack.c.l.b16 %v1377
      %v1434 = vunpack.c.l.b16 %v1378
      %v1435 = vunpack.c.l.b16 %v1379
      %v1436 = vpack.c.b16 %v1421, %v1420
      %v1437 = vpack.c.b16 %v1423, %v1422
      %v1438 = vpack.c.b16 %v1425, %v1424
      %v1439 = vpack.c.b16 %v1427, %v1426
      %v1440 = vpack.c.b16 %v1429, %v1428
      %v1441 = vpack.c.b16 %v1431, %v1430
      %v1442 = vpack.c.b16 %v1433, %v1432
      %v1443 = vpack.c.b16 %v1435, %v1434
      %1452 = vmatpush.bf16.msra.mxu0 %v1443
      %1453 = vmatpush.bf16.msra.mxu0 %v1442
      %1454 = vmatpush.bf16.msra.mxu0 %v1441
      %1455 = vmatpush.bf16.msra.mxu0 %v1440
      %1456 = vmatpush.bf16.msra.mxu0 %v1439
      %1457 = vmatpush.bf16.msra.mxu0 %v1438
      %1458 = vmatpush.bf16.msra.mxu0 %v1437
      %1459 = vmatpush.bf16.msra.mxu0 %v1436
      %1460 = vmatmul.bf16.gmra.mxu0 %v1396
      %v1461 = vpop.f32.mrf.mxu0
      %v1462 = vadd.f32 0.0, %v1461
      %v1463 = vpop.f32.mrf.mxu0
      %v1464 = vadd.f32 0.0, %v1463
      %1465 = vmatmul.bf16.gmra.mxu0 %v1397
      %v1466 = vpop.f32.mrf.mxu0
      %v1467 = vadd.f32 0.0, %v1466
      %v1468 = vpop.f32.mrf.mxu0
      %v1469 = vadd.f32 0.0, %v1468
      %1470 = vmatmul.bf16.gmra.mxu0 %v1398
      %v1471 = vpop.f32.mrf.mxu0
      %v1472 = vadd.f32 0.0, %v1471
      %v1473 = vpop.f32.mrf.mxu0
      %v1474 = vadd.f32 0.0, %v1473
      %1475 = vmatmul.bf16.gmra.mxu0 %v1399
      %v1476 = vpop.f32.mrf.mxu0
      %v1477 = vadd.f32 0.0, %v1476
      %v1478 = vpop.f32.mrf.mxu0
      %v1479 = vadd.f32 0.0, %v1478
      %1480 = vdwg.mxu0
      %v1481 = vadd.f32 %v1356, %v1462
      %v1482 = vadd.f32 %v1357, %v1464
      %v1483 = vadd.f32 %v1358, %v1467
      %v1484 = vadd.f32 %v1359, %v1469
      %v1485 = vadd.f32 %v1360, %v1472
      %v1486 = vadd.f32 %v1361, %v1474
      %v1487 = vadd.f32 %v1362, %v1477
      %v1488 = vadd.f32 %v1363, %v1479
      %v1490 = vshrl.u32 %v595, 16
      %v1492 = vrot.slane %v1490, 4
      %v1493 = vshll.u32 %v595, 16
      %v1495 = vrot.slane %v1493, 5
      %v1496 = vor.u32 %v1492, %v1495
      %v1497 = vrot.slane %v1496, 4
      %v1499 = vshll.u32 %v596, 16
      %v1501 = vrot.slane %v1499, 5
      %v1502 = vsel %vm1009, %v1497, %v1501
      %v1504 = vshrl.u32 %v597, 16
      %v1506 = vrot.slane %v1504, 4
      %v1507 = vshll.u32 %v597, 16
      %v1509 = vrot.slane %v1507, 5
      %v1510 = vor.u32 %v1506, %v1509
      %v1511 = vrot.slane %v1510, 4
      %v1513 = vshll.u32 %v598, 16
      %v1515 = vrot.slane %v1513, 5
      %v1516 = vsel %vm1009, %v1511, %v1515
      %v1518 = vshrl.u32 %v599, 16
      %v1520 = vrot.slane %v1518, 4
      %v1521 = vshll.u32 %v599, 16
      %v1523 = vrot.slane %v1521, 5
      %v1524 = vor.u32 %v1520, %v1523
      %v1525 = vrot.slane %v1524, 4
      %v1527 = vshll.u32 %v600, 16
      %v1529 = vrot.slane %v1527, 5
      %v1530 = vsel %vm1009, %v1525, %v1529
      %v1532 = vshrl.u32 %v601, 16
      %v1534 = vrot.slane %v1532, 4
      %v1535 = vshll.u32 %v601, 16
      %v1537 = vrot.slane %v1535, 5
      %v1538 = vor.u32 %v1534, %v1537
      %v1539 = vrot.slane %v1538, 4
      %v1541 = vshll.u32 %v602, 16
      %v1543 = vrot.slane %v1541, 5
      %v1544 = vsel %vm1009, %v1539, %v1543
      %v1546 = vshrl.u32 %v603, 16
      %v1548 = vrot.slane %v1546, 4
      %v1549 = vshll.u32 %v603, 16
      %v1551 = vrot.slane %v1549, 5
      %v1552 = vor.u32 %v1548, %v1551
      %v1553 = vrot.slane %v1552, 4
      %v1555 = vshll.u32 %v604, 16
      %v1557 = vrot.slane %v1555, 5
      %v1558 = vsel %vm1009, %v1553, %v1557
      %v1560 = vshrl.u32 %v605, 16
      %v1562 = vrot.slane %v1560, 4
      %v1563 = vshll.u32 %v605, 16
      %v1565 = vrot.slane %v1563, 5
      %v1566 = vor.u32 %v1562, %v1565
      %v1567 = vrot.slane %v1566, 4
      %v1569 = vshll.u32 %v606, 16
      %v1571 = vrot.slane %v1569, 5
      %v1572 = vsel %vm1009, %v1567, %v1571
      %v1574 = vshrl.u32 %v607, 16
      %v1576 = vrot.slane %v1574, 4
      %v1577 = vshll.u32 %v607, 16
      %v1579 = vrot.slane %v1577, 5
      %v1580 = vor.u32 %v1576, %v1579
      %v1581 = vrot.slane %v1580, 4
      %v1583 = vshll.u32 %v608, 16
      %v1585 = vrot.slane %v1583, 5
      %v1586 = vsel %vm1009, %v1581, %v1585
      %v1588 = vshrl.u32 %v609, 16
      %v1590 = vrot.slane %v1588, 4
      %v1591 = vshll.u32 %v609, 16
      %v1593 = vrot.slane %v1591, 5
      %v1594 = vor.u32 %v1590, %v1593
      %v1595 = vrot.slane %v1594, 4
      %v1597 = vshll.u32 %v610, 16
      %v1599 = vrot.slane %v1597, 5
      %v1600 = vsel %vm1009, %v1595, %v1599
      %v1601 = vld [vmem:[%s4 + $0x140] sm:$0xf]
      %v1602 = vld [vmem:[%s4 + $0x144] sm:$0xf]
      %v1603 = vld [vmem:[%s4 + $0x148] sm:$0xf]
      %v1604 = vld [vmem:[%s4 + $0x14c] sm:$0xf]
      %v1605 = vld [vmem:[%s4 + $0x150] sm:$0xf]
      %v1606 = vld [vmem:[%s4 + $0x154] sm:$0xf]
      %v1607 = vld [vmem:[%s4 + $0x158] sm:$0xf]
      %v1608 = vld [vmem:[%s4 + $0x15c] sm:$0xf]
      %v1609 = vld [vmem:[%s4 + $0x160] sm:$0xf]
      %v1610 = vld [vmem:[%s4 + $0x164] sm:$0xf]
      %v1611 = vld [vmem:[%s4 + $0x168] sm:$0xf]
      %v1612 = vld [vmem:[%s4 + $0x16c] sm:$0xf]
      %v1613 = vld [vmem:[%s4 + $0x170] sm:$0xf]
      %v1614 = vld [vmem:[%s4 + $0x174] sm:$0xf]
      %v1615 = vld [vmem:[%s4 + $0x178] sm:$0xf]
      %v1616 = vld [vmem:[%s4 + $0x17c] sm:$0xf]
      %v1617 = vunpack.c.l.b16 %v1502
      %v1618 = vunpack.c.l.b16 %v1516
      %v1619 = vunpack.c.l.b16 %v1530
      %v1620 = vunpack.c.l.b16 %v1544
      %v1621 = vunpack.c.l.b16 %v1558
      %v1622 = vunpack.c.l.b16 %v1572
      %v1623 = vunpack.c.l.b16 %v1586
      %v1624 = vunpack.c.l.b16 %v1600
      %v1625 = vpack.c.b16 %v1618, %v1617
      %v1626 = vpack.c.b16 %v1620, %v1619
      %v1627 = vpack.c.b16 %v1622, %v1621
      %v1628 = vpack.c.b16 %v1624, %v1623
      %v1649 = vunpack.c.l.b16 %v1601
      %v1650 = vunpack.c.l.b16 %v1602
      %v1651 = vunpack.c.l.b16 %v1603
      %v1652 = vunpack.c.l.b16 %v1604
      %v1653 = vunpack.c.l.b16 %v1605
      %v1654 = vunpack.c.l.b16 %v1606
      %v1655 = vunpack.c.l.b16 %v1607
      %v1656 = vunpack.c.l.b16 %v1608
      %v1657 = vunpack.c.l.b16 %v1609
      %v1658 = vunpack.c.l.b16 %v1610
      %v1659 = vunpack.c.l.b16 %v1611
      %v1660 = vunpack.c.l.b16 %v1612
      %v1661 = vunpack.c.l.b16 %v1613
      %v1662 = vunpack.c.l.b16 %v1614
      %v1663 = vunpack.c.l.b16 %v1615
      %v1664 = vunpack.c.l.b16 %v1616
      %v1665 = vpack.c.b16 %v1650, %v1649
      %v1666 = vpack.c.b16 %v1652, %v1651
      %v1667 = vpack.c.b16 %v1654, %v1653
      %v1668 = vpack.c.b16 %v1656, %v1655
      %v1669 = vpack.c.b16 %v1658, %v1657
      %v1670 = vpack.c.b16 %v1660, %v1659
      %v1671 = vpack.c.b16 %v1662, %v1661
      %v1672 = vpack.c.b16 %v1664, %v1663
      %1681 = vmatpush.bf16.msra.mxu0 %v1672
      %1682 = vmatpush.bf16.msra.mxu0 %v1671
      %1683 = vmatpush.bf16.msra.mxu0 %v1670
      %1684 = vmatpush.bf16.msra.mxu0 %v1669
      %1685 = vmatpush.bf16.msra.mxu0 %v1668
      %1686 = vmatpush.bf16.msra.mxu0 %v1667
      %1687 = vmatpush.bf16.msra.mxu0 %v1666
      %1688 = vmatpush.bf16.msra.mxu0 %v1665
      %1689 = vmatmul.bf16.gmra.mxu0 %v1625
      %v1690 = vpop.f32.mrf.mxu0
      %v1691 = vadd.f32 0.0, %v1690
      %v1692 = vpop.f32.mrf.mxu0
      %v1693 = vadd.f32 0.0, %v1692
      %1694 = vmatmul.bf16.gmra.mxu0 %v1626
      %v1695 = vpop.f32.mrf.mxu0
      %v1696 = vadd.f32 0.0, %v1695
      %v1697 = vpop.f32.mrf.mxu0
      %v1698 = vadd.f32 0.0, %v1697
      %1699 = vmatmul.bf16.gmra.mxu0 %v1627
      %v1700 = vpop.f32.mrf.mxu0
      %v1701 = vadd.f32 0.0, %v1700
      %v1702 = vpop.f32.mrf.mxu0
      %v1703 = vadd.f32 0.0, %v1702
      %1704 = vmatmul.bf16.gmra.mxu0 %v1628
      %v1705 = vpop.f32.mrf.mxu0
      %v1706 = vadd.f32 0.0, %v1705
      %v1707 = vpop.f32.mrf.mxu0
      %v1708 = vadd.f32 0.0, %v1707
      %1709 = vdwg.mxu0
      %v1710 = vadd.f32 %v1481, %v1691
      %v1711 = vadd.f32 %v1482, %v1693
      %v1712 = vadd.f32 %v1483, %v1696
      %v1713 = vadd.f32 %v1484, %v1698
      %v1714 = vadd.f32 %v1485, %v1701
      %v1715 = vadd.f32 %v1486, %v1703
      %v1716 = vadd.f32 %v1487, %v1706
      %v1717 = vadd.f32 %v1488, %v1708
      %v1718 = vld [vmem:[%s4 + $0x180] sm:$0xf]
      %v1719 = vld [vmem:[%s4 + $0x184] sm:$0xf]
      %v1720 = vld [vmem:[%s4 + $0x188] sm:$0xf]
      %v1721 = vld [vmem:[%s4 + $0x18c] sm:$0xf]
      %v1722 = vld [vmem:[%s4 + $0x190] sm:$0xf]
      %v1723 = vld [vmem:[%s4 + $0x194] sm:$0xf]
      %v1724 = vld [vmem:[%s4 + $0x198] sm:$0xf]
      %v1725 = vld [vmem:[%s4 + $0x19c] sm:$0xf]
      %v1726 = vld [vmem:[%s4 + $0x1a0] sm:$0xf]
      %v1727 = vld [vmem:[%s4 + $0x1a4] sm:$0xf]
      %v1728 = vld [vmem:[%s4 + $0x1a8] sm:$0xf]
      %v1729 = vld [vmem:[%s4 + $0x1ac] sm:$0xf]
      %v1730 = vld [vmem:[%s4 + $0x1b0] sm:$0xf]
      %v1731 = vld [vmem:[%s4 + $0x1b4] sm:$0xf]
      %v1732 = vld [vmem:[%s4 + $0x1b8] sm:$0xf]
      %v1733 = vld [vmem:[%s4 + $0x1bc] sm:$0xf]
      %v1735 = vunpack.c.l.b16 %v771
      %v1736 = vpack.c.b16 %v916, %v915
      %v1737 = vpack.c.b16 %v918, %v917
      %v1738 = vpack.c.b16 %v920, %v919
      %v1739 = vpack.c.b16 %v1735, %v921
      %v1760 = vunpack.c.l.b16 %v1718
      %v1761 = vunpack.c.l.b16 %v1719
      %v1762 = vunpack.c.l.b16 %v1720
      %v1763 = vunpack.c.l.b16 %v1721
      %v1764 = vunpack.c.l.b16 %v1722
      %v1765 = vunpack.c.l.b16 %v1723
      %v1766 = vunpack.c.l.b16 %v1724
      %v1767 = vunpack.c.l.b16 %v1725
      %v1768 = vunpack.c.l.b16 %v1726
      %v1769 = vunpack.c.l.b16 %v1727
      %v1770 = vunpack.c.l.b16 %v1728
      %v1771 = vunpack.c.l.b16 %v1729
      %v1772 = vunpack.c.l.b16 %v1730
      %v1773 = vunpack.c.l.b16 %v1731
      %v1774 = vunpack.c.l.b16 %v1732
      %v1775 = vunpack.c.l.b16 %v1733
      %v1776 = vpack.c.b16 %v1761, %v1760
      %v1777 = vpack.c.b16 %v1763, %v1762
      %v1778 = vpack.c.b16 %v1765, %v1764
      %v1779 = vpack.c.b16 %v1767, %v1766
      %v1780 = vpack.c.b16 %v1769, %v1768
      %v1781 = vpack.c.b16 %v1771, %v1770
      %v1782 = vpack.c.b16 %v1773, %v1772
      %v1783 = vpack.c.b16 %v1775, %v1774
      %1792 = vmatpush.bf16.msra.mxu0 %v1783
      %1793 = vmatpush.bf16.msra.mxu0 %v1782
      %1794 = vmatpush.bf16.msra.mxu0 %v1781
      %1795 = vmatpush.bf16.msra.mxu0 %v1780
      %1796 = vmatpush.bf16.msra.mxu0 %v1779
      %1797 = vmatpush.bf16.msra.mxu0 %v1778
      %1798 = vmatpush.bf16.msra.mxu0 %v1777
      %1799 = vmatpush.bf16.msra.mxu0 %v1776
      %1800 = vmatmul.bf16.gmra.mxu0 %v1736
      %v1801 = vpop.f32.mrf.mxu0
      %v1802 = vadd.f32 0.0, %v1801
      %v1803 = vpop.f32.mrf.mxu0
      %v1804 = vadd.f32 0.0, %v1803
      %1805 = vmatmul.bf16.gmra.mxu0 %v1737
      %v1806 = vpop.f32.mrf.mxu0
      %v1807 = vadd.f32 0.0, %v1806
      %v1808 = vpop.f32.mrf.mxu0
      %v1809 = vadd.f32 0.0, %v1808
      %1810 = vmatmul.bf16.gmra.mxu0 %v1738
      %v1811 = vpop.f32.mrf.mxu0
      %v1812 = vadd.f32 0.0, %v1811
      %v1813 = vpop.f32.mrf.mxu0
      %v1814 = vadd.f32 0.0, %v1813
      %1815 = vmatmul.bf16.gmra.mxu0 %v1739
      %v1816 = vpop.f32.mrf.mxu0
      %v1817 = vadd.f32 0.0, %v1816
      %v1818 = vpop.f32.mrf.mxu0
      %v1819 = vadd.f32 0.0, %v1818
      %1820 = vdwg.mxu0
      %v1821 = vadd.f32 %v1710, %v1802
      %v1822 = vadd.f32 %v1711, %v1804
      %v1823 = vadd.f32 %v1712, %v1807
      %v1824 = vadd.f32 %v1713, %v1809
      %v1825 = vadd.f32 %v1714, %v1812
      %v1826 = vadd.f32 %v1715, %v1814
      %v1827 = vadd.f32 %v1716, %v1817
      %v1828 = vadd.f32 %v1717, %v1819
      %v1829 = vld [vmem:[%s4 + $0x1c0] sm:$0xf]
      %v1830 = vld [vmem:[%s4 + $0x1c4] sm:$0xf]
      %v1831 = vld [vmem:[%s4 + $0x1c8] sm:$0xf]
      %v1832 = vld [vmem:[%s4 + $0x1cc] sm:$0xf]
      %v1833 = vld [vmem:[%s4 + $0x1d0] sm:$0xf]
      %v1834 = vld [vmem:[%s4 + $0x1d4] sm:$0xf]
      %v1835 = vld [vmem:[%s4 + $0x1d8] sm:$0xf]
      %v1836 = vld [vmem:[%s4 + $0x1dc] sm:$0xf]
      %v1837 = vld [vmem:[%s4 + $0x1e0] sm:$0xf]
      %v1838 = vld [vmem:[%s4 + $0x1e4] sm:$0xf]
      %v1839 = vld [vmem:[%s4 + $0x1e8] sm:$0xf]
      %v1840 = vld [vmem:[%s4 + $0x1ec] sm:$0xf]
      %v1841 = vld [vmem:[%s4 + $0x1f0] sm:$0xf]
      %v1842 = vld [vmem:[%s4 + $0x1f4] sm:$0xf]
      %v1843 = vld [vmem:[%s4 + $0x1f8] sm:$0xf]
      %v1844 = vld [vmem:[%s4 + $0x1fc] sm:$0xf]
      %v1846 = vunpack.c.l.b16 %v664
      %v1847 = vpack.c.b16 %v815, %v814
      %v1848 = vpack.c.b16 %v817, %v816
      %v1849 = vpack.c.b16 %v819, %v818
      %v1850 = vpack.c.b16 %v1846, %v820
      %v1871 = vunpack.c.l.b16 %v1829
      %v1872 = vunpack.c.l.b16 %v1830
      %v1873 = vunpack.c.l.b16 %v1831
      %v1874 = vunpack.c.l.b16 %v1832
      %v1875 = vunpack.c.l.b16 %v1833
      %v1876 = vunpack.c.l.b16 %v1834
      %v1877 = vunpack.c.l.b16 %v1835
      %v1878 = vunpack.c.l.b16 %v1836
      %v1879 = vunpack.c.l.b16 %v1837
      %v1880 = vunpack.c.l.b16 %v1838
      %v1881 = vunpack.c.l.b16 %v1839
      %v1882 = vunpack.c.l.b16 %v1840
      %v1883 = vunpack.c.l.b16 %v1841
      %v1884 = vunpack.c.l.b16 %v1842
      %v1885 = vunpack.c.l.b16 %v1843
      %v1886 = vunpack.c.l.b16 %v1844
      %v1887 = vpack.c.b16 %v1872, %v1871
      %v1888 = vpack.c.b16 %v1874, %v1873
      %v1889 = vpack.c.b16 %v1876, %v1875
      %v1890 = vpack.c.b16 %v1878, %v1877
      %v1891 = vpack.c.b16 %v1880, %v1879
      %v1892 = vpack.c.b16 %v1882, %v1881
      %v1893 = vpack.c.b16 %v1884, %v1883
      %v1894 = vpack.c.b16 %v1886, %v1885
      %1903 = vmatpush.bf16.msra.mxu0 %v1894
      %1904 = vmatpush.bf16.msra.mxu0 %v1893
      %1905 = vmatpush.bf16.msra.mxu0 %v1892
      %1906 = vmatpush.bf16.msra.mxu0 %v1891
      %1907 = vmatpush.bf16.msra.mxu0 %v1890
      %1908 = vmatpush.bf16.msra.mxu0 %v1889
      %1909 = vmatpush.bf16.msra.mxu0 %v1888
      %1910 = vmatpush.bf16.msra.mxu0 %v1887
      %1911 = vmatmul.bf16.gmra.mxu0 %v1847
      %v1912 = vpop.f32.mrf.mxu0
      %v1913 = vadd.f32 0.0, %v1912
      %v1914 = vpop.f32.mrf.mxu0
      %v1915 = vadd.f32 0.0, %v1914
      %1916 = vmatmul.bf16.gmra.mxu0 %v1848
      %v1917 = vpop.f32.mrf.mxu0
      %v1918 = vadd.f32 0.0, %v1917
      %v1919 = vpop.f32.mrf.mxu0
      %v1920 = vadd.f32 0.0, %v1919
      %1921 = vmatmul.bf16.gmra.mxu0 %v1849
      %v1922 = vpop.f32.mrf.mxu0
      %v1923 = vadd.f32 0.0, %v1922
      %v1924 = vpop.f32.mrf.mxu0
      %v1925 = vadd.f32 0.0, %v1924
      %1926 = vmatmul.bf16.gmra.mxu0 %v1850
      %v1927 = vpop.f32.mrf.mxu0
      %v1928 = vadd.f32 0.0, %v1927
      %v1929 = vpop.f32.mrf.mxu0
      %v1930 = vadd.f32 0.0, %v1929
      %1931 = vdwg.mxu0
      %v1932 = vadd.f32 %v1821, %v1913
      %v1933 = vadd.f32 %v1822, %v1915
      %v1934 = vadd.f32 %v1823, %v1918
      %v1935 = vadd.f32 %v1824, %v1920
      %v1936 = vadd.f32 %v1825, %v1923
      %v1937 = vadd.f32 %v1826, %v1925
      %v1938 = vadd.f32 %v1827, %v1928
      %v1939 = vadd.f32 %v1828, %v1930
      %v1941 = vshrl.u32 %v771, 16
      %v1943 = vrot.slane %v1941, 4
      %v1944 = vshll.u32 %v771, 16
      %v1946 = vrot.slane %v1944, 5
      %v1947 = vor.u32 %v1943, %v1946
      %v1948 = vrot.slane %v1947, 4
      %v1950 = vshll.u32 %v772, 16
      %v1952 = vrot.slane %v1950, 5
      %v1953 = vsel %vm1009, %v1948, %v1952
      %v1954 = vld [vmem:[%s4 + $0x200] sm:$0xf]
      %v1955 = vld [vmem:[%s4 + $0x204] sm:$0xf]
      %v1956 = vld [vmem:[%s4 + $0x208] sm:$0xf]
      %v1957 = vld [vmem:[%s4 + $0x20c] sm:$0xf]
      %v1958 = vld [vmem:[%s4 + $0x210] sm:$0xf]
      %v1959 = vld [vmem:[%s4 + $0x214] sm:$0xf]
      %v1960 = vld [vmem:[%s4 + $0x218] sm:$0xf]
      %v1961 = vld [vmem:[%s4 + $0x21c] sm:$0xf]
      %v1962 = vld [vmem:[%s4 + $0x220] sm:$0xf]
      %v1963 = vld [vmem:[%s4 + $0x224] sm:$0xf]
      %v1964 = vld [vmem:[%s4 + $0x228] sm:$0xf]
      %v1965 = vld [vmem:[%s4 + $0x22c] sm:$0xf]
      %v1966 = vld [vmem:[%s4 + $0x230] sm:$0xf]
      %v1967 = vld [vmem:[%s4 + $0x234] sm:$0xf]
      %v1968 = vld [vmem:[%s4 + $0x238] sm:$0xf]
      %v1969 = vld [vmem:[%s4 + $0x23c] sm:$0xf]
      %v1970 = vunpack.c.l.b16 %v1953
      %v1971 = vpack.c.b16 %v1140, %v1139
      %v1972 = vpack.c.b16 %v1142, %v1141
      %v1973 = vpack.c.b16 %v1144, %v1143
      %v1974 = vpack.c.b16 %v1970, %v1145
      %v1995 = vunpack.c.l.b16 %v1954
      %v1996 = vunpack.c.l.b16 %v1955
      %v1997 = vunpack.c.l.b16 %v1956
      %v1998 = vunpack.c.l.b16 %v1957
      %v1999 = vunpack.c.l.b16 %v1958
      %v2000 = vunpack.c.l.b16 %v1959
      %v2001 = vunpack.c.l.b16 %v1960
      %v2002 = vunpack.c.l.b16 %v1961
      %v2003 = vunpack.c.l.b16 %v1962
      %v2004 = vunpack.c.l.b16 %v1963
      %v2005 = vunpack.c.l.b16 %v1964
      %v2006 = vunpack.c.l.b16 %v1965
      %v2007 = vunpack.c.l.b16 %v1966
      %v2008 = vunpack.c.l.b16 %v1967
      %v2009 = vunpack.c.l.b16 %v1968
      %v2010 = vunpack.c.l.b16 %v1969
      %v2011 = vpack.c.b16 %v1996, %v1995
      %v2012 = vpack.c.b16 %v1998, %v1997
      %v2013 = vpack.c.b16 %v2000, %v1999
      %v2014 = vpack.c.b16 %v2002, %v2001
      %v2015 = vpack.c.b16 %v2004, %v2003
      %v2016 = vpack.c.b16 %v2006, %v2005
      %v2017 = vpack.c.b16 %v2008, %v2007
      %v2018 = vpack.c.b16 %v2010, %v2009
      %2027 = vmatpush.bf16.msra.mxu0 %v2018
      %2028 = vmatpush.bf16.msra.mxu0 %v2017
      %2029 = vmatpush.bf16.msra.mxu0 %v2016
      %2030 = vmatpush.bf16.msra.mxu0 %v2015
      %2031 = vmatpush.bf16.msra.mxu0 %v2014
      %2032 = vmatpush.bf16.msra.mxu0 %v2013
      %2033 = vmatpush.bf16.msra.mxu0 %v2012
      %2034 = vmatpush.bf16.msra.mxu0 %v2011
      %2035 = vmatmul.bf16.gmra.mxu0 %v1971
      %v2036 = vpop.f32.mrf.mxu0
      %v2037 = vadd.f32 0.0, %v2036
      %v2038 = vpop.f32.mrf.mxu0
      %v2039 = vadd.f32 0.0, %v2038
      %2040 = vmatmul.bf16.gmra.mxu0 %v1972
      %v2041 = vpop.f32.mrf.mxu0
      %v2042 = vadd.f32 0.0, %v2041
      %v2043 = vpop.f32.mrf.mxu0
      %v2044 = vadd.f32 0.0, %v2043
      %2045 = vmatmul.bf16.gmra.mxu0 %v1973
      %v2046 = vpop.f32.mrf.mxu0
      %v2047 = vadd.f32 0.0, %v2046
      %v2048 = vpop.f32.mrf.mxu0
      %v2049 = vadd.f32 0.0, %v2048
      %2050 = vmatmul.bf16.gmra.mxu0 %v1974
      %v2051 = vpop.f32.mrf.mxu0
      %v2052 = vadd.f32 0.0, %v2051
      %v2053 = vpop.f32.mrf.mxu0
      %v2054 = vadd.f32 0.0, %v2053
      %2055 = vdwg.mxu0
      %v2056 = vadd.f32 %v1932, %v2037
      %v2057 = vadd.f32 %v1933, %v2039
      %v2058 = vadd.f32 %v1934, %v2042
      %v2059 = vadd.f32 %v1935, %v2044
      %v2060 = vadd.f32 %v1936, %v2047
      %v2061 = vadd.f32 %v1937, %v2049
      %v2062 = vadd.f32 %v1938, %v2052
      %v2063 = vadd.f32 %v1939, %v2054
      %v2064 = vld [vmem:[%s5] sm:$0x1]
      %v2066 = vperm.slane %v2064, 0
      %v2068 = vmul.f32 %v2056, %v2066
      %v2069 = vmul.f32 %v2057, %v2066
      %v2070 = vmul.f32 %v2058, %v2066
      %v2071 = vmul.f32 %v2059, %v2066
      %v2072 = vmul.f32 %v2060, %v2066
      %v2073 = vmul.f32 %v2061, %v2066
      %v2074 = vmul.f32 %v2062, %v2066
      %v2075 = vmul.f32 %v2063, %v2066
      %v2076 = vld [vmem:[%s6] sm:$0x1]
      %v2078 = vperm.slane %v2076, 0
      %v2080 = vadd.f32 %v2068, %v2078
      %v2081 = vadd.f32 %v2069, %v2078
      %v2082 = vadd.f32 %v2070, %v2078
      %v2083 = vadd.f32 %v2071, %v2078
      %v2084 = vadd.f32 %v2072, %v2078
      %v2085 = vadd.f32 %v2073, %v2078
      %v2086 = vadd.f32 %v2074, %v2078
      %v2087 = vadd.f32 %v2075, %v2078
      %v2088 = vmax.f32 %v2080, 0.0
      %v2089 = vmax.f32 %v2081, 0.0
      %v2090 = vmax.f32 %v2082, 0.0
      %v2091 = vmax.f32 %v2083, 0.0
      %v2092 = vmax.f32 %v2084, 0.0
      %v2093 = vmax.f32 %v2085, 0.0
      %v2094 = vmax.f32 %v2086, 0.0
      %v2095 = vmax.f32 %v2087, 0.0
      %vm2096 = vcmp.gt.f32.partialorder %v2088, 0.5
      %vm2097 = vcmp.gt.f32.partialorder %v2089, 0.5
      %vm2098 = vcmp.gt.f32.partialorder %v2090, 0.5
      %vm2099 = vcmp.gt.f32.partialorder %v2091, 0.5
      %vm2100 = vcmp.gt.f32.partialorder %v2092, 0.5
      %vm2101 = vcmp.gt.f32.partialorder %v2093, 0.5
      %vm2102 = vcmp.gt.f32.partialorder %v2094, 0.5
      %vm2103 = vcmp.gt.f32.partialorder %v2095, 0.5
      %vm2104 = vcmp.lt.f32.partialorder %v2088, -0.5
      %vm2105 = vcmp.lt.f32.partialorder %v2089, -0.5
      %vm2106 = vcmp.lt.f32.partialorder %v2090, -0.5
      %vm2107 = vcmp.lt.f32.partialorder %v2091, -0.5
      %vm2108 = vcmp.lt.f32.partialorder %v2092, -0.5
      %vm2109 = vcmp.lt.f32.partialorder %v2093, -0.5
      %vm2110 = vcmp.lt.f32.partialorder %v2094, -0.5
      %vm2111 = vcmp.lt.f32.partialorder %v2095, -0.5
      %v2112 = vsel %vm2104, -1.0, 0.0
      %v2113 = vsel %vm2105, -1.0, 0.0
      %v2114 = vsel %vm2106, -1.0, 0.0
      %v2115 = vsel %vm2107, -1.0, 0.0
      %v2116 = vsel %vm2108, -1.0, 0.0
      %v2117 = vsel %vm2109, -1.0, 0.0
      %v2118 = vsel %vm2110, -1.0, 0.0
      %v2119 = vsel %vm2111, -1.0, 0.0
      %v2120 = vsel %vm2096, 1.0, %v2112
      %v2121 = vsel %vm2097, 1.0, %v2113
      %v2122 = vsel %vm2098, 1.0, %v2114
      %v2123 = vsel %vm2099, 1.0, %v2115
      %v2124 = vsel %vm2100, 1.0, %v2116
      %v2125 = vsel %vm2101, 1.0, %v2117
      %v2126 = vsel %vm2102, 1.0, %v2118
      %v2127 = vsel %vm2103, 1.0, %v2119
      %v2128 = vpack.c.bf16 %v2121, %v2120
      %v2129 = vpack.c.bf16 %v2123, %v2122
      %v2130 = vpack.c.bf16 %v2125, %v2124
      %v2131 = vpack.c.bf16 %v2127, %v2126
      %v2132 = vld [vmem:[%s7] sm:$0xf]
      %v2133 = vld [vmem:[%s7 + $0x4] sm:$0xf]
      %v2134 = vld [vmem:[%s7 + $0x8] sm:$0xf]
      %v2135 = vld [vmem:[%s7 + $0xc] sm:$0xf]
      %v2136 = vld [vmem:[%s7 + $0x10] sm:$0xf]
      %v2137 = vld [vmem:[%s7 + $0x14] sm:$0xf]
      %v2138 = vld [vmem:[%s7 + $0x18] sm:$0xf]
      %v2139 = vld [vmem:[%s7 + $0x1c] sm:$0xf]
      %v2140 = vld [vmem:[%s7 + $0x20] sm:$0xf]
      %v2141 = vld [vmem:[%s7 + $0x24] sm:$0xf]
      %v2142 = vld [vmem:[%s7 + $0x28] sm:$0xf]
      %v2143 = vld [vmem:[%s7 + $0x2c] sm:$0xf]
      %v2144 = vld [vmem:[%s7 + $0x30] sm:$0xf]
      %v2145 = vld [vmem:[%s7 + $0x34] sm:$0xf]
      %v2146 = vld [vmem:[%s7 + $0x38] sm:$0xf]
      %v2147 = vld [vmem:[%s7 + $0x3c] sm:$0xf]
      %v2164 = vunpack.c.l.b16 %v2132
      %v2165 = vunpack.c.l.b16 %v2133
      %v2166 = vunpack.c.l.b16 %v2134
      %v2167 = vunpack.c.l.b16 %v2135
      %v2168 = vunpack.c.l.b16 %v2136
      %v2169 = vunpack.c.l.b16 %v2137
      %v2170 = vunpack.c.l.b16 %v2138
      %v2171 = vunpack.c.l.b16 %v2139
      %v2172 = vunpack.c.l.b16 %v2140
      %v2173 = vunpack.c.l.b16 %v2141
      %v2174 = vunpack.c.l.b16 %v2142
      %v2175 = vunpack.c.l.b16 %v2143
      %v2176 = vunpack.c.l.b16 %v2144
      %v2177 = vunpack.c.l.b16 %v2145
      %v2178 = vunpack.c.l.b16 %v2146
      %v2179 = vunpack.c.l.b16 %v2147
      %v2180 = vpack.c.b16 %v2165, %v2164
      %v2181 = vpack.c.b16 %v2167, %v2166
      %v2182 = vpack.c.b16 %v2169, %v2168
      %v2183 = vpack.c.b16 %v2171, %v2170
      %v2184 = vpack.c.b16 %v2173, %v2172
      %v2185 = vpack.c.b16 %v2175, %v2174
      %v2186 = vpack.c.b16 %v2177, %v2176
      %v2187 = vpack.c.b16 %v2179, %v2178
      %2196 = vmatpush.bf16.msra.mxu0 %v2187
      %2197 = vmatpush.bf16.msra.mxu0 %v2186
      %2198 = vmatpush.bf16.msra.mxu0 %v2185
      %2199 = vmatpush.bf16.msra.mxu0 %v2184
      %2200 = vmatpush.bf16.msra.mxu0 %v2183
      %2201 = vmatpush.bf16.msra.mxu0 %v2182
      %2202 = vmatpush.bf16.msra.mxu0 %v2181
      %2203 = vmatpush.bf16.msra.mxu0 %v2180
      %2204 = vmatmul.bf16.gmra.mxu0 %v2128
      %v2205 = vpop.f32.mrf.mxu0
      %v2206 = vadd.f32 0.0, %v2205
      %v2207 = vpop.f32.mrf.mxu0
      %v2208 = vadd.f32 0.0, %v2207
      %2209 = vmatmul.bf16.gmra.mxu0 %v2129
      %v2210 = vpop.f32.mrf.mxu0
      %v2211 = vadd.f32 0.0, %v2210
      %v2212 = vpop.f32.mrf.mxu0
      %v2213 = vadd.f32 0.0, %v2212
      %2214 = vmatmul.bf16.gmra.mxu0 %v2130
      %v2215 = vpop.f32.mrf.mxu0
      %v2216 = vadd.f32 0.0, %v2215
      %v2217 = vpop.f32.mrf.mxu0
      %v2218 = vadd.f32 0.0, %v2217
      %2219 = vmatmul.bf16.gmra.mxu0 %v2131
      %v2220 = vpop.f32.mrf.mxu0
      %v2221 = vadd.f32 0.0, %v2220
      %v2222 = vpop.f32.mrf.mxu0
      %v2223 = vadd.f32 0.0, %v2222
      %2224 = vdwg.mxu0
      %v2225 = vld [vmem:[%s8] sm:$0x1]
      %v2227 = vperm.slane %v2225, 0
      %v2229 = vmul.f32 %v2206, %v2227
      %v2230 = vmul.f32 %v2208, %v2227
      %v2231 = vmul.f32 %v2211, %v2227
      %v2232 = vmul.f32 %v2213, %v2227
      %v2233 = vmul.f32 %v2216, %v2227
      %v2234 = vmul.f32 %v2218, %v2227
      %v2235 = vmul.f32 %v2221, %v2227
      %v2236 = vmul.f32 %v2223, %v2227
      %v2237 = vld [vmem:[%s9] sm:$0x1]
      %v2239 = vperm.slane %v2237, 0
      %v2241 = vadd.f32 %v2229, %v2239
      %v2242 = vadd.f32 %v2230, %v2239
      %v2243 = vadd.f32 %v2231, %v2239
      %v2244 = vadd.f32 %v2232, %v2239
      %v2245 = vadd.f32 %v2233, %v2239
      %v2246 = vadd.f32 %v2234, %v2239
      %v2247 = vadd.f32 %v2235, %v2239
      %v2248 = vadd.f32 %v2236, %v2239
      %v2249 = vld [vmem:[%s461] sm:$0xff]
      %v2250 = vld [vmem:[%s461 + $0x8] sm:$0xff]
      %v2251 = vld [vmem:[%s461 + $0x10] sm:$0xff]
      %v2252 = vld [vmem:[%s461 + $0x18] sm:$0xff]
      %v2253 = vld [vmem:[%s461 + $0x20] sm:$0xff]
      %v2254 = vld [vmem:[%s461 + $0x28] sm:$0xff]
      %v2255 = vld [vmem:[%s461 + $0x30] sm:$0xff]
      %v2256 = vld [vmem:[%s461 + $0x38] sm:$0xff]
      %v2257 = vadd.f32 %v2241, %v2249
      %v2258 = vadd.f32 %v2242, %v2250
      %v2259 = vadd.f32 %v2243, %v2251
      %v2260 = vadd.f32 %v2244, %v2252
      %v2261 = vadd.f32 %v2245, %v2253
      %v2262 = vadd.f32 %v2246, %v2254
      %v2263 = vadd.f32 %v2247, %v2255
      %v2264 = vadd.f32 %v2248, %v2256
      %v2265 = vmax.f32 %v2257, 0.0
      %v2266 = vmax.f32 %v2258, 0.0
      %v2267 = vmax.f32 %v2259, 0.0
      %v2268 = vmax.f32 %v2260, 0.0
      %v2269 = vmax.f32 %v2261, 0.0
      %v2270 = vmax.f32 %v2262, 0.0
      %v2271 = vmax.f32 %v2263, 0.0
      %v2272 = vmax.f32 %v2264, 0.0
      %2273 = vst [vmem:[%s466] sm:$0xff] %v2265
      %2274 = vst [vmem:[%s466 + $0x8] sm:$0xff] %v2266
      %2275 = vst [vmem:[%s466 + $0x10] sm:$0xff] %v2267
      %2276 = vst [vmem:[%s466 + $0x18] sm:$0xff] %v2268
      %2277 = vst [vmem:[%s466 + $0x20] sm:$0xff] %v2269
      %2278 = vst [vmem:[%s466 + $0x28] sm:$0xff] %v2270
      %2279 = vst [vmem:[%s466 + $0x30] sm:$0xff] %v2271
      %2280 = vst [vmem:[%s466 + $0x38] sm:$0xff] %v2272
      %p2281 = scmp.lt.s32.totalorder %s22, 1
      %s2282 = scalar_select %p2281, %s22, 1
      %s2283 = smul.addr %s2282, 8
      %s2284 = smul.addr %s2283, 8
      %s2285 = scalar_lea.vmem %s11, %s2284
      // Predicated region
      $region65: #{_lambda_.3} parent=63 // pred_check
        %p2286 = pneg %p296
      $region66: #{_lambda_.3} parent=63 // pred_check_branch
        %2288 = sbr.rel (%p2286) target = $region68
      $region67: #{_lambda_.3} parent=63 // pred_region
        _
      $region68: #{_lambda_.3} parent=63 // pred_fallthru
        _
    $region64: #{_lambda_.3} parent=5 // pred_fallthru
      _
    %p2289 = scmp.le.s32.totalorder 2, %s17
    // Predicated region
    $region69: #{_lambda_.3} parent=5 // pred_check
      %p2290 = pneg %p2289
    $region70: #{_lambda_.3} parent=5 // pred_check_branch
      %2292 = sbr.rel (%p2290) target = $region72
    $region71: #{_lambda_.3} parent=5 // pred_region
      %s2293 = ssub.s32 %s17, 2
      // Predicated region
      $region73: #{_lambda_.3} parent=71 // pred_check
        %p2294 = pneg %p302
      $region74: #{_lambda_.3} parent=71 // pred_check_branch
        %2296 = sbr.rel (%p2294) target = $region76
      $region75: #{_lambda_.3} parent=71 // pred_region
        %p2297 = scmp.lt.s32.totalorder %s23, 1
        %s2298 = scalar_select %p2297, %s23, 1
        %s2299 = smul.addr %s2298, 8
        %s2300 = smul.addr %s2299, 8
        %s2301 = scalar_lea.vmem %s11, %s2300
      $region76: #{_lambda_.3} parent=71 // pred_fallthru
        _
    $region72: #{_lambda_.3} parent=5 // pred_fallthru
      _
  $region6: #{_lambda_.3} parent=0 // loop_footer
    %s21 = sadd.s32 1, %s17
  $region7: #{_lambda_.3} parent=0 // loop_footer_branch
    %16 = sbr.rel target = $region3
  $region8: #{_lambda_.3} parent=0 // loop_exit
    _

</llo_original>
